<compile_context>
chip_gen: v7x
topology: tpu7x:2x2x1
jax: 0.10.0
libtpu: 0.0.40
codegen_flags: <defaults>
</compile_context>

<pallas_src>
import functools

import numpy as np
import jax
import jax.numpy as jnp
from jax import lax
from jax.experimental import pallas as pl
from jax.experimental.pallas import tpu as pltpu

EPS = 1e-5
LEAKY_SLOPE = 0.03                 # LeakyUNET blocks use leaky_slope=0.03
LANE = 128
VMEM_LIMIT = 48 * 1024 * 1024      # safe on v5e/v6e (128 MiB) and v7x (64 MiB physical)
PASS1_BUDGET = 24 * 1024 * 1024    # per-step working-set target for pass-1 tiles
PASS2_MAX_ROWS = 2048              # pass 2 is HBM-bound -> big row tiles


def _round_up(x, m):
    return (x + m - 1) // m * m


# ---------------------------------------------------------------------------
# Pass 1: in-kernel tap gather + matmul (bf16 in, f32 accumulate), emitting the
# bf16 pre-BN activation plus per-tile per-lane sum / sum-of-squares partials.
# ---------------------------------------------------------------------------
def _tap_matmul_stats_kernel(x_ref, w_ref, y_ref, sum_ref, sq_ref, acc_ref, *,
                             offsets, th, w_cols):
    xt = x_ref[0]                                   # (th+rh, W+ch, cin) bf16
    cin = xt.shape[-1]
    mt = th * w_cols
    for t, (dy, dx) in enumerate(offsets):          # static unroll over taps/phases
        a = xt[dy:dy + th, dx:dx + w_cols, :].reshape(mt, cin)
        d = jnp.dot(a, w_ref[t], preferred_element_type=jnp.float32)
        if t == 0:
            acc_ref[...] = d
        else:
            acc_ref[...] += d
    acc = acc_ref[...]
    y_ref[0] = acc.astype(y_ref.dtype)              # bf16 writeback
    sum_ref[0] = jnp.sum(acc, axis=0, keepdims=True)
    sq_ref[0] = jnp.sum(acc * acc, axis=0, keepdims=True)


# ---------------------------------------------------------------------------
# Pass 2: BatchNorm (precomputed scale/shift) + LeakyReLU, one FMA + one select.
# ---------------------------------------------------------------------------
def _bn_leaky_kernel(y_ref, scale_ref, shift_ref, o_ref, *, slope):
    y = y_ref[...].astype(jnp.float32) * scale_ref[...] + shift_ref[...]
    o_ref[...] = jnp.where(y >= 0.0, y, y * slope).astype(o_ref.dtype)


# ---------------------------------------------------------------------------
# Tiling helpers
# ---------------------------------------------------------------------------
def _pick_row_tile(H, W, cin, L, ntaps, row_halo, col_halo):
    """Largest divisor of H whose pass-1 working set fits the VMEM budget."""
    for th in range(H, 0, -1):
        if H % th:
            continue
        mt = th * W
        est = (2 * (th + row_halo) * (W + col_halo) * cin * 2    # input tile, double-buffered
               + 2 * ntaps * cin * L * 2                          # tap weights, double-buffered
               + 2 * mt * L * 2                                   # bf16 out tile, double-buffered
               + mt * L * 4                                       # f32 accumulator scratch
               + 4 * L * 4)                                       # stats tiles
        if est <= PASS1_BUDGET:
            return th
    return 1


def _split_row_tiles(xp, th, row_halo):
    """(N, Hp, Wp, C) padded input -> (N*num, th+row_halo, Wp, C) row tiles."""
    N, Hp, Wp, C = xp.shape
    num = (Hp - row_halo) // th
    if num == 1:
        return xp, 1
    tiles = [xp[:, i * th:i * th + th + row_halo] for i in range(num)]
    return jnp.stack(tiles, axis=1).reshape(N * num, th + row_halo, Wp, C), num


# ---------------------------------------------------------------------------
# Shared fused routine: tap matmuls -> exact batch stats -> BN + LeakyReLU
# ---------------------------------------------------------------------------
def _fused_tap_matmul_bn_leaky(x_tiles, w_taps, gamma_pad, beta_pad, *,
                               offsets, th, w_cols, count, groups):
    """x_tiles: (T, th+rh, W+ch, Cin) bf16 row tiles (halo included).
    w_taps:  (ntaps, Cin, L) bf16 per-tap weights, L = groups * cpad.
    gamma_pad / beta_pad: (cpad,) f32.
    Returns the normalized+activated activation as (T*th*W, L) bf16."""
    T = x_tiles.shape[0]
    ntaps, cin, L = w_taps.shape
    cpad = L // groups
    mt = th * w_cols

    y, psum, psq = pl.pallas_call(
        functools.partial(_tap_matmul_stats_kernel, offsets=offsets, th=th,
                          w_cols=w_cols),
        out_shape=(
            jax.ShapeDtypeStruct((T, mt, L), jnp.bfloat16),
            jax.ShapeDtypeStruct((T, 1, L), jnp.float32),
            jax.ShapeDtypeStruct((T, 1, L), jnp.float32),
        ),
        grid=(T,),
        in_specs=[
            pl.BlockSpec((1,) + tuple(x_tiles.shape[1:]), lambda t: (t, 0, 0, 0)),
            pl.BlockSpec((ntaps, cin, L), lambda t: (0, 0, 0)),
        ],
        out_specs=(
            pl.BlockSpec((1, mt, L), lambda t: (t, 0, 0)),
            pl.BlockSpec((1, 1, L), lambda t: (t, 0, 0)),   # per-tile partial stats
            pl.BlockSpec((1, 1, L), lambda t: (t, 0, 0)),
        ),
        scratch_shapes=[pltpu.VMEM((mt, L), jnp.float32)],
        compiler_params=pltpu.CompilerParams(
            dimension_semantics=("parallel",),
            vmem_limit_bytes=VMEM_LIMIT),
    )(x_tiles, w_taps)

    # Tiny per-tile / per-phase partial reduction + scale/shift precompute (JAX).
    s = jnp.sum(psum[:, 0, :], axis=0).reshape(groups, cpad).sum(axis=0)
    q = jnp.sum(psq[:, 0, :], axis=0).reshape(groups, cpad).sum(axis=0)
    mean = s / float(count)
    var = jnp.maximum(q / float(count) - mean * mean, 0.0)
    scale_c = gamma_pad * lax.rsqrt(var + EPS)
    shift_c = beta_pad - mean * scale_c
    scale = jnp.tile(scale_c.reshape(1, cpad), (1, groups))      # (1, L)
    shift = jnp.tile(shift_c.reshape(1, cpad), (1, groups))      # (1, L)

    # Pass 2: HBM-bound normalize + LeakyReLU with its own (bigger) row tile.
    m_tot = T * mt
    if mt % 8 == 0:
        k = 1
        for cand in range(T, 0, -1):
            if T % cand == 0 and cand * mt <= PASS2_MAX_ROWS:
                k = cand
                break
        tm2 = k * mt
    else:
        tm2 = m_tot
    y2d = y.reshape(m_tot, L)
    out = pl.pallas_call(
        functools.partial(_bn_leaky_kernel, slope=LEAKY_SLOPE),
        out_shape=jax.ShapeDtypeStruct((m_tot, L), jnp.bfloat16),
        grid=(m_tot // tm2,),
        in_specs=[
            pl.BlockSpec((tm2, L), lambda m: (m, 0)),
            pl.BlockSpec((1, L), lambda m: (0, 0)),
            pl.BlockSpec((1, L), lambda m: (0, 0)),
        ],
        out_specs=pl.BlockSpec((tm2, L), lambda m: (m, 0)),
        compiler_params=pltpu.CompilerParams(
            dimension_semantics=("parallel",),
            vmem_limit_bytes=VMEM_LIMIT),
    )(y2d, scale, shift)
    return out


# ---------------------------------------------------------------------------
# ConvLeakyBlock: Conv2d(k=3, s=1, p=1) + BN(batch stats) + LeakyReLU
# ---------------------------------------------------------------------------
def conv_leaky_block(x, w, b, gamma, beta):
    """x: (N, H, W, Cin) NHWC.  w: (Cout, Cin, 3, 3) PyTorch Conv2d layout.
    The conv bias `b` is accepted for API parity but not applied: with
    batch-statistics BN it is exactly cancelled by the mean subtraction.
    Returns (N, H, W, Cout) bf16 NHWC."""
    del b
    N, H, W, Cin = x.shape
    Cout = w.shape[0]
    cpad = _round_up(Cout, LANE)

    offsets = tuple((ky, kx) for ky in range(3) for kx in range(3))
    th = _pick_row_tile(H, W, Cin, cpad, 9, 2, 2)

    xp = jnp.pad(x.astype(jnp.bfloat16), ((0, 0), (1, 1), (1, 1), (0, 0)))
    x_tiles, _ = _split_row_tiles(xp, th, 2)

    # (Cout, Cin, 3, 3) -> (9 taps, Cin, cpad), tap index = ky*3 + kx
    wt = jnp.transpose(w, (2, 3, 1, 0)).reshape(9, Cin, Cout)
    w_taps = jnp.zeros((9, Cin, cpad), jnp.bfloat16).at[:, :, :Cout].set(
        wt.astype(jnp.bfloat16))

    g_pad = jnp.zeros((cpad,), jnp.float32).at[:Cout].set(gamma.astype(jnp.float32))
    be_pad = jnp.zeros((cpad,), jnp.float32).at[:Cout].set(beta.astype(jnp.float32))

    out = _fused_tap_matmul_bn_leaky(
        x_tiles, w_taps, g_pad, be_pad, offsets=offsets, th=th, w_cols=W,
        count=N * H * W, groups=1)
    return out.reshape(N, H, W, cpad)[..., :Cout]


# ---------------------------------------------------------------------------
# ConvTransposeLeakyBlock: ConvTranspose2d(k=3, s=2, p=1, output_size=2x)
#                          + BN(batch stats) + LeakyReLU
# ---------------------------------------------------------------------------
def conv_transpose_leaky_block(x, w, b, gamma, beta, output_size):
    """x: (N, H, W, Cin) NHWC.  w: (Cin, Cout, 3, 3) PyTorch ConvTranspose2d layout.
    Bias is dropped (cancelled by batch-stat BN).  Returns (N, 2H, 2W, Cout) bf16."""
    del b
    N, H, W, Cin = x.shape
    OH, OW = output_size
    assert OH == 2 * H and OW == 2 * W, "kernel assumes output_size == 2 * input size"
    Cout = w.shape[1]
    cpad = _round_up(Cout, LANE)
    L = 4 * cpad                   # 4 output-parity phases stacked on the lane axis

    # 4 phase slices of the UNDILATED input (bottom/right halo only).
    offsets = ((1, 1), (1, 0), (0, 1), (0, 0))      # slots x11, x10, x01, x00
    th = _pick_row_tile(H, W, Cin, L, 4, 1, 1)

    xp = jnp.pad(x.astype(jnp.bfloat16), ((0, 0), (0, 1), (0, 1), (0, 0)))
    x_tiles, _ = _split_row_tiles(xp, th, 1)

    # Per-slot weights; phase p (= 2*row_parity + col_parity) occupies lanes
    # [p*cpad, p*cpad+Cout).  From  y[2i+kh-1, 2j+kw-1] += w[:,:,kh,kw]^T x[i,j].
    def tap(kh, kw):
        return w[:, :, kh, kw].astype(jnp.bfloat16)              # (Cin, Cout)

    wb = jnp.zeros((4, Cin, L), jnp.bfloat16)
    wb = wb.at[3, :, 0 * cpad:0 * cpad + Cout].set(tap(1, 1))    # (even,even) <- x00
    wb = wb.at[2, :, 1 * cpad:1 * cpad + Cout].set(tap(1, 0))    # (even,odd)  <- x01
    wb = wb.at[3, :, 1 * cpad:1 * cpad + Cout].set(tap(1, 2))    #             <- x00
    wb = wb.at[1, :, 2 * cpad:2 * cpad + Cout].set(tap(0, 1))    # (odd,even)  <- x10
    wb = wb.at[3, :, 2 * cpad:2 * cpad + Cout].set(tap(2, 1))    #             <- x00
    wb = wb.at[0, :, 3 * cpad:3 * cpad + Cout].set(tap(0, 0))    # (odd,odd)   <- x11
    wb = wb.at[1, :, 3 * cpad:3 * cpad + Cout].set(tap(0, 2))    #             <- x10
    wb = wb.at[2, :, 3 * cpad:3 * cpad + Cout].set(tap(2, 0))    #             <- x01
    wb = wb.at[3, :, 3 * cpad:3 * cpad + Cout].set(tap(2, 2))    #             <- x00

    g_pad = jnp.zeros((cpad,), jnp.float32).at[:Cout].set(gamma.astype(jnp.float32))
    be_pad = jnp.zeros((cpad,), jnp.float32).at[:Cout].set(beta.astype(jnp.float32))

    out = _fused_tap_matmul_bn_leaky(
        x_tiles, wb, g_pad, be_pad, offsets=offsets, th=th, w_cols=W,
        count=N * OH * OW, groups=4)

    # Interleave parity phases back into NHWC (layout glue on the bf16 output).
    y6 = out.reshape(N, H, W, 2, 2, cpad)             # (n, i, j, pi, pj, c)
    y = jnp.transpose(y6, (0, 1, 3, 2, 4, 5)).reshape(N, OH, OW, cpad)
    return y[..., :Cout]


# ---------------------------------------------------------------------------
# Plain-JAX composition glue (max-pool / skip concat) used by the LeakyUNET graph
# ---------------------------------------------------------------------------
def max_pool_2x2(x):
    N, H, W, C = x.shape
    return x.reshape(N, H // 2, 2, W // 2, 2, C).max(axis=(2, 4))


# ---------------------------------------------------------------------------
# Pure-JAX references (correctness oracles)
# ---------------------------------------------------------------------------
def _bn_leaky_ref(y, gamma, beta):
    mean = jnp.mean(y, axis=(0, 1, 2), keepdims=True)
    var = jnp.mean((y - mean) ** 2, axis=(0, 1, 2), keepdims=True)
    yh = (y - mean) / jnp.sqrt(var + EPS)
    yh = yh * gamma.reshape(1, 1, 1, -1) + beta.reshape(1, 1, 1, -1)
    return jnp.where(yh >= 0, yh, yh * LEAKY_SLOPE)


def _conv_leaky_ref(x, w, b, gamma, beta):
    rhs = jnp.transpose(w, (2, 3, 1, 0))               # HWIO
    y = lax.conv_general_dilated(x, rhs, (1, 1), ((1, 1), (1, 1)),
                                 dimension_numbers=("NHWC", "HWIO", "NHWC"),
                                 precision=lax.Precision.HIGHEST)
    return _bn_leaky_ref(y + b.reshape(1, 1, 1, -1), gamma, beta)


def _conv_transpose_leaky_ref(x, w, b, gamma, beta):
    w_flip = w[:, :, ::-1, ::-1]
    rhs = jnp.transpose(w_flip, (2, 3, 0, 1))          # HWIO
    y = lax.conv_general_dilated(x, rhs, (1, 1), ((1, 2), (1, 2)),
                                 lhs_dilation=(2, 2),
                                 dimension_numbers=("NHWC", "HWIO", "NHWC"),
                                 precision=lax.Precision.HIGHEST)
    return _bn_leaky_ref(y + b.reshape(1, 1, 1, -1), gamma, beta)


if __name__ == "__main__":
    key = jax.random.PRNGKey(0)
    ks = jax.random.split(key, 24)

    def q(a):  # quantize to the bf16 grid so kernel and f32 reference see identical inputs
        return a.astype(jnp.bfloat16).astype(jnp.float32)

    conv_jit = jax.jit(conv_leaky_block)
    conv_t_jit = jax.jit(conv_transpose_leaky_block, static_argnums=(5,))

    N, H, W = 2, 16, 16

    # --- ConvLeakyBlock: (2, 16, 16, 4) -> (2, 16, 16, 8) ---
    Cin, Cout = 4, 8
    x_c = q(jax.random.normal(ks[0], (N, H, W, Cin), jnp.float32))
    bc = 1.0 / np.sqrt(Cin * 9)
    w_c = q(jax.random.uniform(ks[1], (Cout, Cin, 3, 3), jnp.float32, -bc, bc))
    b_c = jax.random.uniform(ks[2], (Cout,), jnp.float32, -bc, bc)
    g_c = 1.0 + 0.1 * jax.random.normal(ks[3], (Cout,), jnp.float32)
    be_c = 0.1 * jax.random.normal(ks[4], (Cout,), jnp.float32)

    out_c = jax.block_until_ready(conv_jit(x_c, w_c, b_c, g_c, be_c))
    assert out_c.shape == (N, H, W, Cout)
    ref_c = _conv_leaky_ref(x_c, w_c, b_c, g_c, be_c)
    np.testing.assert_allclose(np.asarray(out_c.astype(jnp.float32)),
                               np.asarray(ref_c), rtol=2e-2, atol=2e-2)

    # --- ConvTransposeLeakyBlock: (2, 16, 16, 4) -> (2, 32, 32, 8) ---
    Cin_t, Cout_t = 4, 8
    x_t = q(jax.random.normal(ks[5], (N, H, W, Cin_t), jnp.float32))
    bt = 1.0 / np.sqrt(Cout_t * 9)
    w_t = q(jax.random.uniform(ks[6], (Cin_t, Cout_t, 3, 3), jnp.float32, -bt, bt))
    b_t = jax.random.uniform(ks[7], (Cout_t,), jnp.float32, -bt, bt)
    g_t = 1.0 + 0.1 * jax.random.normal(ks[8], (Cout_t,), jnp.float32)
    be_t = 0.1 * jax.random.normal(ks[9], (Cout_t,), jnp.float32)

    out_t = jax.block_until_ready(conv_t_jit(x_t, w_t, b_t, g_t, be_t, (2 * H, 2 * W)))
    assert out_t.shape == (N, 2 * H, 2 * W, Cout_t)
    ref_t = _conv_transpose_leaky_ref(x_t, w_t, b_t, g_t, be_t)
    np.testing.assert_allclose(np.asarray(out_t.astype(jnp.float32)),
                               np.asarray(ref_t), rtol=2e-2, atol=2e-2)

    # --- Mini LeakyUNET-style composition smoke test (pool / skip-concat glue) ---
    def mk_conv(k, cin, cout):
        kk = jax.random.split(k, 4)
        bd = 1.0 / np.sqrt(cin * 9)
        return (q(jax.random.uniform(kk[0], (cout, cin, 3, 3), jnp.float32, -bd, bd)),
                jax.random.uniform(kk[1], (cout,), jnp.float32, -bd, bd),
                1.0 + 0.1 * jax.random.normal(kk[2], (cout,), jnp.float32),
                0.1 * jax.random.normal(kk[3], (cout,), jnp.float32))

    def mk_convt(k, cin, cout):
        kk = jax.random.split(k, 4)
        bd = 1.0 / np.sqrt(cout * 9)
        return (q(jax.random.uniform(kk[0], (cin, cout, 3, 3), jnp.float32, -bd, bd)),
                jax.random.uniform(kk[1], (cout,), jnp.float32, -bd, bd),
                1.0 + 0.1 * jax.random.normal(kk[2], (cout,), jnp.float32),
                0.1 * jax.random.normal(kk[3], (cout,), jnp.float32))

    params = {
        "d1": mk_conv(ks[10], 1, 8),
        "m": mk_conv(ks[11], 8, 8),
        "up": mk_convt(ks[12], 8, 8),
        "o": mk_conv(ks[13], 16, 1),
    }

    @jax.jit
    def mini_unet(x, p):
        d1 = conv_leaky_block(x, *p["d1"])
        m = conv_leaky_block(max_pool_2x2(d1), *p["m"])
        u = conv_transpose_leaky_block(m, *p["up"], (d1.shape[1], d1.shape[2]))
        cat = jnp.concatenate([d1, u], axis=-1)
        return conv_leaky_block(cat, *p["o"])

    x_u = q(jax.random.normal(ks[14], (N, H, W, 1), jnp.float32))
    out_u = jax.block_until_ready(mini_unet(x_u, params))
    assert out_u.shape == (N, H, W, 1)
    assert bool(jnp.all(jnp.isfinite(out_u.astype(jnp.float32))))

    print("KERNEL_OK")
</pallas_src>

<mosaic_0001>
module attributes {stable_mosaic.version = 11 : i64} {
  func.func @_tap_matmul_stats_kernel(%arg0: i32, %arg1: memref<1x18x18x4xbf16, #tpu.memory_space<vmem>>, %arg2: memref<9x4x128xbf16, #tpu.memory_space<vmem>>, %arg3: memref<1x256x128xbf16, #tpu.memory_space<vmem>>, %arg4: memref<1x1x128xf32, #tpu.memory_space<vmem>>, %arg5: memref<1x1x128xf32, #tpu.memory_space<vmem>>, %arg6: memref<256x128xf32, #tpu.memory_space<vmem>>) attributes {dimension_semantics = [#tpu.dimension_semantics<parallel>], iteration_bounds = array<i64: 2>, scalar_prefetch = 0 : i64, scratch_operands = 1 : i64, tpu.core_type = #tpu.core_type<tc>, window_params = [{transform_indices = @transform_0, window_bounds = array<i64: 1, 18, 18, 4>}, {pipeline_mode = #tpu.pipeline_mode<synchronous>, transform_indices = @transform_1, window_bounds = array<i64: 9, 4, 128>}, {transform_indices = @transform_2, window_bounds = array<i64: 1, 256, 128>}, {transform_indices = @transform_3, window_bounds = array<i64: 1, 1, 128>}, {transform_indices = @transform_4, window_bounds = array<i64: 1, 1, 128>}]} {
    %c0 = arith.constant 0 : index
    %c0_0 = arith.constant 0 : index
    %c0_1 = arith.constant 0 : index
    %c0_2 = arith.constant 0 : index
    %0 = vector.load %arg1[%c0, %c0_0, %c0_1, %c0_2] : memref<1x18x18x4xbf16, #tpu.memory_space<vmem>>, vector<1x18x18x4xbf16>
    %1 = vector.shape_cast %0 : vector<1x18x18x4xbf16> to vector<18x18x4xbf16>
    %2 = vector.extract_strided_slice %1 {offsets = [0, 0, 0], sizes = [16, 16, 4], strides = [1, 1, 1]} : vector<18x18x4xbf16> to vector<16x16x4xbf16>
    %3 = vector.shape_cast %2 : vector<16x16x4xbf16> to vector<256x4xbf16>
    %c0_3 = arith.constant 0 : index
    %c0_4 = arith.constant 0 : index
    %c0_5 = arith.constant 0 : index
    %4 = vector.load %arg2[%c0_3, %c0_4, %c0_5] : memref<9x4x128xbf16, #tpu.memory_space<vmem>>, vector<1x4x128xbf16>
    %5 = vector.shape_cast %4 : vector<1x4x128xbf16> to vector<4x128xbf16>
    %cst = arith.constant dense<0.000000e+00> : vector<256x128xf32>
    %6 = tpu.matmul %3, %5, %cst {dimension_numbers = #tpu.dot_dimension_numbers<[1], [0], [0], [1], [0, 0, 1, 1], [], []>} : vector<256x4xbf16>, vector<4x128xbf16>, vector<256x128xf32> -> vector<256x128xf32>
    %c0_6 = arith.constant 0 : index
    %c0_7 = arith.constant 0 : index
    %7 = vector.load %arg6[%c0_6, %c0_7] : memref<256x128xf32, #tpu.memory_space<vmem>>, vector<256x128xf32>
    tpu.vector_store %arg6[%c0_6, %c0_7], %6 {strides = array<i32>} : memref<256x128xf32, #tpu.memory_space<vmem>>, vector<256x128xf32>,
    %8 = vector.extract_strided_slice %1 {offsets = [0, 1, 0], sizes = [16, 16, 4], strides = [1, 1, 1]} : vector<18x18x4xbf16> to vector<16x16x4xbf16>
    %9 = vector.shape_cast %8 : vector<16x16x4xbf16> to vector<256x4xbf16>
    %c1 = arith.constant 1 : index
    %c0_8 = arith.constant 0 : index
    %c0_9 = arith.constant 0 : index
    %10 = vector.load %arg2[%c1, %c0_8, %c0_9] : memref<9x4x128xbf16, #tpu.memory_space<vmem>>, vector<1x4x128xbf16>
    %11 = vector.shape_cast %10 : vector<1x4x128xbf16> to vector<4x128xbf16>
    %cst_10 = arith.constant dense<0.000000e+00> : vector<256x128xf32>
    %12 = tpu.matmul %9, %11, %cst_10 {dimension_numbers = #tpu.dot_dimension_numbers<[1], [0], [0], [1], [0, 0, 1, 1], [], []>} : vector<256x4xbf16>, vector<4x128xbf16>, vector<256x128xf32> -> vector<256x128xf32>
    %c0_11 = arith.constant 0 : index
    %c0_12 = arith.constant 0 : index
    %13 = vector.load %arg6[%c0_11, %c0_12] : memref<256x128xf32, #tpu.memory_space<vmem>>, vector<256x128xf32>
    %14 = arith.addf %13, %12 : vector<256x128xf32>
    %c0_13 = arith.constant 0 : index
    %c0_14 = arith.constant 0 : index
    %15 = vector.load %arg6[%c0_13, %c0_14] : memref<256x128xf32, #tpu.memory_space<vmem>>, vector<256x128xf32>
    tpu.vector_store %arg6[%c0_13, %c0_14], %14 {strides = array<i32>} : memref<256x128xf32, #tpu.memory_space<vmem>>, vector<256x128xf32>,
    %16 = vector.extract_strided_slice %1 {offsets = [0, 2, 0], sizes = [16, 16, 4], strides = [1, 1, 1]} : vector<18x18x4xbf16> to vector<16x16x4xbf16>
    %17 = vector.shape_cast %16 : vector<16x16x4xbf16> to vector<256x4xbf16>
    %c2 = arith.constant 2 : index
    %c0_15 = arith.constant 0 : index
    %c0_16 = arith.constant 0 : index
    %18 = vector.load %arg2[%c2, %c0_15, %c0_16] : memref<9x4x128xbf16, #tpu.memory_space<vmem>>, vector<1x4x128xbf16>
    %19 = vector.shape_cast %18 : vector<1x4x128xbf16> to vector<4x128xbf16>
    %cst_17 = arith.constant dense<0.000000e+00> : vector<256x128xf32>
    %20 = tpu.matmul %17, %19, %cst_17 {dimension_numbers = #tpu.dot_dimension_numbers<[1], [0], [0], [1], [0, 0, 1, 1], [], []>} : vector<256x4xbf16>, vector<4x128xbf16>, vector<256x128xf32> -> vector<256x128xf32>
    %c0_18 = arith.constant 0 : index
    %c0_19 = arith.constant 0 : index
    %21 = vector.load %arg6[%c0_18, %c0_19] : memref<256x128xf32, #tpu.memory_space<vmem>>, vector<256x128xf32>
    %22 = arith.addf %21, %20 : vector<256x128xf32>
    %c0_20 = arith.constant 0 : index
    %c0_21 = arith.constant 0 : index
    %23 = vector.load %arg6[%c0_20, %c0_21] : memref<256x128xf32, #tpu.memory_space<vmem>>, vector<256x128xf32>
    tpu.vector_store %arg6[%c0_20, %c0_21], %22 {strides = array<i32>} : memref<256x128xf32, #tpu.memory_space<vmem>>, vector<256x128xf32>,
    %24 = vector.extract_strided_slice %1 {offsets = [1, 0, 0], sizes = [16, 16, 4], strides = [1, 1, 1]} : vector<18x18x4xbf16> to vector<16x16x4xbf16>
    %25 = vector.shape_cast %24 : vector<16x16x4xbf16> to vector<256x4xbf16>
    %c3 = arith.constant 3 : index
    %c0_22 = arith.constant 0 : index
    %c0_23 = arith.constant 0 : index
    %26 = vector.load %arg2[%c3, %c0_22, %c0_23] : memref<9x4x128xbf16, #tpu.memory_space<vmem>>, vector<1x4x128xbf16>
    %27 = vector.shape_cast %26 : vector<1x4x128xbf16> to vector<4x128xbf16>
    %cst_24 = arith.constant dense<0.000000e+00> : vector<256x128xf32>
    %28 = tpu.matmul %25, %27, %cst_24 {dimension_numbers = #tpu.dot_dimension_numbers<[1], [0], [0], [1], [0, 0, 1, 1], [], []>} : vector<256x4xbf16>, vector<4x128xbf16>, vector<256x128xf32> -> vector<256x128xf32>
    %c0_25 = arith.constant 0 : index
    %c0_26 = arith.constant 0 : index
    %29 = vector.load %arg6[%c0_25, %c0_26] : memref<256x128xf32, #tpu.memory_space<vmem>>, vector<256x128xf32>
    %30 = arith.addf %29, %28 : vector<256x128xf32>
    %c0_27 = arith.constant 0 : index
    %c0_28 = arith.constant 0 : index
    %31 = vector.load %arg6[%c0_27, %c0_28] : memref<256x128xf32, #tpu.memory_space<vmem>>, vector<256x128xf32>
    tpu.vector_store %arg6[%c0_27, %c0_28], %30 {strides = array<i32>} : memref<256x128xf32, #tpu.memory_space<vmem>>, vector<256x128xf32>,
    %32 = vector.extract_strided_slice %1 {offsets = [1, 1, 0], sizes = [16, 16, 4], strides = [1, 1, 1]} : vector<18x18x4xbf16> to vector<16x16x4xbf16>
    %33 = vector.shape_cast %32 : vector<16x16x4xbf16> to vector<256x4xbf16>
    %c4 = arith.constant 4 : index
    %c0_29 = arith.constant 0 : index
    %c0_30 = arith.constant 0 : index
    %34 = vector.load %arg2[%c4, %c0_29, %c0_30] : memref<9x4x128xbf16, #tpu.memory_space<vmem>>, vector<1x4x128xbf16>
    %35 = vector.shape_cast %34 : vector<1x4x128xbf16> to vector<4x128xbf16>
    %cst_31 = arith.constant dense<0.000000e+00> : vector<256x128xf32>
    %36 = tpu.matmul %33, %35, %cst_31 {dimension_numbers = #tpu.dot_dimension_numbers<[1], [0], [0], [1], [0, 0, 1, 1], [], []>} : vector<256x4xbf16>, vector<4x128xbf16>, vector<256x128xf32> -> vector<256x128xf32>
    %c0_32 = arith.constant 0 : index
    %c0_33 = arith.constant 0 : index
    %37 = vector.load %arg6[%c0_32, %c0_33] : memref<256x128xf32, #tpu.memory_space<vmem>>, vector<256x128xf32>
    %38 = arith.addf %37, %36 : vector<256x128xf32>
    %c0_34 = arith.constant 0 : index
    %c0_35 = arith.constant 0 : index
    %39 = vector.load %arg6[%c0_34, %c0_35] : memref<256x128xf32, #tpu.memory_space<vmem>>, vector<256x128xf32>
    tpu.vector_store %arg6[%c0_34, %c0_35], %38 {strides = array<i32>} : memref<256x128xf32, #tpu.memory_space<vmem>>, vector<256x128xf32>,
    %40 = vector.extract_strided_slice %1 {offsets = [1, 2, 0], sizes = [16, 16, 4], strides = [1, 1, 1]} : vector<18x18x4xbf16> to vector<16x16x4xbf16>
    %41 = vector.shape_cast %40 : vector<16x16x4xbf16> to vector<256x4xbf16>
    %c5 = arith.constant 5 : index
    %c0_36 = arith.constant 0 : index
    %c0_37 = arith.constant 0 : index
    %42 = vector.load %arg2[%c5, %c0_36, %c0_37] : memref<9x4x128xbf16, #tpu.memory_space<vmem>>, vector<1x4x128xbf16>
    %43 = vector.shape_cast %42 : vector<1x4x128xbf16> to vector<4x128xbf16>
    %cst_38 = arith.constant dense<0.000000e+00> : vector<256x128xf32>
    %44 = tpu.matmul %41, %43, %cst_38 {dimension_numbers = #tpu.dot_dimension_numbers<[1], [0], [0], [1], [0, 0, 1, 1], [], []>} : vector<256x4xbf16>, vector<4x128xbf16>, vector<256x128xf32> -> vector<256x128xf32>
    %c0_39 = arith.constant 0 : index
    %c0_40 = arith.constant 0 : index
    %45 = vector.load %arg6[%c0_39, %c0_40] : memref<256x128xf32, #tpu.memory_space<vmem>>, vector<256x128xf32>
    %46 = arith.addf %45, %44 : vector<256x128xf32>
    %c0_41 = arith.constant 0 : index
    %c0_42 = arith.constant 0 : index
    %47 = vector.load %arg6[%c0_41, %c0_42] : memref<256x128xf32, #tpu.memory_space<vmem>>, vector<256x128xf32>
    tpu.vector_store %arg6[%c0_41, %c0_42], %46 {strides = array<i32>} : memref<256x128xf32, #tpu.memory_space<vmem>>, vector<256x128xf32>,
    %48 = vector.extract_strided_slice %1 {offsets = [2, 0, 0], sizes = [16, 16, 4], strides = [1, 1, 1]} : vector<18x18x4xbf16> to vector<16x16x4xbf16>
    %49 = vector.shape_cast %48 : vector<16x16x4xbf16> to vector<256x4xbf16>
    %c6 = arith.constant 6 : index
    %c0_43 = arith.constant 0 : index
    %c0_44 = arith.constant 0 : index
    %50 = vector.load %arg2[%c6, %c0_43, %c0_44] : memref<9x4x128xbf16, #tpu.memory_space<vmem>>, vector<1x4x128xbf16>
    %51 = vector.shape_cast %50 : vector<1x4x128xbf16> to vector<4x128xbf16>
    %cst_45 = arith.constant dense<0.000000e+00> : vector<256x128xf32>
    %52 = tpu.matmul %49, %51, %cst_45 {dimension_numbers = #tpu.dot_dimension_numbers<[1], [0], [0], [1], [0, 0, 1, 1], [], []>} : vector<256x4xbf16>, vector<4x128xbf16>, vector<256x128xf32> -> vector<256x128xf32>
    %c0_46 = arith.constant 0 : index
    %c0_47 = arith.constant 0 : index
    %53 = vector.load %arg6[%c0_46, %c0_47] : memref<256x128xf32, #tpu.memory_space<vmem>>, vector<256x128xf32>
    %54 = arith.addf %53, %52 : vector<256x128xf32>
    %c0_48 = arith.constant 0 : index
    %c0_49 = arith.constant 0 : index
    %55 = vector.load %arg6[%c0_48, %c0_49] : memref<256x128xf32, #tpu.memory_space<vmem>>, vector<256x128xf32>
    tpu.vector_store %arg6[%c0_48, %c0_49], %54 {strides = array<i32>} : memref<256x128xf32, #tpu.memory_space<vmem>>, vector<256x128xf32>,
    %56 = vector.extract_strided_slice %1 {offsets = [2, 1, 0], sizes = [16, 16, 4], strides = [1, 1, 1]} : vector<18x18x4xbf16> to vector<16x16x4xbf16>
    %57 = vector.shape_cast %56 : vector<16x16x4xbf16> to vector<256x4xbf16>
    %c7 = arith.constant 7 : index
    %c0_50 = arith.constant 0 : index
    %c0_51 = arith.constant 0 : index
    %58 = vector.load %arg2[%c7, %c0_50, %c0_51] : memref<9x4x128xbf16, #tpu.memory_space<vmem>>, vector<1x4x128xbf16>
    %59 = vector.shape_cast %58 : vector<1x4x128xbf16> to vector<4x128xbf16>
    %cst_52 = arith.constant dense<0.000000e+00> : vector<256x128xf32>
    %60 = tpu.matmul %57, %59, %cst_52 {dimension_numbers = #tpu.dot_dimension_numbers<[1], [0], [0], [1], [0, 0, 1, 1], [], []>} : vector<256x4xbf16>, vector<4x128xbf16>, vector<256x128xf32> -> vector<256x128xf32>
    %c0_53 = arith.constant 0 : index
    %c0_54 = arith.constant 0 : index
    %61 = vector.load %arg6[%c0_53, %c0_54] : memref<256x128xf32, #tpu.memory_space<vmem>>, vector<256x128xf32>
    %62 = arith.addf %61, %60 : vector<256x128xf32>
    %c0_55 = arith.constant 0 : index
    %c0_56 = arith.constant 0 : index
    %63 = vector.load %arg6[%c0_55, %c0_56] : memref<256x128xf32, #tpu.memory_space<vmem>>, vector<256x128xf32>
    tpu.vector_store %arg6[%c0_55, %c0_56], %62 {strides = array<i32>} : memref<256x128xf32, #tpu.memory_space<vmem>>, vector<256x128xf32>,
    %64 = vector.extract_strided_slice %1 {offsets = [2, 2, 0], sizes = [16, 16, 4], strides = [1, 1, 1]} : vector<18x18x4xbf16> to vector<16x16x4xbf16>
    %65 = vector.shape_cast %64 : vector<16x16x4xbf16> to vector<256x4xbf16>
    %c8 = arith.constant 8 : index
    %c0_57 = arith.constant 0 : index
    %c0_58 = arith.constant 0 : index
    %66 = vector.load %arg2[%c8, %c0_57, %c0_58] : memref<9x4x128xbf16, #tpu.memory_space<vmem>>, vector<1x4x128xbf16>
    %67 = vector.shape_cast %66 : vector<1x4x128xbf16> to vector<4x128xbf16>
    %cst_59 = arith.constant dense<0.000000e+00> : vector<256x128xf32>
    %68 = tpu.matmul %65, %67, %cst_59 {dimension_numbers = #tpu.dot_dimension_numbers<[1], [0], [0], [1], [0, 0, 1, 1], [], []>} : vector<256x4xbf16>, vector<4x128xbf16>, vector<256x128xf32> -> vector<256x128xf32>
    %c0_60 = arith.constant 0 : index
    %c0_61 = arith.constant 0 : index
    %69 = vector.load %arg6[%c0_60, %c0_61] : memref<256x128xf32, #tpu.memory_space<vmem>>, vector<256x128xf32>
    %70 = arith.addf %69, %68 : vector<256x128xf32>
    %c0_62 = arith.constant 0 : index
    %c0_63 = arith.constant 0 : index
    %71 = vector.load %arg6[%c0_62, %c0_63] : memref<256x128xf32, #tpu.memory_space<vmem>>, vector<256x128xf32>
    tpu.vector_store %arg6[%c0_62, %c0_63], %70 {strides = array<i32>} : memref<256x128xf32, #tpu.memory_space<vmem>>, vector<256x128xf32>,
    %c0_64 = arith.constant 0 : index
    %c0_65 = arith.constant 0 : index
    %72 = vector.load %arg6[%c0_64, %c0_65] : memref<256x128xf32, #tpu.memory_space<vmem>>, vector<256x128xf32>
    %73 = arith.truncf %72 : vector<256x128xf32> to vector<256x128xbf16>
    %c0_66 = arith.constant 0 : index
    %c0_67 = arith.constant 0 : index
    %c0_68 = arith.constant 0 : index
    %74 = vector.load %arg3[%c0_66, %c0_67, %c0_68] : memref<1x256x128xbf16, #tpu.memory_space<vmem>>, vector<1x256x128xbf16>
    %75 = vector.shape_cast %74 : vector<1x256x128xbf16> to vector<256x128xbf16>
    %76 = vector.shape_cast %73 : vector<256x128xbf16> to vector<1x256x128xbf16>
    tpu.vector_store %arg3[%c0_66, %c0_67, %c0_68], %76 {strides = array<i32>} : memref<1x256x128xbf16, #tpu.memory_space<vmem>>, vector<1x256x128xbf16>,
    %cst_69 = arith.constant dense<0.000000e+00> : vector<128xf32>
    %77 = vector.multi_reduction <add>, %72, %cst_69 [0] : vector<256x128xf32> to vector<128xf32>
    %78 = vector.shape_cast %77 : vector<128xf32> to vector<1x128xf32>
    %c0_70 = arith.constant 0 : index
    %c0_71 = arith.constant 0 : index
    %c0_72 = arith.constant 0 : index
    %79 = vector.load %arg4[%c0_70, %c0_71, %c0_72] : memref<1x1x128xf32, #tpu.memory_space<vmem>>, vector<1x1x128xf32>
    %80 = vector.shape_cast %79 : vector<1x1x128xf32> to vector<1x128xf32>
    %81 = vector.shape_cast %78 : vector<1x128xf32> to vector<1x1x128xf32>
    tpu.vector_store %arg4[%c0_70, %c0_71, %c0_72], %81 {strides = array<i32>} : memref<1x1x128xf32, #tpu.memory_space<vmem>>, vector<1x1x128xf32>,
    %82 = arith.mulf %72, %72 : vector<256x128xf32>
    %cst_73 = arith.constant dense<0.000000e+00> : vector<128xf32>
    %83 = vector.multi_reduction <add>, %82, %cst_73 [0] : vector<256x128xf32> to vector<128xf32>
    %84 = vector.shape_cast %83 : vector<128xf32> to vector<1x128xf32>
    %c0_74 = arith.constant 0 : index
    %c0_75 = arith.constant 0 : index
    %c0_76 = arith.constant 0 : index
    %85 = vector.load %arg5[%c0_74, %c0_75, %c0_76] : memref<1x1x128xf32, #tpu.memory_space<vmem>>, vector<1x1x128xf32>
    %86 = vector.shape_cast %85 : vector<1x1x128xf32> to vector<1x128xf32>
    %87 = vector.shape_cast %84 : vector<1x128xf32> to vector<1x1x128xf32>
    tpu.vector_store %arg5[%c0_74, %c0_75, %c0_76], %87 {strides = array<i32>} : memref<1x1x128xf32, #tpu.memory_space<vmem>>, vector<1x1x128xf32>,
    return
  }
  func.func @transform_0(%arg0: i32) -> (i32, i32, i32, i32) {
    %c0_i32 = arith.constant 0 : i32
    %c0_i32_0 = arith.constant 0 : i32
    %c0_i32_1 = arith.constant 0 : i32
    %c0_i32_2 = arith.constant 0 : i32
    return %arg0, %c0_i32, %c0_i32_0, %c0_i32_1 : i32, i32, i32, i32
  }
  func.func @transform_1(%arg0: i32) -> (i32, i32, i32) {
    %c0_i32 = arith.constant 0 : i32
    %c0_i32_0 = arith.constant 0 : i32
    %c0_i32_1 = arith.constant 0 : i32
    %c0_i32_2 = arith.constant 0 : i32
    return %c0_i32, %c0_i32_0, %c0_i32_1 : i32, i32, i32
  }
  func.func @transform_2(%arg0: i32) -> (i32, i32, i32) {
    %c0_i32 = arith.constant 0 : i32
    %c0_i32_0 = arith.constant 0 : i32
    %c0_i32_1 = arith.constant 0 : i32
    return %arg0, %c0_i32, %c0_i32_0 : i32, i32, i32
  }
  func.func @transform_3(%arg0: i32) -> (i32, i32, i32) {
    %c0_i32 = arith.constant 0 : i32
    %c0_i32_0 = arith.constant 0 : i32
    %c0_i32_1 = arith.constant 0 : i32
    return %arg0, %c0_i32, %c0_i32_0 : i32, i32, i32
  }
  func.func @transform_4(%arg0: i32) -> (i32, i32, i32) {
    %c0_i32 = arith.constant 0 : i32
    %c0_i32_0 = arith.constant 0 : i32
    %c0_i32_1 = arith.constant 0 : i32
    return %arg0, %c0_i32, %c0_i32_0 : i32, i32, i32
  }
}

module attributes {stable_mosaic.version = 11 : i64} {
  func.func @_bn_leaky_kernel(%arg0: i32, %arg1: memref<512x128xbf16, #tpu.memory_space<vmem>>, %arg2: memref<1x128xf32, #tpu.memory_space<vmem>>, %arg3: memref<1x128xf32, #tpu.memory_space<vmem>>, %arg4: memref<512x128xbf16, #tpu.memory_space<vmem>>) attributes {dimension_semantics = [#tpu.dimension_semantics<parallel>], iteration_bounds = array<i64: 1>, scalar_prefetch = 0 : i64, scratch_operands = 0 : i64, tpu.core_type = #tpu.core_type<tc>, window_params = [{transform_indices = @transform_0, window_bounds = array<i64: 512, 128>}, {pipeline_mode = #tpu.pipeline_mode<synchronous>, transform_indices = @transform_1, window_bounds = array<i64: 1, 128>}, {pipeline_mode = #tpu.pipeline_mode<synchronous>, transform_indices = @transform_2, window_bounds = array<i64: 1, 128>}, {transform_indices = @transform_3, window_bounds = array<i64: 512, 128>}]} {
    %c0 = arith.constant 0 : index
    %c0_0 = arith.constant 0 : index
    %0 = vector.load %arg1[%c0, %c0_0] : memref<512x128xbf16, #tpu.memory_space<vmem>>, vector<512x128xbf16>
    %1 = arith.extf %0 : vector<512x128xbf16> to vector<512x128xf32>
    %c0_1 = arith.constant 0 : index
    %c0_2 = arith.constant 0 : index
    %2 = vector.load %arg2[%c0_1, %c0_2] : memref<1x128xf32, #tpu.memory_space<vmem>>, vector<1x128xf32>
    %3 = vector.broadcast %2 : vector<1x128xf32> to vector<512x128xf32>
    %4 = arith.mulf %1, %3 : vector<512x128xf32>
    %c0_3 = arith.constant 0 : index
    %c0_4 = arith.constant 0 : index
    %5 = vector.load %arg3[%c0_3, %c0_4] : memref<1x128xf32, #tpu.memory_space<vmem>>, vector<1x128xf32>
    %6 = vector.broadcast %5 : vector<1x128xf32> to vector<512x128xf32>
    %7 = arith.addf %4, %6 : vector<512x128xf32>
    %cst = arith.constant 0.000000e+00 : f32
    %8 = vector.broadcast %cst : f32 to vector<512x128xf32>
    %9 = arith.cmpf oge, %7, %8 : vector<512x128xf32>
    %cst_5 = arith.constant 3.000000e-02 : f32
    %10 = vector.broadcast %cst_5 : f32 to vector<512x128xf32>
    %11 = arith.mulf %7, %10 : vector<512x128xf32>
    %12 = arith.select %9, %7, %11 : vector<512x128xi1>, vector<512x128xf32>
    %13 = arith.truncf %12 : vector<512x128xf32> to vector<512x128xbf16>
    %c0_6 = arith.constant 0 : index
    %c0_7 = arith.constant 0 : index
    %14 = vector.load %arg4[%c0_6, %c0_7] : memref<512x128xbf16, #tpu.memory_space<vmem>>, vector<512x128xbf16>
    tpu.vector_store %arg4[%c0_6, %c0_7], %13 {strides = array<i32>} : memref<512x128xbf16, #tpu.memory_space<vmem>>, vector<512x128xbf16>,
    return
  }
  func.func @transform_0(%arg0: i32) -> (i32, i32) {
    %c0_i32 = arith.constant 0 : i32
    %c0_i32_0 = arith.constant 0 : i32
    return %arg0, %c0_i32 : i32, i32
  }
  func.func @transform_1(%arg0: i32) -> (i32, i32) {
    %c0_i32 = arith.constant 0 : i32
    %c0_i32_0 = arith.constant 0 : i32
    %c0_i32_1 = arith.constant 0 : i32
    return %c0_i32, %c0_i32_0 : i32, i32
  }
  func.func @transform_2(%arg0: i32) -> (i32, i32) {
    %c0_i32 = arith.constant 0 : i32
    %c0_i32_0 = arith.constant 0 : i32
    %c0_i32_1 = arith.constant 0 : i32
    return %c0_i32, %c0_i32_0 : i32, i32
  }
  func.func @transform_3(%arg0: i32) -> (i32, i32) {
    %c0_i32 = arith.constant 0 : i32
    %c0_i32_0 = arith.constant 0 : i32
    return %arg0, %c0_i32 : i32, i32
  }
}

</mosaic_0001>

<llo_original>
// kernel: conv_leaky_block.3
$region0: #{conv_leaky_block.3}
  #allocation0 [shape = 'u32[]', space=smem, size = 0x4, offset = 0x4, fixed_abs, tag = 'smem constant byte address 0x4 - core index']
  #allocation1 [shape = 'u32[144,128]{1,0:T(1,128)}', space=vmem, size = 0x12000, scoped, tag = 'internal scratch']
  %s0 = inlined_call_operand.vmem [shape: bf16[512,128], index: 0, kind: input, shape index: {}]
  %s1 = inlined_call_operand.vmem [shape: f32[1,128], index: 1, kind: input, shape index: {}]
  %s2 = inlined_call_operand.vmem [shape: f32[1,128], index: 2, kind: input, shape index: {}]
  %s3 = inlined_call_operand.vmem [shape: bf16[512,128], index: 3, kind: output, shape index: {}]
  %s4 = sld [smem:[#allocation0]]
  $region22: #{conv_leaky_block.3} parent=0
    _
  %s6 = ssub.s32 1, %s4
  %s7 = scalar_select 0, %s6, %s4
  // Predicated region
  $region2: #{conv_leaky_block.3} parent=0 // pred_check
    _
  $region3: #{conv_leaky_block.3} parent=0 // pred_check_branch
    %9 = sbr.rel (0) target = $region5
  $region4: #{conv_leaky_block.3} parent=0 // pred_region
    _
  $region5: #{conv_leaky_block.3} parent=0 // pred_fallthru
    _
  // Predicated region
  $region6: #{conv_leaky_block.3} parent=0 // pred_check
    _
  $region7: #{conv_leaky_block.3} parent=0 // pred_check_branch
    %11 = sbr.rel (0) target = $region9
  $region8: #{conv_leaky_block.3} parent=0 // pred_region
    _
  $region9: #{conv_leaky_block.3} parent=0 // pred_fallthru
    _
  // Predicated region
  $region10: #{conv_leaky_block.3} parent=0 // pred_check
    _
  $region11: #{conv_leaky_block.3} parent=0 // pred_check_branch
    %13 = sbr.rel (0) target = $region13
  $region12: #{conv_leaky_block.3} parent=0 // pred_region
    _
  $region13: #{conv_leaky_block.3} parent=0 // pred_fallthru
    _
  %v14 = vld [vmem:[%s0] sm:$0xf]
  %v15 = vld [vmem:[%s0 + $0x4] sm:$0xf]
  %v16 = vld [vmem:[%s0 + $0x8] sm:$0xf]
  %v17 = vld [vmem:[%s0 + $0xc] sm:$0xf]
  %v18 = vld [vmem:[%s0 + $0x10] sm:$0xf]
  %v19 = vld [vmem:[%s0 + $0x14] sm:$0xf]
  %v20 = vld [vmem:[%s0 + $0x18] sm:$0xf]
  %v21 = vld [vmem:[%s0 + $0x1c] sm:$0xf]
  %v22 = vld [vmem:[%s0 + $0x20] sm:$0xf]
  %v23 = vld [vmem:[%s0 + $0x24] sm:$0xf]
  %v24 = vld [vmem:[%s0 + $0x28] sm:$0xf]
  %v25 = vld [vmem:[%s0 + $0x2c] sm:$0xf]
  %v26 = vld [vmem:[%s0 + $0x30] sm:$0xf]
  %v27 = vld [vmem:[%s0 + $0x34] sm:$0xf]
  %v28 = vld [vmem:[%s0 + $0x38] sm:$0xf]
  %v29 = vld [vmem:[%s0 + $0x3c] sm:$0xf]
  %v30 = vld [vmem:[%s0 + $0x40] sm:$0xf]
  %v31 = vld [vmem:[%s0 + $0x44] sm:$0xf]
  %v32 = vld [vmem:[%s0 + $0x48] sm:$0xf]
  %v33 = vld [vmem:[%s0 + $0x4c] sm:$0xf]
  %v34 = vld [vmem:[%s0 + $0x50] sm:$0xf]
  %v35 = vld [vmem:[%s0 + $0x54] sm:$0xf]
  %v36 = vld [vmem:[%s0 + $0x58] sm:$0xf]
  %v37 = vld [vmem:[%s0 + $0x5c] sm:$0xf]
  %v38 = vld [vmem:[%s0 + $0x60] sm:$0xf]
  %v39 = vld [vmem:[%s0 + $0x64] sm:$0xf]
  %v40 = vld [vmem:[%s0 + $0x68] sm:$0xf]
  %v41 = vld [vmem:[%s0 + $0x6c] sm:$0xf]
  %v42 = vld [vmem:[%s0 + $0x70] sm:$0xf]
  %v43 = vld [vmem:[%s0 + $0x74] sm:$0xf]
  %v44 = vld [vmem:[%s0 + $0x78] sm:$0xf]
  %v45 = vld [vmem:[%s0 + $0x7c] sm:$0xf]
  %v46 = vld [vmem:[%s0 + $0x80] sm:$0xf]
  %v47 = vld [vmem:[%s0 + $0x84] sm:$0xf]
  %v48 = vld [vmem:[%s0 + $0x88] sm:$0xf]
  %v49 = vld [vmem:[%s0 + $0x8c] sm:$0xf]
  %v50 = vld [vmem:[%s0 + $0x90] sm:$0xf]
  %v51 = vld [vmem:[%s0 + $0x94] sm:$0xf]
  %v52 = vld [vmem:[%s0 + $0x98] sm:$0xf]
  %v53 = vld [vmem:[%s0 + $0x9c] sm:$0xf]
  %v54 = vld [vmem:[%s0 + $0xa0] sm:$0xf]
  %v55 = vld [vmem:[%s0 + $0xa4] sm:$0xf]
  %v56 = vld [vmem:[%s0 + $0xa8] sm:$0xf]
  %v57 = vld [vmem:[%s0 + $0xac] sm:$0xf]
  %v58 = vld [vmem:[%s0 + $0xb0] sm:$0xf]
  %v59 = vld [vmem:[%s0 + $0xb4] sm:$0xf]
  %v60 = vld [vmem:[%s0 + $0xb8] sm:$0xf]
  %v61 = vld [vmem:[%s0 + $0xbc] sm:$0xf]
  %v62 = vld [vmem:[%s0 + $0xc0] sm:$0xf]
  %v63 = vld [vmem:[%s0 + $0xc4] sm:$0xf]
  %v64 = vld [vmem:[%s0 + $0xc8] sm:$0xf]
  %v65 = vld [vmem:[%s0 + $0xcc] sm:$0xf]
  %v66 = vld [vmem:[%s0 + $0xd0] sm:$0xf]
  %v67 = vld [vmem:[%s0 + $0xd4] sm:$0xf]
  %v68 = vld [vmem:[%s0 + $0xd8] sm:$0xf]
  %v69 = vld [vmem:[%s0 + $0xdc] sm:$0xf]
  %v70 = vld [vmem:[%s0 + $0xe0] sm:$0xf]
  %v71 = vld [vmem:[%s0 + $0xe4] sm:$0xf]
  %v72 = vld [vmem:[%s0 + $0xe8] sm:$0xf]
  %v73 = vld [vmem:[%s0 + $0xec] sm:$0xf]
  %v74 = vld [vmem:[%s0 + $0xf0] sm:$0xf]
  %v75 = vld [vmem:[%s0 + $0xf4] sm:$0xf]
  %v76 = vld [vmem:[%s0 + $0xf8] sm:$0xf]
  %v77 = vld [vmem:[%s0 + $0xfc] sm:$0xf]
  %v78 = vunpack.c.l.bf16 %v14
  %v79 = vunpack.c.l.bf16 %v15
  %v80 = vunpack.c.l.bf16 %v16
  %v81 = vunpack.c.l.bf16 %v17
  %v82 = vunpack.c.l.bf16 %v18
  %v83 = vunpack.c.l.bf16 %v19
  %v84 = vunpack.c.l.bf16 %v20
  %v85 = vunpack.c.l.bf16 %v21
  %v86 = vunpack.c.l.bf16 %v22
  %v87 = vunpack.c.l.bf16 %v23
  %v88 = vunpack.c.l.bf16 %v24
  %v89 = vunpack.c.l.bf16 %v25
  %v90 = vunpack.c.l.bf16 %v26
  %v91 = vunpack.c.l.bf16 %v27
  %v92 = vunpack.c.l.bf16 %v28
  %v93 = vunpack.c.l.bf16 %v29
  %v94 = vunpack.c.l.bf16 %v30
  %v95 = vunpack.c.l.bf16 %v31
  %v96 = vunpack.c.l.bf16 %v32
  %v97 = vunpack.c.l.bf16 %v33
  %v98 = vunpack.c.l.bf16 %v34
  %v99 = vunpack.c.l.bf16 %v35
  %v100 = vunpack.c.l.bf16 %v36
  %v101 = vunpack.c.l.bf16 %v37
  %v102 = vunpack.c.l.bf16 %v38
  %v103 = vunpack.c.l.bf16 %v39
  %v104 = vunpack.c.l.bf16 %v40
  %v105 = vunpack.c.l.bf16 %v41
  %v106 = vunpack.c.l.bf16 %v42
  %v107 = vunpack.c.l.bf16 %v43
  %v108 = vunpack.c.l.bf16 %v44
  %v109 = vunpack.c.l.bf16 %v45
  %v110 = vunpack.c.l.bf16 %v46
  %v111 = vunpack.c.l.bf16 %v47
  %v112 = vunpack.c.l.bf16 %v48
  %v113 = vunpack.c.l.bf16 %v49
  %v114 = vunpack.c.l.bf16 %v50
  %v115 = vunpack.c.l.bf16 %v51
  %v116 = vunpack.c.l.bf16 %v52
  %v117 = vunpack.c.l.bf16 %v53
  %v118 = vunpack.c.l.bf16 %v54
  %v119 = vunpack.c.l.bf16 %v55
  %v120 = vunpack.c.l.bf16 %v56
  %v121 = vunpack.c.l.bf16 %v57
  %v122 = vunpack.c.l.bf16 %v58
  %v123 = vunpack.c.l.bf16 %v59
  %v124 = vunpack.c.l.bf16 %v60
  %v125 = vunpack.c.l.bf16 %v61
  %v126 = vunpack.c.l.bf16 %v62
  %v127 = vunpack.c.l.bf16 %v63
  %v128 = vunpack.c.l.bf16 %v64
  %v129 = vunpack.c.l.bf16 %v65
  %v130 = vunpack.c.l.bf16 %v66
  %v131 = vunpack.c.l.bf16 %v67
  %v132 = vunpack.c.l.bf16 %v68
  %v133 = vunpack.c.l.bf16 %v69
  %v134 = vunpack.c.l.bf16 %v70
  %v135 = vunpack.c.l.bf16 %v71
  %v136 = vunpack.c.l.bf16 %v72
  %v137 = vunpack.c.l.bf16 %v73
  %v138 = vunpack.c.l.bf16 %v74
  %v139 = vunpack.c.l.bf16 %v75
  %v140 = vunpack.c.l.bf16 %v76
  %v141 = vunpack.c.l.bf16 %v77
  %v142 = vld [vmem:[%s1] sm:$0x1]
  %v144 = vlaneseq
  %v145 = vshrl.u32 %v144, 7
  %v146 = vsub.s32 0, %v145
  %v147 = vrot.slane %v142, %v146
  %v149 = vmul.f32 %v78, %v147
  %v150 = vmul.f32 %v79, %v147
  %v151 = vmul.f32 %v80, %v147
  %v152 = vmul.f32 %v81, %v147
  %v153 = vmul.f32 %v82, %v147
  %v154 = vmul.f32 %v83, %v147
  %v155 = vmul.f32 %v84, %v147
  %v156 = vmul.f32 %v85, %v147
  %v157 = vmul.f32 %v86, %v147
  %v158 = vmul.f32 %v87, %v147
  %v159 = vmul.f32 %v88, %v147
  %v160 = vmul.f32 %v89, %v147
  %v161 = vmul.f32 %v90, %v147
  %v162 = vmul.f32 %v91, %v147
  %v163 = vmul.f32 %v92, %v147
  %v164 = vmul.f32 %v93, %v147
  %v165 = vmul.f32 %v94, %v147
  %v166 = vmul.f32 %v95, %v147
  %v167 = vmul.f32 %v96, %v147
  %v168 = vmul.f32 %v97, %v147
  %v169 = vmul.f32 %v98, %v147
  %v170 = vmul.f32 %v99, %v147
  %v171 = vmul.f32 %v100, %v147
  %v172 = vmul.f32 %v101, %v147
  %v173 = vmul.f32 %v102, %v147
  %v174 = vmul.f32 %v103, %v147
  %v175 = vmul.f32 %v104, %v147
  %v176 = vmul.f32 %v105, %v147
  %v177 = vmul.f32 %v106, %v147
  %v178 = vmul.f32 %v107, %v147
  %v179 = vmul.f32 %v108, %v147
  %v180 = vmul.f32 %v109, %v147
  %v181 = vmul.f32 %v110, %v147
  %v182 = vmul.f32 %v111, %v147
  %v183 = vmul.f32 %v112, %v147
  %v184 = vmul.f32 %v113, %v147
  %v185 = vmul.f32 %v114, %v147
  %v186 = vmul.f32 %v115, %v147
  %v187 = vmul.f32 %v116, %v147
  %v188 = vmul.f32 %v117, %v147
  %v189 = vmul.f32 %v118, %v147
  %v190 = vmul.f32 %v119, %v147
  %v191 = vmul.f32 %v120, %v147
  %v192 = vmul.f32 %v121, %v147
  %v193 = vmul.f32 %v122, %v147
  %v194 = vmul.f32 %v123, %v147
  %v195 = vmul.f32 %v124, %v147
  %v196 = vmul.f32 %v125, %v147
  %v197 = vmul.f32 %v126, %v147
  %v198 = vmul.f32 %v127, %v147
  %v199 = vmul.f32 %v128, %v147
  %v200 = vmul.f32 %v129, %v147
  %v201 = vmul.f32 %v130, %v147
  %v202 = vmul.f32 %v131, %v147
  %v203 = vmul.f32 %v132, %v147
  %v204 = vmul.f32 %v133, %v147
  %v205 = vmul.f32 %v134, %v147
  %v206 = vmul.f32 %v135, %v147
  %v207 = vmul.f32 %v136, %v147
  %v208 = vmul.f32 %v137, %v147
  %v209 = vmul.f32 %v138, %v147
  %v210 = vmul.f32 %v139, %v147
  %v211 = vmul.f32 %v140, %v147
  %v212 = vmul.f32 %v141, %v147
  %v213 = vld [vmem:[%s2] sm:$0x1]
  %v215 = vlaneseq
  %v216 = vshrl.u32 %v215, 7
  %v217 = vsub.s32 0, %v216
  %v218 = vrot.slane %v213, %v217
  %v220 = vadd.f32 %v149, %v218
  %v221 = vadd.f32 %v150, %v218
  %v222 = vadd.f32 %v151, %v218
  %v223 = vadd.f32 %v152, %v218
  %v224 = vadd.f32 %v153, %v218
  %v225 = vadd.f32 %v154, %v218
  %v226 = vadd.f32 %v155, %v218
  %v227 = vadd.f32 %v156, %v218
  %v228 = vadd.f32 %v157, %v218
  %v229 = vadd.f32 %v158, %v218
  %v230 = vadd.f32 %v159, %v218
  %v231 = vadd.f32 %v160, %v218
  %v232 = vadd.f32 %v161, %v218
  %v233 = vadd.f32 %v162, %v218
  %v234 = vadd.f32 %v163, %v218
  %v235 = vadd.f32 %v164, %v218
  %v236 = vadd.f32 %v165, %v218
  %v237 = vadd.f32 %v166, %v218
  %v238 = vadd.f32 %v167, %v218
  %v239 = vadd.f32 %v168, %v218
  %v240 = vadd.f32 %v169, %v218
  %v241 = vadd.f32 %v170, %v218
  %v242 = vadd.f32 %v171, %v218
  %v243 = vadd.f32 %v172, %v218
  %v244 = vadd.f32 %v173, %v218
  %v245 = vadd.f32 %v174, %v218
  %v246 = vadd.f32 %v175, %v218
  %v247 = vadd.f32 %v176, %v218
  %v248 = vadd.f32 %v177, %v218
  %v249 = vadd.f32 %v178, %v218
  %v250 = vadd.f32 %v179, %v218
  %v251 = vadd.f32 %v180, %v218
  %v252 = vadd.f32 %v181, %v218
  %v253 = vadd.f32 %v182, %v218
  %v254 = vadd.f32 %v183, %v218
  %v255 = vadd.f32 %v184, %v218
  %v256 = vadd.f32 %v185, %v218
  %v257 = vadd.f32 %v186, %v218
  %v258 = vadd.f32 %v187, %v218
  %v259 = vadd.f32 %v188, %v218
  %v260 = vadd.f32 %v189, %v218
  %v261 = vadd.f32 %v190, %v218
  %v262 = vadd.f32 %v191, %v218
  %v263 = vadd.f32 %v192, %v218
  %v264 = vadd.f32 %v193, %v218
  %v265 = vadd.f32 %v194, %v218
  %v266 = vadd.f32 %v195, %v218
  %v267 = vadd.f32 %v196, %v218
  %v268 = vadd.f32 %v197, %v218
  %v269 = vadd.f32 %v198, %v218
  %v270 = vadd.f32 %v199, %v218
  %v271 = vadd.f32 %v200, %v218
  %v272 = vadd.f32 %v201, %v218
  %v273 = vadd.f32 %v202, %v218
  %v274 = vadd.f32 %v203, %v218
  %v275 = vadd.f32 %v204, %v218
  %v276 = vadd.f32 %v205, %v218
  %v277 = vadd.f32 %v206, %v218
  %v278 = vadd.f32 %v207, %v218
  %v279 = vadd.f32 %v208, %v218
  %v280 = vadd.f32 %v209, %v218
  %v281 = vadd.f32 %v210, %v218
  %v282 = vadd.f32 %v211, %v218
  %v283 = vadd.f32 %v212, %v218
  %vm284 = vcmp.ge.f32.partialorder %v220, 0.0
  %vm285 = vcmp.ge.f32.partialorder %v221, 0.0
  %vm286 = vcmp.ge.f32.partialorder %v222, 0.0
  %vm287 = vcmp.ge.f32.partialorder %v223, 0.0
  %vm288 = vcmp.ge.f32.partialorder %v224, 0.0
  %vm289 = vcmp.ge.f32.partialorder %v225, 0.0
  %vm290 = vcmp.ge.f32.partialorder %v226, 0.0
  %vm291 = vcmp.ge.f32.partialorder %v227, 0.0
  %vm292 = vcmp.ge.f32.partialorder %v228, 0.0
  %vm293 = vcmp.ge.f32.partialorder %v229, 0.0
  %vm294 = vcmp.ge.f32.partialorder %v230, 0.0
  %vm295 = vcmp.ge.f32.partialorder %v231, 0.0
  %vm296 = vcmp.ge.f32.partialorder %v232, 0.0
  %vm297 = vcmp.ge.f32.partialorder %v233, 0.0
  %vm298 = vcmp.ge.f32.partialorder %v234, 0.0
  %vm299 = vcmp.ge.f32.partialorder %v235, 0.0
  %vm300 = vcmp.ge.f32.partialorder %v236, 0.0
  %vm301 = vcmp.ge.f32.partialorder %v237, 0.0
  %vm302 = vcmp.ge.f32.partialorder %v238, 0.0
  %vm303 = vcmp.ge.f32.partialorder %v239, 0.0
  %vm304 = vcmp.ge.f32.partialorder %v240, 0.0
  %vm305 = vcmp.ge.f32.partialorder %v241, 0.0
  %vm306 = vcmp.ge.f32.partialorder %v242, 0.0
  %vm307 = vcmp.ge.f32.partialorder %v243, 0.0
  %vm308 = vcmp.ge.f32.partialorder %v244, 0.0
  %vm309 = vcmp.ge.f32.partialorder %v245, 0.0
  %vm310 = vcmp.ge.f32.partialorder %v246, 0.0
  %vm311 = vcmp.ge.f32.partialorder %v247, 0.0
  %vm312 = vcmp.ge.f32.partialorder %v248, 0.0
  %vm313 = vcmp.ge.f32.partialorder %v249, 0.0
  %vm314 = vcmp.ge.f32.partialorder %v250, 0.0
  %vm315 = vcmp.ge.f32.partialorder %v251, 0.0
  %vm316 = vcmp.ge.f32.partialorder %v252, 0.0
  %vm317 = vcmp.ge.f32.partialorder %v253, 0.0
  %vm318 = vcmp.ge.f32.partialorder %v254, 0.0
  %vm319 = vcmp.ge.f32.partialorder %v255, 0.0
  %vm320 = vcmp.ge.f32.partialorder %v256, 0.0
  %vm321 = vcmp.ge.f32.partialorder %v257, 0.0
  %vm322 = vcmp.ge.f32.partialorder %v258, 0.0
  %vm323 = vcmp.ge.f32.partialorder %v259, 0.0
  %vm324 = vcmp.ge.f32.partialorder %v260, 0.0
  %vm325 = vcmp.ge.f32.partialorder %v261, 0.0
  %vm326 = vcmp.ge.f32.partialorder %v262, 0.0
  %vm327 = vcmp.ge.f32.partialorder %v263, 0.0
  %vm328 = vcmp.ge.f32.partialorder %v264, 0.0
  %vm329 = vcmp.ge.f32.partialorder %v265, 0.0
  %vm330 = vcmp.ge.f32.partialorder %v266, 0.0
  %vm331 = vcmp.ge.f32.partialorder %v267, 0.0
  %vm332 = vcmp.ge.f32.partialorder %v268, 0.0
  %vm333 = vcmp.ge.f32.partialorder %v269, 0.0
  %vm334 = vcmp.ge.f32.partialorder %v270, 0.0
  %vm335 = vcmp.ge.f32.partialorder %v271, 0.0
  %vm336 = vcmp.ge.f32.partialorder %v272, 0.0
  %vm337 = vcmp.ge.f32.partialorder %v273, 0.0
  %vm338 = vcmp.ge.f32.partialorder %v274, 0.0
  %vm339 = vcmp.ge.f32.partialorder %v275, 0.0
  %vm340 = vcmp.ge.f32.partialorder %v276, 0.0
  %vm341 = vcmp.ge.f32.partialorder %v277, 0.0
  %vm342 = vcmp.ge.f32.partialorder %v278, 0.0
  %vm343 = vcmp.ge.f32.partialorder %v279, 0.0
  %vm344 = vcmp.ge.f32.partialorder %v280, 0.0
  %vm345 = vcmp.ge.f32.partialorder %v281, 0.0
  %vm346 = vcmp.ge.f32.partialorder %v282, 0.0
  %vm347 = vcmp.ge.f32.partialorder %v283, 0.0
  %v348 = vmul.f32 %v220, 0.03
  %v349 = vmul.f32 %v221, 0.03
  %v350 = vmul.f32 %v222, 0.03
  %v351 = vmul.f32 %v223, 0.03
  %v352 = vmul.f32 %v224, 0.03
  %v353 = vmul.f32 %v225, 0.03
  %v354 = vmul.f32 %v226, 0.03
  %v355 = vmul.f32 %v227, 0.03
  %v356 = vmul.f32 %v228, 0.03
  %v357 = vmul.f32 %v229, 0.03
  %v358 = vmul.f32 %v230, 0.03
  %v359 = vmul.f32 %v231, 0.03
  %v360 = vmul.f32 %v232, 0.03
  %v361 = vmul.f32 %v233, 0.03
  %v362 = vmul.f32 %v234, 0.03
  %v363 = vmul.f32 %v235, 0.03
  %v364 = vmul.f32 %v236, 0.03
  %v365 = vmul.f32 %v237, 0.03
  %v366 = vmul.f32 %v238, 0.03
  %v367 = vmul.f32 %v239, 0.03
  %v368 = vmul.f32 %v240, 0.03
  %v369 = vmul.f32 %v241, 0.03
  %v370 = vmul.f32 %v242, 0.03
  %v371 = vmul.f32 %v243, 0.03
  %v372 = vmul.f32 %v244, 0.03
  %v373 = vmul.f32 %v245, 0.03
  %v374 = vmul.f32 %v246, 0.03
  %v375 = vmul.f32 %v247, 0.03
  %v376 = vmul.f32 %v248, 0.03
  %v377 = vmul.f32 %v249, 0.03
  %v378 = vmul.f32 %v250, 0.03
  %v379 = vmul.f32 %v251, 0.03
  %v380 = vmul.f32 %v252, 0.03
  %v381 = vmul.f32 %v253, 0.03
  %v382 = vmul.f32 %v254, 0.03
  %v383 = vmul.f32 %v255, 0.03
  %v384 = vmul.f32 %v256, 0.03
  %v385 = vmul.f32 %v257, 0.03
  %v386 = vmul.f32 %v258, 0.03
  %v387 = vmul.f32 %v259, 0.03
  %v388 = vmul.f32 %v260, 0.03
  %v389 = vmul.f32 %v261, 0.03
  %v390 = vmul.f32 %v262, 0.03
  %v391 = vmul.f32 %v263, 0.03
  %v392 = vmul.f32 %v264, 0.03
  %v393 = vmul.f32 %v265, 0.03
  %v394 = vmul.f32 %v266, 0.03
  %v395 = vmul.f32 %v267, 0.03
  %v396 = vmul.f32 %v268, 0.03
  %v397 = vmul.f32 %v269, 0.03
  %v398 = vmul.f32 %v270, 0.03
  %v399 = vmul.f32 %v271, 0.03
  %v400 = vmul.f32 %v272, 0.03
  %v401 = vmul.f32 %v273, 0.03
  %v402 = vmul.f32 %v274, 0.03
  %v403 = vmul.f32 %v275, 0.03
  %v404 = vmul.f32 %v276, 0.03
  %v405 = vmul.f32 %v277, 0.03
  %v406 = vmul.f32 %v278, 0.03
  %v407 = vmul.f32 %v279, 0.03
  %v408 = vmul.f32 %v280, 0.03
  %v409 = vmul.f32 %v281, 0.03
  %v410 = vmul.f32 %v282, 0.03
  %v411 = vmul.f32 %v283, 0.03
  %v412 = vsel %vm284, %v220, %v348
  %v413 = vsel %vm285, %v221, %v349
  %v414 = vsel %vm286, %v222, %v350
  %v415 = vsel %vm287, %v223, %v351
  %v416 = vsel %vm288, %v224, %v352
  %v417 = vsel %vm289, %v225, %v353
  %v418 = vsel %vm290, %v226, %v354
  %v419 = vsel %vm291, %v227, %v355
  %v420 = vsel %vm292, %v228, %v356
  %v421 = vsel %vm293, %v229, %v357
  %v422 = vsel %vm294, %v230, %v358
  %v423 = vsel %vm295, %v231, %v359
  %v424 = vsel %vm296, %v232, %v360
  %v425 = vsel %vm297, %v233, %v361
  %v426 = vsel %vm298, %v234, %v362
  %v427 = vsel %vm299, %v235, %v363
  %v428 = vsel %vm300, %v236, %v364
  %v429 = vsel %vm301, %v237, %v365
  %v430 = vsel %vm302, %v238, %v366
  %v431 = vsel %vm303, %v239, %v367
  %v432 = vsel %vm304, %v240, %v368
  %v433 = vsel %vm305, %v241, %v369
  %v434 = vsel %vm306, %v242, %v370
  %v435 = vsel %vm307, %v243, %v371
  %v436 = vsel %vm308, %v244, %v372
  %v437 = vsel %vm309, %v245, %v373
  %v438 = vsel %vm310, %v246, %v374
  %v439 = vsel %vm311, %v247, %v375
  %v440 = vsel %vm312, %v248, %v376
  %v441 = vsel %vm313, %v249, %v377
  %v442 = vsel %vm314, %v250, %v378
  %v443 = vsel %vm315, %v251, %v379
  %v444 = vsel %vm316, %v252, %v380
  %v445 = vsel %vm317, %v253, %v381
  %v446 = vsel %vm318, %v254, %v382
  %v447 = vsel %vm319, %v255, %v383
  %v448 = vsel %vm320, %v256, %v384
  %v449 = vsel %vm321, %v257, %v385
  %v450 = vsel %vm322, %v258, %v386
  %v451 = vsel %vm323, %v259, %v387
  %v452 = vsel %vm324, %v260, %v388
  %v453 = vsel %vm325, %v261, %v389
  %v454 = vsel %vm326, %v262, %v390
  %v455 = vsel %vm327, %v263, %v391
  %v456 = vsel %vm328, %v264, %v392
  %v457 = vsel %vm329, %v265, %v393
  %v458 = vsel %vm330, %v266, %v394
  %v459 = vsel %vm331, %v267, %v395
  %v460 = vsel %vm332, %v268, %v396
  %v461 = vsel %vm333, %v269, %v397
  %v462 = vsel %vm334, %v270, %v398
  %v463 = vsel %vm335, %v271, %v399
  %v464 = vsel %vm336, %v272, %v400
  %v465 = vsel %vm337, %v273, %v401
  %v466 = vsel %vm338, %v274, %v402
  %v467 = vsel %vm339, %v275, %v403
  %v468 = vsel %vm340, %v276, %v404
  %v469 = vsel %vm341, %v277, %v405
  %v470 = vsel %vm342, %v278, %v406
  %v471 = vsel %vm343, %v279, %v407
  %v472 = vsel %vm344, %v280, %v408
  %v473 = vsel %vm345, %v281, %v409
  %v474 = vsel %vm346, %v282, %v410
  %v475 = vsel %vm347, %v283, %v411
  %v476 = vpack.c.bf16 %v413, %v412
  %v477 = vpack.c.bf16 %v415, %v414
  %v478 = vpack.c.bf16 %v417, %v416
  %v479 = vpack.c.bf16 %v419, %v418
  %v480 = vpack.c.bf16 %v421, %v420
  %v481 = vpack.c.bf16 %v423, %v422
  %v482 = vpack.c.bf16 %v425, %v424
  %v483 = vpack.c.bf16 %v427, %v426
  %v484 = vpack.c.bf16 %v429, %v428
  %v485 = vpack.c.bf16 %v431, %v430
  %v486 = vpack.c.bf16 %v433, %v432
  %v487 = vpack.c.bf16 %v435, %v434
  %v488 = vpack.c.bf16 %v437, %v436
  %v489 = vpack.c.bf16 %v439, %v438
  %v490 = vpack.c.bf16 %v441, %v440
  %v491 = vpack.c.bf16 %v443, %v442
  %v492 = vpack.c.bf16 %v445, %v444
  %v493 = vpack.c.bf16 %v447, %v446
  %v494 = vpack.c.bf16 %v449, %v448
  %v495 = vpack.c.bf16 %v451, %v450
  %v496 = vpack.c.bf16 %v453, %v452
  %v497 = vpack.c.bf16 %v455, %v454
  %v498 = vpack.c.bf16 %v457, %v456
  %v499 = vpack.c.bf16 %v459, %v458
  %v500 = vpack.c.bf16 %v461, %v460
  %v501 = vpack.c.bf16 %v463, %v462
  %v502 = vpack.c.bf16 %v465, %v464
  %v503 = vpack.c.bf16 %v467, %v466
  %v504 = vpack.c.bf16 %v469, %v468
  %v505 = vpack.c.bf16 %v471, %v470
  %v506 = vpack.c.bf16 %v473, %v472
  %v507 = vpack.c.bf16 %v475, %v474
  %v540 = vunpack.c.l.b16 %v476
  %v541 = vunpack.c.h.b16 %v476
  %v542 = vunpack.c.l.b16 %v477
  %v543 = vunpack.c.h.b16 %v477
  %v544 = vunpack.c.l.b16 %v478
  %v545 = vunpack.c.h.b16 %v478
  %v546 = vunpack.c.l.b16 %v479
  %v547 = vunpack.c.h.b16 %v479
  %v548 = vunpack.c.l.b16 %v480
  %v549 = vunpack.c.h.b16 %v480
  %v550 = vunpack.c.l.b16 %v481
  %v551 = vunpack.c.h.b16 %v481
  %v552 = vunpack.c.l.b16 %v482
  %v553 = vunpack.c.h.b16 %v482
  %v554 = vunpack.c.l.b16 %v483
  %v555 = vunpack.c.h.b16 %v483
  %v556 = vunpack.c.l.b16 %v484
  %v557 = vunpack.c.h.b16 %v484
  %v558 = vunpack.c.l.b16 %v485
  %v559 = vunpack.c.h.b16 %v485
  %v560 = vunpack.c.l.b16 %v486
  %v561 = vunpack.c.h.b16 %v486
  %v562 = vunpack.c.l.b16 %v487
  %v563 = vunpack.c.h.b16 %v487
  %v564 = vunpack.c.l.b16 %v488
  %v565 = vunpack.c.h.b16 %v488
  %v566 = vunpack.c.l.b16 %v489
  %v567 = vunpack.c.h.b16 %v489
  %v568 = vunpack.c.l.b16 %v490
  %v569 = vunpack.c.h.b16 %v490
  %v570 = vunpack.c.l.b16 %v491
  %v571 = vunpack.c.h.b16 %v491
  %v572 = vunpack.c.l.b16 %v492
  %v573 = vunpack.c.h.b16 %v492
  %v574 = vunpack.c.l.b16 %v493
  %v575 = vunpack.c.h.b16 %v493
  %v576 = vunpack.c.l.b16 %v494
  %v577 = vunpack.c.h.b16 %v494
  %v578 = vunpack.c.l.b16 %v495
  %v579 = vunpack.c.h.b16 %v495
  %v580 = vunpack.c.l.b16 %v496
  %v581 = vunpack.c.h.b16 %v496
  %v582 = vunpack.c.l.b16 %v497
  %v583 = vunpack.c.h.b16 %v497
  %v584 = vunpack.c.l.b16 %v498
  %v585 = vunpack.c.h.b16 %v498
  %v586 = vunpack.c.l.b16 %v499
  %v587 = vunpack.c.h.b16 %v499
  %v588 = vunpack.c.l.b16 %v500
  %v589 = vunpack.c.h.b16 %v500
  %v590 = vunpack.c.l.b16 %v501
  %v591 = vunpack.c.h.b16 %v501
  %v592 = vunpack.c.l.b16 %v502
  %v593 = vunpack.c.h.b16 %v502
  %v594 = vunpack.c.l.b16 %v503
  %v595 = vunpack.c.h.b16 %v503
  %v596 = vunpack.c.l.b16 %v504
  %v597 = vunpack.c.h.b16 %v504
  %v598 = vunpack.c.l.b16 %v505
  %v599 = vunpack.c.h.b16 %v505
  %v600 = vunpack.c.l.b16 %v506
  %v601 = vunpack.c.h.b16 %v506
  %v602 = vunpack.c.l.b16 %v507
  %v603 = vunpack.c.h.b16 %v507
  %v604 = vpack.c.b16 %v540, %v540
  %v605 = vpack.c.b16 %v541, %v541
  %v606 = vpack.c.b16 %v542, %v542
  %v607 = vpack.c.b16 %v543, %v543
  %v608 = vpack.c.b16 %v544, %v544
  %v609 = vpack.c.b16 %v545, %v545
  %v610 = vpack.c.b16 %v546, %v546
  %v611 = vpack.c.b16 %v547, %v547
  %v612 = vpack.c.b16 %v548, %v548
  %v613 = vpack.c.b16 %v549, %v549
  %v614 = vpack.c.b16 %v550, %v550
  %v615 = vpack.c.b16 %v551, %v551
  %v616 = vpack.c.b16 %v552, %v552
  %v617 = vpack.c.b16 %v553, %v553
  %v618 = vpack.c.b16 %v554, %v554
  %v619 = vpack.c.b16 %v555, %v555
  %v620 = vpack.c.b16 %v556, %v556
  %v621 = vpack.c.b16 %v557, %v557
  %v622 = vpack.c.b16 %v558, %v558
  %v623 = vpack.c.b16 %v559, %v559
  %v624 = vpack.c.b16 %v560, %v560
  %v625 = vpack.c.b16 %v561, %v561
  %v626 = vpack.c.b16 %v562, %v562
  %v627 = vpack.c.b16 %v563, %v563
  %v628 = vpack.c.b16 %v564, %v564
  %v629 = vpack.c.b16 %v565, %v565
  %v630 = vpack.c.b16 %v566, %v566
  %v631 = vpack.c.b16 %v567, %v567
  %v632 = vpack.c.b16 %v568, %v568
  %v633 = vpack.c.b16 %v569, %v569
  %v634 = vpack.c.b16 %v570, %v570
  %v635 = vpack.c.b16 %v571, %v571
  %v636 = vpack.c.b16 %v572, %v572
  %v637 = vpack.c.b16 %v573, %v573
  %v638 = vpack.c.b16 %v574, %v574
  %v639 = vpack.c.b16 %v575, %v575
  %v640 = vpack.c.b16 %v576, %v576
  %v641 = vpack.c.b16 %v577, %v577
  %v642 = vpack.c.b16 %v578, %v578
  %v643 = vpack.c.b16 %v579, %v579
  %v644 = vpack.c.b16 %v580, %v580
  %v645 = vpack.c.b16 %v581, %v581
  %v646 = vpack.c.b16 %v582, %v582
  %v647 = vpack.c.b16 %v583, %v583
  %v648 = vpack.c.b16 %v584, %v584
  %v649 = vpack.c.b16 %v585, %v585
  %v650 = vpack.c.b16 %v586, %v586
  %v651 = vpack.c.b16 %v587, %v587
  %v652 = vpack.c.b16 %v588, %v588
  %v653 = vpack.c.b16 %v589, %v589
  %v654 = vpack.c.b16 %v590, %v590
  %v655 = vpack.c.b16 %v591, %v591
  %v656 = vpack.c.b16 %v592, %v592
  %v657 = vpack.c.b16 %v593, %v593
  %v658 = vpack.c.b16 %v594, %v594
  %v659 = vpack.c.b16 %v595, %v595
  %v660 = vpack.c.b16 %v596, %v596
  %v661 = vpack.c.b16 %v597, %v597
  %v662 = vpack.c.b16 %v598, %v598
  %v663 = vpack.c.b16 %v599, %v599
  %v664 = vpack.c.b16 %v600, %v600
  %v665 = vpack.c.b16 %v601, %v601
  %v666 = vpack.c.b16 %v602, %v602
  %v667 = vpack.c.b16 %v603, %v603
  %732 = vst [vmem:[%s3] sm:$0xf] %v604
  %733 = vst [vmem:[%s3 + $0x4] sm:$0xf] %v605
  %734 = vst [vmem:[%s3 + $0x8] sm:$0xf] %v606
  %735 = vst [vmem:[%s3 + $0xc] sm:$0xf] %v607
  %736 = vst [vmem:[%s3 + $0x10] sm:$0xf] %v608
  %737 = vst [vmem:[%s3 + $0x14] sm:$0xf] %v609
  %738 = vst [vmem:[%s3 + $0x18] sm:$0xf] %v610
  %739 = vst [vmem:[%s3 + $0x1c] sm:$0xf] %v611
  %740 = vst [vmem:[%s3 + $0x20] sm:$0xf] %v612
  %741 = vst [vmem:[%s3 + $0x24] sm:$0xf] %v613
  %742 = vst [vmem:[%s3 + $0x28] sm:$0xf] %v614
  %743 = vst [vmem:[%s3 + $0x2c] sm:$0xf] %v615
  %744 = vst [vmem:[%s3 + $0x30] sm:$0xf] %v616
  %745 = vst [vmem:[%s3 + $0x34] sm:$0xf] %v617
  %746 = vst [vmem:[%s3 + $0x38] sm:$0xf] %v618
  %747 = vst [vmem:[%s3 + $0x3c] sm:$0xf] %v619
  %748 = vst [vmem:[%s3 + $0x40] sm:$0xf] %v620
  %749 = vst [vmem:[%s3 + $0x44] sm:$0xf] %v621
  %750 = vst [vmem:[%s3 + $0x48] sm:$0xf] %v622
  %751 = vst [vmem:[%s3 + $0x4c] sm:$0xf] %v623
  %752 = vst [vmem:[%s3 + $0x50] sm:$0xf] %v624
  %753 = vst [vmem:[%s3 + $0x54] sm:$0xf] %v625
  %754 = vst [vmem:[%s3 + $0x58] sm:$0xf] %v626
  %755 = vst [vmem:[%s3 + $0x5c] sm:$0xf] %v627
  %756 = vst [vmem:[%s3 + $0x60] sm:$0xf] %v628
  %757 = vst [vmem:[%s3 + $0x64] sm:$0xf] %v629
  %758 = vst [vmem:[%s3 + $0x68] sm:$0xf] %v630
  %759 = vst [vmem:[%s3 + $0x6c] sm:$0xf] %v631
  %760 = vst [vmem:[%s3 + $0x70] sm:$0xf] %v632
  %761 = vst [vmem:[%s3 + $0x74] sm:$0xf] %v633
  %762 = vst [vmem:[%s3 + $0x78] sm:$0xf] %v634
  %763 = vst [vmem:[%s3 + $0x7c] sm:$0xf] %v635
  %764 = vst [vmem:[%s3 + $0x80] sm:$0xf] %v636
  %765 = vst [vmem:[%s3 + $0x84] sm:$0xf] %v637
  %766 = vst [vmem:[%s3 + $0x88] sm:$0xf] %v638
  %767 = vst [vmem:[%s3 + $0x8c] sm:$0xf] %v639
  %768 = vst [vmem:[%s3 + $0x90] sm:$0xf] %v640
  %769 = vst [vmem:[%s3 + $0x94] sm:$0xf] %v641
  %770 = vst [vmem:[%s3 + $0x98] sm:$0xf] %v642
  %771 = vst [vmem:[%s3 + $0x9c] sm:$0xf] %v643
  %772 = vst [vmem:[%s3 + $0xa0] sm:$0xf] %v644
  %773 = vst [vmem:[%s3 + $0xa4] sm:$0xf] %v645
  %774 = vst [vmem:[%s3 + $0xa8] sm:$0xf] %v646
  %775 = vst [vmem:[%s3 + $0xac] sm:$0xf] %v647
  %776 = vst [vmem:[%s3 + $0xb0] sm:$0xf] %v648
  %777 = vst [vmem:[%s3 + $0xb4] sm:$0xf] %v649
  %778 = vst [vmem:[%s3 + $0xb8] sm:$0xf] %v650
  %779 = vst [vmem:[%s3 + $0xbc] sm:$0xf] %v651
  %780 = vst [vmem:[%s3 + $0xc0] sm:$0xf] %v652
  %781 = vst [vmem:[%s3 + $0xc4] sm:$0xf] %v653
  %782 = vst [vmem:[%s3 + $0xc8] sm:$0xf] %v654
  %783 = vst [vmem:[%s3 + $0xcc] sm:$0xf] %v655
  %784 = vst [vmem:[%s3 + $0xd0] sm:$0xf] %v656
  %785 = vst [vmem:[%s3 + $0xd4] sm:$0xf] %v657
  %786 = vst [vmem:[%s3 + $0xd8] sm:$0xf] %v658
  %787 = vst [vmem:[%s3 + $0xdc] sm:$0xf] %v659
  %788 = vst [vmem:[%s3 + $0xe0] sm:$0xf] %v660
  %789 = vst [vmem:[%s3 + $0xe4] sm:$0xf] %v661
  %790 = vst [vmem:[%s3 + $0xe8] sm:$0xf] %v662
  %791 = vst [vmem:[%s3 + $0xec] sm:$0xf] %v663
  %792 = vst [vmem:[%s3 + $0xf0] sm:$0xf] %v664
  %793 = vst [vmem:[%s3 + $0xf4] sm:$0xf] %v665
  %794 = vst [vmem:[%s3 + $0xf8] sm:$0xf] %v666
  %795 = vst [vmem:[%s3 + $0xfc] sm:$0xf] %v667
  // Predicated region
  $region14: #{conv_leaky_block.3} parent=0 // pred_check
    _
  $region15: #{conv_leaky_block.3} parent=0 // pred_check_branch
    %797 = sbr.rel (0) target = $region17
  $region16: #{conv_leaky_block.3} parent=0 // pred_region
    _
  $region17: #{conv_leaky_block.3} parent=0 // pred_fallthru
    _
  // Predicated region
  $region18: #{conv_leaky_block.3} parent=0 // pred_check
    _
  $region19: #{conv_leaky_block.3} parent=0 // pred_check_branch
    %799 = sbr.rel (0) target = $region21
  $region20: #{conv_leaky_block.3} parent=0 // pred_region
    _
  $region21: #{conv_leaky_block.3} parent=0 // pred_fallthru
    _

// kernel: conv_leaky_block.2
$region0: #{conv_leaky_block.2}
  #allocation0 [shape = 'u32[]', space=smem, size = 0x4, offset = 0x4, fixed_abs, tag = 'smem constant byte address 0x4 - core index']
  #allocation1 [shape = 'u32[144,128]{1,0:T(1,128)}', space=vmem, size = 0x12000, scoped, tag = 'internal scratch']
  #allocation2 [shape = 'f32[256,128]{1,0:T(8,128)}', space=vmem, size = 0x20000, scoped, tag = 'scratch operand']
  %s0 = inlined_call_operand.vmem [shape: bf16[2,18,18,4], index: 0, kind: input, shape index: {}]
  %s1 = inlined_call_operand.vmem [shape: bf16[9,4,128], index: 1, kind: input, shape index: {}]
  %s2 = inlined_call_operand.vmem [shape: bf16[2,256,128], index: 2, kind: output, shape index: {0}]
  %s3 = inlined_call_operand.vmem [shape: f32[2,1,128], index: 3, kind: output, shape index: {1}]
  %s4 = inlined_call_operand.vmem [shape: f32[2,1,128], index: 4, kind: output, shape index: {2}]
  %5 = xla_tuple %s2, %s3, %s4
  %s6 = sld [smem:[#allocation0]]
  $region57: #{conv_leaky_block.2} parent=0
    _
  %s8 = ssub.s32 1, %s6
  %s9 = scalar_select 0, %s8, %s6
  loop: start=0, step=1, limit=4
  $region2: #{conv_leaky_block.2} parent=0 // loop_pre_header
    _
  $region3: #{conv_leaky_block.2} parent=0 // loop_header
    %s11 = sphi 0, %s15
    %p12 = scmp.ge.s32.totalorder %s11, 4
    %s21 = sphi 0, %s23
    %s24 = sphi 0, %s21
    %s25 = sphi 0, %s24
    %s41 = sphi 0, %s25
    %s45 = sphi 0, %s45
    %s47 = sphi 0, %s45
    %s48 = sphi 0, %s47
    %s62 = sphi 0, %s48
    %s68 = sphi 0, %s70
    %s71 = sphi 0, %s68
    %s72 = sphi 0, %s71
    %s88 = sphi 0, %s72
    %s94 = sphi 0, %s96
    %s97 = sphi 0, %s94
    %s98 = sphi 0, %s97
    %s114 = sphi 0, %s98
    %s120 = sphi 0, %s122
    %s123 = sphi 0, %s120
    %s124 = sphi 0, %s123
    %s140 = sphi 0, %s124
  $region4: #{conv_leaky_block.2} parent=0 // loop_header_branch
    %14 = sbr.rel (%p12) target = $region8
  $region5: #{conv_leaky_block.2} parent=0 // loop_body
    %s16 = ssub.s32 %s11, 1
    %s17 = ssub.s32 %s11, 2
    %s18 = sadd.s32 %s11, 1
    %s19 = ssub.s32 %s11, %s18
    %p20 = scmp.eq.s32.totalorder %s19, 0
    %s22 = sadd.s32 %s21, 1
    %s23 = scalar_select %p20, %s21, %s22
    %p26 = pneg %p20
    %p27 = scmp.eq.s32.totalorder %s11, 1
    %p28 = por %p26, %p27
    %p29 = scmp.ne.s32.totalorder %s21, %s24
    %p30 = scmp.eq.s32.totalorder %s11, 0
    %p31 = por %p29, %p30
    %p32 = scmp.ne.s32.totalorder %s21, %s24
    %p33 = scmp.eq.s32.totalorder %s16, 1
    %p34 = por %p32, %p33
    %p35 = scmp.ne.s32.totalorder %s24, %s25
    %p36 = scmp.eq.s32.totalorder %s16, 0
    %p37 = por %p35, %p36
    %p38 = scmp.ne.s32.totalorder %s24, %s25
    %p39 = scmp.eq.s32.totalorder %s17, 1
    %p40 = por %p38, %p39
    %p42 = scmp.ne.s32.totalorder %s25, %s41
    %p43 = scmp.eq.s32.totalorder %s17, 0
    %p44 = por %p42, %p43
    %s46 = sadd.s32 %s45, 1
    %p49 = scmp.eq.s32.totalorder %s11, 1
    %p50 = scmp.ne.s32.totalorder %s45, %s47
    %p51 = scmp.eq.s32.totalorder %s11, 0
    %p52 = por %p50, %p51
    %p53 = scmp.ne.s32.totalorder %s45, %s47
    %p54 = scmp.eq.s32.totalorder %s16, 1
    %p55 = por %p53, %p54
    %p56 = scmp.ne.s32.totalorder %s47, %s48
    %p57 = scmp.eq.s32.totalorder %s16, 0
    %p58 = por %p56, %p57
    %p59 = scmp.ne.s32.totalorder %s47, %s48
    %p60 = scmp.eq.s32.totalorder %s17, 1
    %p61 = por %p59, %p60
    %p63 = scmp.ne.s32.totalorder %s48, %s62
    %p64 = scmp.eq.s32.totalorder %s17, 0
    %p65 = por %p63, %p64
    %s66 = ssub.s32 %s11, %s18
    %p67 = scmp.eq.s32.totalorder %s66, 0
    %s69 = sadd.s32 %s68, 1
    %s70 = scalar_select %p67, %s68, %s69
    %p73 = pneg %p67
    %p74 = scmp.eq.s32.totalorder %s11, 1
    %p75 = por %p73, %p74
    %p76 = scmp.ne.s32.totalorder %s68, %s71
    %p77 = scmp.eq.s32.totalorder %s11, 0
    %p78 = por %p76, %p77
    %p79 = scmp.ne.s32.totalorder %s68, %s71
    %p80 = scmp.eq.s32.totalorder %s16, 1
    %p81 = por %p79, %p80
    %p82 = scmp.ne.s32.totalorder %s71, %s72
    %p83 = scmp.eq.s32.totalorder %s16, 0
    %p84 = por %p82, %p83
    %p85 = scmp.ne.s32.totalorder %s71, %s72
    %p86 = scmp.eq.s32.totalorder %s17, 1
    %p87 = por %p85, %p86
    %p89 = scmp.ne.s32.totalorder %s72, %s88
    %p90 = scmp.eq.s32.totalorder %s17, 0
    %p91 = por %p89, %p90
    %s92 = ssub.s32 %s11, %s18
    %p93 = scmp.eq.s32.totalorder %s92, 0
    %s95 = sadd.s32 %s94, 1
    %s96 = scalar_select %p93, %s94, %s95
    %p99 = pneg %p93
    %p100 = scmp.eq.s32.totalorder %s11, 1
    %p101 = por %p99, %p100
    %p102 = scmp.ne.s32.totalorder %s94, %s97
    %p103 = scmp.eq.s32.totalorder %s11, 0
    %p104 = por %p102, %p103
    %p105 = scmp.ne.s32.totalorder %s94, %s97
    %p106 = scmp.eq.s32.totalorder %s16, 1
    %p107 = por %p105, %p106
    %p108 = scmp.ne.s32.totalorder %s97, %s98
    %p109 = scmp.eq.s32.totalorder %s16, 0
    %p110 = por %p108, %p109
    %p111 = scmp.ne.s32.totalorder %s97, %s98
    %p112 = scmp.eq.s32.totalorder %s17, 1
    %p113 = por %p111, %p112
    %p115 = scmp.ne.s32.totalorder %s98, %s114
    %p116 = scmp.eq.s32.totalorder %s17, 0
    %p117 = por %p115, %p116
    %s118 = ssub.s32 %s11, %s18
    %p119 = scmp.eq.s32.totalorder %s118, 0
    %s121 = sadd.s32 %s120, 1
    %s122 = scalar_select %p119, %s120, %s121
    %p125 = pneg %p119
    %p126 = scmp.eq.s32.totalorder %s11, 1
    %p127 = por %p125, %p126
    %p128 = scmp.ne.s32.totalorder %s120, %s123
    %p129 = scmp.eq.s32.totalorder %s11, 0
    %p130 = por %p128, %p129
    %p131 = scmp.ne.s32.totalorder %s120, %s123
    %p132 = scmp.eq.s32.totalorder %s16, 1
    %p133 = por %p131, %p132
    %p134 = scmp.ne.s32.totalorder %s123, %s124
    %p135 = scmp.eq.s32.totalorder %s16, 0
    %p136 = por %p134, %p135
    %p137 = scmp.ne.s32.totalorder %s123, %s124
    %p138 = scmp.eq.s32.totalorder %s17, 1
    %p139 = por %p137, %p138
    %p141 = scmp.ne.s32.totalorder %s124, %s140
    %p142 = scmp.eq.s32.totalorder %s17, 0
    %p143 = por %p141, %p142
    %p144 = scmp.le.s32.totalorder 1, %s11
    %p145 = scmp.lt.s32.totalorder %s11, 3
    %p146 = pnand %p144, %p145
    %p147 = pneg %p146
    // Predicated region
    $region9: #{conv_leaky_block.2} parent=5 // pred_check
      _
    $region10: #{conv_leaky_block.2} parent=5 // pred_check_branch
      %149 = sbr.rel (%p146) target = $region12
    $region11: #{conv_leaky_block.2} parent=5 // pred_region
      %s150 = ssub.s32 %s11, 1
      // Predicated region
      $region13: #{conv_leaky_block.2} parent=11 // pred_check
        %p151 = pneg %p58
      $region14: #{conv_leaky_block.2} parent=11 // pred_check_branch
        %153 = sbr.rel (%p151) target = $region16
      $region15: #{conv_leaky_block.2} parent=11 // pred_region
        _
      $region16: #{conv_leaky_block.2} parent=11 // pred_fallthru
        _
    $region12: #{conv_leaky_block.2} parent=5 // pred_fallthru
      _
    %p154 = scmp.lt.s32.totalorder %s11, 2
    // Predicated region
    $region17: #{conv_leaky_block.2} parent=5 // pred_check
      %p155 = pneg %p154
    $region18: #{conv_leaky_block.2} parent=5 // pred_check_branch
      %157 = sbr.rel (%p155) target = $region20
    $region19: #{conv_leaky_block.2} parent=5 // pred_region
      // Predicated region
      $region21: #{conv_leaky_block.2} parent=19 // pred_check
        %p158 = pneg %p31
      $region22: #{conv_leaky_block.2} parent=19 // pred_check_branch
        %160 = sbr.rel (%p158) target = $region24
      $region23: #{conv_leaky_block.2} parent=19 // pred_region
        %p161 = scmp.lt.s32.totalorder %s11, 1
        %s162 = scalar_select %p161, %s11, 1
        %s163 = smul.addr %s162, 54
        %s164 = smul.addr %s163, 4
        %s165 = scalar_lea.vmem %s0, %s164
      $region24: #{conv_leaky_block.2} parent=19 // pred_fallthru
        _
    $region20: #{conv_leaky_block.2} parent=5 // pred_fallthru
      _
    %p166 = scmp.le.s32.totalorder 1, %s11
    %p167 = scmp.lt.s32.totalorder %s11, 3
    %p168 = pnand %p166, %p167
    %p169 = pneg %p168
    // Predicated region
    $region25: #{conv_leaky_block.2} parent=5 // pred_check
      _
    $region26: #{conv_leaky_block.2} parent=5 // pred_check_branch
      %171 = sbr.rel (%p168) target = $region28
    $region27: #{conv_leaky_block.2} parent=5 // pred_region
      %s172 = ssub.s32 %s11, 1
      %p173 = scmp.lt.s32.totalorder %s16, 1
      %s174 = scalar_select %p173, %s16, 1
      %s175 = smul.addr %s174, 54
      %s176 = smul.addr %s175, 4
      %s177 = scalar_lea.vmem %s0, %s176
      %p178 = pneg %p37
      %p179 = pneg %p34
      %p180 = pneg %p58
      %p181 = pneg %p55
      %p182 = pneg %p84
      %p183 = pneg %p81
      %p184 = scmp.lt.s32.totalorder %s16, 1
      %s185 = scalar_select %p184, %s16, 1
      %s186 = smul.addr %s185, 32
      %s187 = smul.addr %s186, 4
      %s188 = scalar_lea.vmem %s2, %s187
      %p189 = pneg %p110
      %p190 = pneg %p107
      %p191 = scmp.lt.s32.totalorder %s16, 1
      %s192 = scalar_select %p191, %s16, 1
      %s193 = scalar_lea.vmem %s3, %s192
      %p194 = pneg %p136
      %p195 = pneg %p133
      %p196 = scmp.lt.s32.totalorder %s16, 1
      %s197 = scalar_select %p196, %s16, 1
      %s198 = scalar_lea.vmem %s4, %s197
      %p199 = scmp.lt.s32.totalorder %s16, 1
      %s200 = scalar_select %p199, %s16, 1
      %s201 = smul.addr %s200, 54
      %s202 = smul.addr %s201, 4
      %s203 = scalar_lea.vmem %s0, %s202
      %p204 = scmp.lt.s32.totalorder %s16, 1
      %s205 = scalar_select %p204, %s16, 1
      %s206 = smul.addr %s205, 32
      %s207 = smul.addr %s206, 4
      %s208 = scalar_lea.vmem %s2, %s207
      %p209 = scmp.lt.s32.totalorder %s16, 1
      %s210 = scalar_select %p209, %s16, 1
      %s211 = scalar_lea.vmem %s3, %s210
      %p212 = scmp.lt.s32.totalorder %s16, 1
      %s213 = scalar_select %p212, %s16, 1
      %s214 = scalar_lea.vmem %s4, %s213
      %v216 = vld [vmem:[%s203] sm:$0xf]
      %v217 = vld [vmem:[%s203 + $0x4] sm:$0xf]
      %v218 = vld [vmem:[%s203 + $0x8] sm:$0x1]
      %v219 = vld [vmem:[%s203 + $0xc] sm:$0xf]
      %v220 = vld [vmem:[%s203 + $0x10] sm:$0xf]
      %v221 = vld [vmem:[%s203 + $0x14] sm:$0x1]
      %v222 = vld [vmem:[%s203 + $0x18] sm:$0xf]
      %v223 = vld [vmem:[%s203 + $0x1c] sm:$0xf]
      %v224 = vld [vmem:[%s203 + $0x20] sm:$0x1]
      %v225 = vld [vmem:[%s203 + $0x24] sm:$0xf]
      %v226 = vld [vmem:[%s203 + $0x28] sm:$0xf]
      %v227 = vld [vmem:[%s203 + $0x2c] sm:$0x1]
      %v228 = vld [vmem:[%s203 + $0x30] sm:$0xf]
      %v229 = vld [vmem:[%s203 + $0x34] sm:$0xf]
      %v230 = vld [vmem:[%s203 + $0x38] sm:$0x1]
      %v231 = vld [vmem:[%s203 + $0x3c] sm:$0xf]
      %v232 = vld [vmem:[%s203 + $0x40] sm:$0xf]
      %v233 = vld [vmem:[%s203 + $0x44] sm:$0x1]
      %v234 = vld [vmem:[%s203 + $0x48] sm:$0xf]
      %v235 = vld [vmem:[%s203 + $0x4c] sm:$0xf]
      %v236 = vld [vmem:[%s203 + $0x50] sm:$0x1]
      %v237 = vld [vmem:[%s203 + $0x54] sm:$0xf]
      %v238 = vld [vmem:[%s203 + $0x58] sm:$0xf]
      %v239 = vld [vmem:[%s203 + $0x5c] sm:$0x1]
      %v240 = vld [vmem:[%s203 + $0x60] sm:$0xf]
      %v241 = vld [vmem:[%s203 + $0x64] sm:$0xf]
      %v242 = vld [vmem:[%s203 + $0x68] sm:$0x1]
      %v243 = vld [vmem:[%s203 + $0x6c] sm:$0xf]
      %v244 = vld [vmem:[%s203 + $0x70] sm:$0xf]
      %v245 = vld [vmem:[%s203 + $0x74] sm:$0x1]
      %v246 = vld [vmem:[%s203 + $0x78] sm:$0xf]
      %v247 = vld [vmem:[%s203 + $0x7c] sm:$0xf]
      %v248 = vld [vmem:[%s203 + $0x80] sm:$0x1]
      %v249 = vld [vmem:[%s203 + $0x84] sm:$0xf]
      %v250 = vld [vmem:[%s203 + $0x88] sm:$0xf]
      %v251 = vld [vmem:[%s203 + $0x8c] sm:$0x1]
      %v252 = vld [vmem:[%s203 + $0x90] sm:$0xf]
      %v253 = vld [vmem:[%s203 + $0x94] sm:$0xf]
      %v254 = vld [vmem:[%s203 + $0x98] sm:$0x1]
      %v255 = vld [vmem:[%s203 + $0x9c] sm:$0xf]
      %v256 = vld [vmem:[%s203 + $0xa0] sm:$0xf]
      %v257 = vld [vmem:[%s203 + $0xa4] sm:$0x1]
      %v258 = vld [vmem:[%s203 + $0xa8] sm:$0xf]
      %v259 = vld [vmem:[%s203 + $0xac] sm:$0xf]
      %v260 = vld [vmem:[%s203 + $0xb0] sm:$0x1]
      %v261 = vld [vmem:[%s203 + $0xb4] sm:$0xf]
      %v262 = vld [vmem:[%s203 + $0xb8] sm:$0xf]
      %v263 = vld [vmem:[%s203 + $0xbc] sm:$0x1]
      %v264 = vld [vmem:[%s203 + $0xc0] sm:$0xf]
      %v265 = vld [vmem:[%s203 + $0xc4] sm:$0xf]
      %v266 = vld [vmem:[%s203 + $0xc8] sm:$0x1]
      %v267 = vld [vmem:[%s203 + $0xcc] sm:$0xf]
      %v268 = vld [vmem:[%s203 + $0xd0] sm:$0xf]
      %v269 = vld [vmem:[%s203 + $0xd4] sm:$0x1]
      %v270 = vld [vmem:[%s1] sm:$0x3]
      %v303 = vunpack.c.l.b16 %v216
      %v304 = vunpack.c.l.b16 %v217
      %v305 = vunpack.c.l.b16 %v219
      %v306 = vunpack.c.l.b16 %v220
      %v307 = vunpack.c.l.b16 %v222
      %v308 = vunpack.c.l.b16 %v223
      %v309 = vunpack.c.l.b16 %v225
      %v310 = vunpack.c.l.b16 %v226
      %v311 = vunpack.c.l.b16 %v228
      %v312 = vunpack.c.l.b16 %v229
      %v313 = vunpack.c.l.b16 %v231
      %v314 = vunpack.c.l.b16 %v232
      %v315 = vunpack.c.l.b16 %v234
      %v316 = vunpack.c.l.b16 %v235
      %v317 = vunpack.c.l.b16 %v237
      %v318 = vunpack.c.l.b16 %v238
      %v319 = vunpack.c.l.b16 %v240
      %v320 = vunpack.c.l.b16 %v241
      %v321 = vunpack.c.l.b16 %v243
      %v322 = vunpack.c.l.b16 %v244
      %v323 = vunpack.c.l.b16 %v246
      %v324 = vunpack.c.l.b16 %v247
      %v325 = vunpack.c.l.b16 %v249
      %v326 = vunpack.c.l.b16 %v250
      %v327 = vunpack.c.l.b16 %v252
      %v328 = vunpack.c.l.b16 %v253
      %v329 = vunpack.c.l.b16 %v255
      %v330 = vunpack.c.l.b16 %v256
      %v331 = vunpack.c.l.b16 %v258
      %v332 = vunpack.c.l.b16 %v259
      %v333 = vunpack.c.l.b16 %v261
      %v334 = vunpack.c.l.b16 %v262
      %v335 = vpack.c.b16 %v304, %v303
      %v336 = vpack.c.b16 %v306, %v305
      %v337 = vpack.c.b16 %v308, %v307
      %v338 = vpack.c.b16 %v310, %v309
      %v339 = vpack.c.b16 %v312, %v311
      %v340 = vpack.c.b16 %v314, %v313
      %v341 = vpack.c.b16 %v316, %v315
      %v342 = vpack.c.b16 %v318, %v317
      %v343 = vpack.c.b16 %v320, %v319
      %v344 = vpack.c.b16 %v322, %v321
      %v345 = vpack.c.b16 %v324, %v323
      %v346 = vpack.c.b16 %v326, %v325
      %v347 = vpack.c.b16 %v328, %v327
      %v348 = vpack.c.b16 %v330, %v329
      %v349 = vpack.c.b16 %v332, %v331
      %v350 = vpack.c.b16 %v334, %v333
      %vm351 = vcmask 31744
      %v353 = vsel %vm351, %v335, 0
      %v356 = vsel %vm351, %v336, 0
      %v359 = vsel %vm351, %v337, 0
      %v362 = vsel %vm351, %v338, 0
      %v365 = vsel %vm351, %v339, 0
      %v368 = vsel %vm351, %v340, 0
      %v371 = vsel %vm351, %v341, 0
      %v374 = vsel %vm351, %v342, 0
      %v377 = vsel %vm351, %v343, 0
      %v380 = vsel %vm351, %v344, 0
      %v383 = vsel %vm351, %v345, 0
      %v386 = vsel %vm351, %v346, 0
      %v389 = vsel %vm351, %v347, 0
      %v392 = vsel %vm351, %v348, 0
      %v395 = vsel %vm351, %v349, 0
      %v398 = vsel %vm351, %v350, 0
      %vm400 = vcmask 1041408
      %v402 = vsel %vm400, %v270, 0
      %404 = vmatprep.subr.bf16.mxu0 0
      %405 = vmatpush1.bf16.msra.mxu0 %v402
      %406 = vmatprep.subr.bf16.mxu0 0
      %407 = vmatpush1.bf16.msra.mxu0 0
      %408 = vmatprep.subr.bf16.mxu0 0
      %409 = vmatpush1.bf16.msra.mxu0 0
      %410 = vmatprep.subr.bf16.mxu0 0
      %411 = vmatpush1.bf16.msra.mxu0 0
      %412 = vmatprep.subr.bf16.mxu0 0
      %413 = vmatpush1.bf16.msra.mxu0 0
      %414 = vmatprep.subr.bf16.mxu0 0
      %415 = vmatpush1.bf16.msra.mxu0 0
      %416 = vmatprep.subr.bf16.mxu0 0
      %417 = vmatpush1.bf16.msra.mxu0 0
      %418 = vmatprep.subr.bf16.mxu0 0
      %419 = vmatpush1.bf16.msra.mxu0 0
      %420 = vmatprep.subr.bf16.mxu0 0
      %421 = vmatpush1.bf16.msra.mxu0 0
      %422 = vmatprep.subr.bf16.mxu0 0
      %423 = vmatpush1.bf16.msra.mxu0 0
      %424 = vmatprep.subr.bf16.mxu0 0
      %425 = vmatpush1.bf16.msra.mxu0 0
      %426 = vmatprep.subr.bf16.mxu0 0
      %427 = vmatpush1.bf16.msra.mxu0 0
      %428 = vmatprep.subr.bf16.mxu0 0
      %429 = vmatpush1.bf16.msra.mxu0 0
      %430 = vmatprep.subr.bf16.mxu0 0
      %431 = vmatpush1.bf16.msra.mxu0 0
      %432 = vmatprep.subr.bf16.mxu0 0
      %433 = vmatpush1.bf16.msra.mxu0 0
      %434 = vmatprep.subr.bf16.mxu0 0
      %435 = vmatpush1.bf16.msra.mxu0 0
      %436 = vmatprep.mubr.bf16.mxu0 0
      %437 = vmatmul.mubr.bf16.gmra.mrb[0].mxu0 %v353
      %v438 = vpop.f32.mrb[0].mxu0
      %v439 = vadd.f32 0.0, %v438
      %v440 = vpop.f32.mrb[0].mxu0
      %v441 = vpop.f32.mrb[0].mxu0
      %v442 = vadd.f32 0.0, %v441
      %v443 = vpop.f32.mrb[0].mxu0
      %444 = vmatprep.mubr.bf16.mxu0 0
      %445 = vmatmul.mubr.bf16.gmra.mrb[0].mxu0 %v356
      %v446 = vpop.f32.mrb[0].mxu0
      %v447 = vadd.f32 0.0, %v446
      %v448 = vpop.f32.mrb[0].mxu0
      %v449 = vpop.f32.mrb[0].mxu0
      %v450 = vadd.f32 0.0, %v449
      %v451 = vpop.f32.mrb[0].mxu0
      %452 = vmatprep.mubr.bf16.mxu0 0
      %453 = vmatmul.mubr.bf16.gmra.mrb[0].mxu0 %v359
      %v454 = vpop.f32.mrb[0].mxu0
      %v455 = vadd.f32 0.0, %v454
      %v456 = vpop.f32.mrb[0].mxu0
      %v457 = vpop.f32.mrb[0].mxu0
      %v458 = vadd.f32 0.0, %v457
      %v459 = vpop.f32.mrb[0].mxu0
      %460 = vmatprep.mubr.bf16.mxu0 0
      %461 = vmatmul.mubr.bf16.gmra.mrb[0].mxu0 %v362
      %v462 = vpop.f32.mrb[0].mxu0
      %v463 = vadd.f32 0.0, %v462
      %v464 = vpop.f32.mrb[0].mxu0
      %v465 = vpop.f32.mrb[0].mxu0
      %v466 = vadd.f32 0.0, %v465
      %v467 = vpop.f32.mrb[0].mxu0
      %468 = vmatprep.mubr.bf16.mxu0 0
      %469 = vmatmul.mubr.bf16.gmra.mrb[0].mxu0 %v365
      %v470 = vpop.f32.mrb[0].mxu0
      %v471 = vadd.f32 0.0, %v470
      %v472 = vpop.f32.mrb[0].mxu0
      %v473 = vpop.f32.mrb[0].mxu0
      %v474 = vadd.f32 0.0, %v473
      %v475 = vpop.f32.mrb[0].mxu0
      %476 = vmatprep.mubr.bf16.mxu0 0
      %477 = vmatmul.mubr.bf16.gmra.mrb[0].mxu0 %v368
      %v478 = vpop.f32.mrb[0].mxu0
      %v479 = vadd.f32 0.0, %v478
      %v480 = vpop.f32.mrb[0].mxu0
      %v481 = vpop.f32.mrb[0].mxu0
      %v482 = vadd.f32 0.0, %v481
      %v483 = vpop.f32.mrb[0].mxu0
      %484 = vmatprep.mubr.bf16.mxu0 0
      %485 = vmatmul.mubr.bf16.gmra.mrb[0].mxu0 %v371
      %v486 = vpop.f32.mrb[0].mxu0
      %v487 = vadd.f32 0.0, %v486
      %v488 = vpop.f32.mrb[0].mxu0
      %v489 = vpop.f32.mrb[0].mxu0
      %v490 = vadd.f32 0.0, %v489
      %v491 = vpop.f32.mrb[0].mxu0
      %492 = vmatprep.mubr.bf16.mxu0 0
      %493 = vmatmul.mubr.bf16.gmra.mrb[0].mxu0 %v374
      %v494 = vpop.f32.mrb[0].mxu0
      %v495 = vadd.f32 0.0, %v494
      %v496 = vpop.f32.mrb[0].mxu0
      %v497 = vpop.f32.mrb[0].mxu0
      %v498 = vadd.f32 0.0, %v497
      %v499 = vpop.f32.mrb[0].mxu0
      %500 = vmatprep.mubr.bf16.mxu0 0
      %501 = vmatmul.mubr.bf16.gmra.mrb[0].mxu0 %v377
      %v502 = vpop.f32.mrb[0].mxu0
      %v503 = vadd.f32 0.0, %v502
      %v504 = vpop.f32.mrb[0].mxu0
      %v505 = vpop.f32.mrb[0].mxu0
      %v506 = vadd.f32 0.0, %v505
      %v507 = vpop.f32.mrb[0].mxu0
      %508 = vmatprep.mubr.bf16.mxu0 0
      %509 = vmatmul.mubr.bf16.gmra.mrb[0].mxu0 %v380
      %v510 = vpop.f32.mrb[0].mxu0
      %v511 = vadd.f32 0.0, %v510
      %v512 = vpop.f32.mrb[0].mxu0
      %v513 = vpop.f32.mrb[0].mxu0
      %v514 = vadd.f32 0.0, %v513
      %v515 = vpop.f32.mrb[0].mxu0
      %516 = vmatprep.mubr.bf16.mxu0 0
      %517 = vmatmul.mubr.bf16.gmra.mrb[0].mxu0 %v383
      %v518 = vpop.f32.mrb[0].mxu0
      %v519 = vadd.f32 0.0, %v518
      %v520 = vpop.f32.mrb[0].mxu0
      %v521 = vpop.f32.mrb[0].mxu0
      %v522 = vadd.f32 0.0, %v521
      %v523 = vpop.f32.mrb[0].mxu0
      %524 = vmatprep.mubr.bf16.mxu0 0
      %525 = vmatmul.mubr.bf16.gmra.mrb[0].mxu0 %v386
      %v526 = vpop.f32.mrb[0].mxu0
      %v527 = vadd.f32 0.0, %v526
      %v528 = vpop.f32.mrb[0].mxu0
      %v529 = vpop.f32.mrb[0].mxu0
      %v530 = vadd.f32 0.0, %v529
      %v531 = vpop.f32.mrb[0].mxu0
      %532 = vmatprep.mubr.bf16.mxu0 0
      %533 = vmatmul.mubr.bf16.gmra.mrb[0].mxu0 %v389
      %v534 = vpop.f32.mrb[0].mxu0
      %v535 = vadd.f32 0.0, %v534
      %v536 = vpop.f32.mrb[0].mxu0
      %v537 = vpop.f32.mrb[0].mxu0
      %v538 = vadd.f32 0.0, %v537
      %v539 = vpop.f32.mrb[0].mxu0
      %540 = vmatprep.mubr.bf16.mxu0 0
      %541 = vmatmul.mubr.bf16.gmra.mrb[0].mxu0 %v392
      %v542 = vpop.f32.mrb[0].mxu0
      %v543 = vadd.f32 0.0, %v542
      %v544 = vpop.f32.mrb[0].mxu0
      %v545 = vpop.f32.mrb[0].mxu0
      %v546 = vadd.f32 0.0, %v545
      %v547 = vpop.f32.mrb[0].mxu0
      %548 = vmatprep.mubr.bf16.mxu0 0
      %549 = vmatmul.mubr.bf16.gmra.mrb[0].mxu0 %v395
      %v550 = vpop.f32.mrb[0].mxu0
      %v551 = vadd.f32 0.0, %v550
      %v552 = vpop.f32.mrb[0].mxu0
      %v553 = vpop.f32.mrb[0].mxu0
      %v554 = vadd.f32 0.0, %v553
      %v555 = vpop.f32.mrb[0].mxu0
      %556 = vmatprep.mubr.bf16.mxu0 0
      %557 = vmatmul.mubr.bf16.gmra.mrb[0].mxu0 %v398
      %v558 = vpop.f32.mrb[0].mxu0
      %v559 = vadd.f32 0.0, %v558
      %v560 = vpop.f32.mrb[0].mxu0
      %v561 = vpop.f32.mrb[0].mxu0
      %v562 = vadd.f32 0.0, %v561
      %v563 = vpop.f32.mrb[0].mxu0
      %564 = vdwg.mxu0
      %565 = vst [vmem:[#allocation2] sm:$0xff] %v439
      %566 = vst [vmem:[#allocation2 + $0x8] sm:$0xff] %v442
      %567 = vst [vmem:[#allocation2 + $0x10] sm:$0xff] %v447
      %568 = vst [vmem:[#allocation2 + $0x18] sm:$0xff] %v450
      %569 = vst [vmem:[#allocation2 + $0x20] sm:$0xff] %v455
      %570 = vst [vmem:[#allocation2 + $0x28] sm:$0xff] %v458
      %571 = vst [vmem:[#allocation2 + $0x30] sm:$0xff] %v463
      %572 = vst [vmem:[#allocation2 + $0x38] sm:$0xff] %v466
      %573 = vst [vmem:[#allocation2 + $0x40] sm:$0xff] %v471
      %574 = vst [vmem:[#allocation2 + $0x48] sm:$0xff] %v474
      %575 = vst [vmem:[#allocation2 + $0x50] sm:$0xff] %v479
      %576 = vst [vmem:[#allocation2 + $0x58] sm:$0xff] %v482
      %577 = vst [vmem:[#allocation2 + $0x60] sm:$0xff] %v487
      %578 = vst [vmem:[#allocation2 + $0x68] sm:$0xff] %v490
      %579 = vst [vmem:[#allocation2 + $0x70] sm:$0xff] %v495
      %580 = vst [vmem:[#allocation2 + $0x78] sm:$0xff] %v498
      %581 = vst [vmem:[#allocation2 + $0x80] sm:$0xff] %v503
      %582 = vst [vmem:[#allocation2 + $0x88] sm:$0xff] %v506
      %583 = vst [vmem:[#allocation2 + $0x90] sm:$0xff] %v511
      %584 = vst [vmem:[#allocation2 + $0x98] sm:$0xff] %v514
      %585 = vst [vmem:[#allocation2 + $0xa0] sm:$0xff] %v519
      %586 = vst [vmem:[#allocation2 + $0xa8] sm:$0xff] %v522
      %587 = vst [vmem:[#allocation2 + $0xb0] sm:$0xff] %v527
      %588 = vst [vmem:[#allocation2 + $0xb8] sm:$0xff] %v530
      %589 = vst [vmem:[#allocation2 + $0xc0] sm:$0xff] %v535
      %590 = vst [vmem:[#allocation2 + $0xc8] sm:$0xff] %v538
      %591 = vst [vmem:[#allocation2 + $0xd0] sm:$0xff] %v543
      %592 = vst [vmem:[#allocation2 + $0xd8] sm:$0xff] %v546
      %593 = vst [vmem:[#allocation2 + $0xe0] sm:$0xff] %v551
      %594 = vst [vmem:[#allocation2 + $0xe8] sm:$0xff] %v554
      %595 = vst [vmem:[#allocation2 + $0xf0] sm:$0xff] %v559
      %596 = vst [vmem:[#allocation2 + $0xf8] sm:$0xff] %v562
      %vm597 = vsmask.f32 3328
      %vm598 = vsmask.f32 7440
      %vm599 = vmor %vm597, %vm598
      %v601 = vshrl.u32 %v216, 16
      %v603 = vrot.slane %v601, 4
      %v604 = vshll.u32 %v216, 16
      %v606 = vrot.slane %v604, 5
      %v607 = vor.u32 %v603, %v606
      %v608 = vrot.slane %v607, 4
      %v610 = vshll.u32 %v217, 16
      %v612 = vrot.slane %v610, 5
      %v613 = vsel %vm599, %v608, %v612
      %v614 = vshrl.u32 %v217, 16
      %v616 = vrot.slane %v614, 4
      %v617 = vor.u32 %v616, %v612
      %v618 = vrot.slane %v617, 4
      %v620 = vshll.u32 %v218, 16
      %v622 = vrot.slane %v620, 5
      %v623 = vsel %vm599, %v618, %v622
      %v625 = vshrl.u32 %v219, 16
      %v627 = vrot.slane %v625, 4
      %v628 = vshll.u32 %v219, 16
      %v630 = vrot.slane %v628, 5
      %v631 = vor.u32 %v627, %v630
      %v632 = vrot.slane %v631, 4
      %v634 = vshll.u32 %v220, 16
      %v636 = vrot.slane %v634, 5
      %v637 = vsel %vm599, %v632, %v636
      %v638 = vshrl.u32 %v220, 16
      %v640 = vrot.slane %v638, 4
      %v641 = vor.u32 %v640, %v636
      %v642 = vrot.slane %v641, 4
      %v644 = vshll.u32 %v221, 16
      %v646 = vrot.slane %v644, 5
      %v647 = vsel %vm599, %v642, %v646
      %v649 = vshrl.u32 %v222, 16
      %v651 = vrot.slane %v649, 4
      %v652 = vshll.u32 %v222, 16
      %v654 = vrot.slane %v652, 5
      %v655 = vor.u32 %v651, %v654
      %v656 = vrot.slane %v655, 4
      %v658 = vshll.u32 %v223, 16
      %v660 = vrot.slane %v658, 5
      %v661 = vsel %vm599, %v656, %v660
      %v662 = vshrl.u32 %v223, 16
      %v664 = vrot.slane %v662, 4
      %v665 = vor.u32 %v664, %v660
      %v666 = vrot.slane %v665, 4
      %v668 = vshll.u32 %v224, 16
      %v670 = vrot.slane %v668, 5
      %v671 = vsel %vm599, %v666, %v670
      %v673 = vshrl.u32 %v225, 16
      %v675 = vrot.slane %v673, 4
      %v676 = vshll.u32 %v225, 16
      %v678 = vrot.slane %v676, 5
      %v679 = vor.u32 %v675, %v678
      %v680 = vrot.slane %v679, 4
      %v682 = vshll.u32 %v226, 16
      %v684 = vrot.slane %v682, 5
      %v685 = vsel %vm599, %v680, %v684
      %v686 = vshrl.u32 %v226, 16
      %v688 = vrot.slane %v686, 4
      %v689 = vor.u32 %v688, %v684
      %v690 = vrot.slane %v689, 4
      %v692 = vshll.u32 %v227, 16
      %v694 = vrot.slane %v692, 5
      %v695 = vsel %vm599, %v690, %v694
      %v697 = vshrl.u32 %v228, 16
      %v699 = vrot.slane %v697, 4
      %v700 = vshll.u32 %v228, 16
      %v702 = vrot.slane %v700, 5
      %v703 = vor.u32 %v699, %v702
      %v704 = vrot.slane %v703, 4
      %v706 = vshll.u32 %v229, 16
      %v708 = vrot.slane %v706, 5
      %v709 = vsel %vm599, %v704, %v708
      %v710 = vshrl.u32 %v229, 16
      %v712 = vrot.slane %v710, 4
      %v713 = vor.u32 %v712, %v708
      %v714 = vrot.slane %v713, 4
      %v716 = vshll.u32 %v230, 16
      %v718 = vrot.slane %v716, 5
      %v719 = vsel %vm599, %v714, %v718
      %v721 = vshrl.u32 %v231, 16
      %v723 = vrot.slane %v721, 4
      %v724 = vshll.u32 %v231, 16
      %v726 = vrot.slane %v724, 5
      %v727 = vor.u32 %v723, %v726
      %v728 = vrot.slane %v727, 4
      %v730 = vshll.u32 %v232, 16
      %v732 = vrot.slane %v730, 5
      %v733 = vsel %vm599, %v728, %v732
      %v734 = vshrl.u32 %v232, 16
      %v736 = vrot.slane %v734, 4
      %v737 = vor.u32 %v736, %v732
      %v738 = vrot.slane %v737, 4
      %v740 = vshll.u32 %v233, 16
      %v742 = vrot.slane %v740, 5
      %v743 = vsel %vm599, %v738, %v742
      %v745 = vshrl.u32 %v234, 16
      %v747 = vrot.slane %v745, 4
      %v748 = vshll.u32 %v234, 16
      %v750 = vrot.slane %v748, 5
      %v751 = vor.u32 %v747, %v750
      %v752 = vrot.slane %v751, 4
      %v754 = vshll.u32 %v235, 16
      %v756 = vrot.slane %v754, 5
      %v757 = vsel %vm599, %v752, %v756
      %v758 = vshrl.u32 %v235, 16
      %v760 = vrot.slane %v758, 4
      %v761 = vor.u32 %v760, %v756
      %v762 = vrot.slane %v761, 4
      %v764 = vshll.u32 %v236, 16
      %v766 = vrot.slane %v764, 5
      %v767 = vsel %vm599, %v762, %v766
      %v769 = vshrl.u32 %v237, 16
      %v771 = vrot.slane %v769, 4
      %v772 = vshll.u32 %v237, 16
      %v774 = vrot.slane %v772, 5
      %v775 = vor.u32 %v771, %v774
      %v776 = vrot.slane %v775, 4
      %v778 = vshll.u32 %v238, 16
      %v780 = vrot.slane %v778, 5
      %v781 = vsel %vm599, %v776, %v780
      %v782 = vshrl.u32 %v238, 16
      %v784 = vrot.slane %v782, 4
      %v785 = vor.u32 %v784, %v780
      %v786 = vrot.slane %v785, 4
      %v788 = vshll.u32 %v239, 16
      %v790 = vrot.slane %v788, 5
      %v791 = vsel %vm599, %v786, %v790
      %v793 = vshrl.u32 %v240, 16
      %v795 = vrot.slane %v793, 4
      %v796 = vshll.u32 %v240, 16
      %v798 = vrot.slane %v796, 5
      %v799 = vor.u32 %v795, %v798
      %v800 = vrot.slane %v799, 4
      %v802 = vshll.u32 %v241, 16
      %v804 = vrot.slane %v802, 5
      %v805 = vsel %vm599, %v800, %v804
      %v806 = vshrl.u32 %v241, 16
      %v808 = vrot.slane %v806, 4
      %v809 = vor.u32 %v808, %v804
      %v810 = vrot.slane %v809, 4
      %v812 = vshll.u32 %v242, 16
      %v814 = vrot.slane %v812, 5
      %v815 = vsel %vm599, %v810, %v814
      %v817 = vshrl.u32 %v243, 16
      %v819 = vrot.slane %v817, 4
      %v820 = vshll.u32 %v243, 16
      %v822 = vrot.slane %v820, 5
      %v823 = vor.u32 %v819, %v822
      %v824 = vrot.slane %v823, 4
      %v826 = vshll.u32 %v244, 16
      %v828 = vrot.slane %v826, 5
      %v829 = vsel %vm599, %v824, %v828
      %v830 = vshrl.u32 %v244, 16
      %v832 = vrot.slane %v830, 4
      %v833 = vor.u32 %v832, %v828
      %v834 = vrot.slane %v833, 4
      %v836 = vshll.u32 %v245, 16
      %v838 = vrot.slane %v836, 5
      %v839 = vsel %vm599, %v834, %v838
      %v841 = vshrl.u32 %v246, 16
      %v843 = vrot.slane %v841, 4
      %v844 = vshll.u32 %v246, 16
      %v846 = vrot.slane %v844, 5
      %v847 = vor.u32 %v843, %v846
      %v848 = vrot.slane %v847, 4
      %v850 = vshll.u32 %v247, 16
      %v852 = vrot.slane %v850, 5
      %v853 = vsel %vm599, %v848, %v852
      %v854 = vshrl.u32 %v247, 16
      %v856 = vrot.slane %v854, 4
      %v857 = vor.u32 %v856, %v852
      %v858 = vrot.slane %v857, 4
      %v860 = vshll.u32 %v248, 16
      %v862 = vrot.slane %v860, 5
      %v863 = vsel %vm599, %v858, %v862
      %v865 = vshrl.u32 %v249, 16
      %v867 = vrot.slane %v865, 4
      %v868 = vshll.u32 %v249, 16
      %v870 = vrot.slane %v868, 5
      %v871 = vor.u32 %v867, %v870
      %v872 = vrot.slane %v871, 4
      %v874 = vshll.u32 %v250, 16
      %v876 = vrot.slane %v874, 5
      %v877 = vsel %vm599, %v872, %v876
      %v878 = vshrl.u32 %v250, 16
      %v880 = vrot.slane %v878, 4
      %v881 = vor.u32 %v880, %v876
      %v882 = vrot.slane %v881, 4
      %v884 = vshll.u32 %v251, 16
      %v886 = vrot.slane %v884, 5
      %v887 = vsel %vm599, %v882, %v886
      %v889 = vshrl.u32 %v252, 16
      %v891 = vrot.slane %v889, 4
      %v892 = vshll.u32 %v252, 16
      %v894 = vrot.slane %v892, 5
      %v895 = vor.u32 %v891, %v894
      %v896 = vrot.slane %v895, 4
      %v898 = vshll.u32 %v253, 16
      %v900 = vrot.slane %v898, 5
      %v901 = vsel %vm599, %v896, %v900
      %v902 = vshrl.u32 %v253, 16
      %v904 = vrot.slane %v902, 4
      %v905 = vor.u32 %v904, %v900
      %v906 = vrot.slane %v905, 4
      %v908 = vshll.u32 %v254, 16
      %v910 = vrot.slane %v908, 5
      %v911 = vsel %vm599, %v906, %v910
      %v913 = vshrl.u32 %v255, 16
      %v915 = vrot.slane %v913, 4
      %v916 = vshll.u32 %v255, 16
      %v918 = vrot.slane %v916, 5
      %v919 = vor.u32 %v915, %v918
      %v920 = vrot.slane %v919, 4
      %v922 = vshll.u32 %v256, 16
      %v924 = vrot.slane %v922, 5
      %v925 = vsel %vm599, %v920, %v924
      %v926 = vshrl.u32 %v256, 16
      %v928 = vrot.slane %v926, 4
      %v929 = vor.u32 %v928, %v924
      %v930 = vrot.slane %v929, 4
      %v932 = vshll.u32 %v257, 16
      %v934 = vrot.slane %v932, 5
      %v935 = vsel %vm599, %v930, %v934
      %v937 = vshrl.u32 %v258, 16
      %v939 = vrot.slane %v937, 4
      %v940 = vshll.u32 %v258, 16
      %v942 = vrot.slane %v940, 5
      %v943 = vor.u32 %v939, %v942
      %v944 = vrot.slane %v943, 4
      %v946 = vshll.u32 %v259, 16
      %v948 = vrot.slane %v946, 5
      %v949 = vsel %vm599, %v944, %v948
      %v950 = vshrl.u32 %v259, 16
      %v952 = vrot.slane %v950, 4
      %v953 = vor.u32 %v952, %v948
      %v954 = vrot.slane %v953, 4
      %v956 = vshll.u32 %v260, 16
      %v958 = vrot.slane %v956, 5
      %v959 = vsel %vm599, %v954, %v958
      %v961 = vshrl.u32 %v261, 16
      %v963 = vrot.slane %v961, 4
      %v964 = vshll.u32 %v261, 16
      %v966 = vrot.slane %v964, 5
      %v967 = vor.u32 %v963, %v966
      %v968 = vrot.slane %v967, 4
      %v970 = vshll.u32 %v262, 16
      %v972 = vrot.slane %v970, 5
      %v973 = vsel %vm599, %v968, %v972
      %v974 = vshrl.u32 %v262, 16
      %v976 = vrot.slane %v974, 4
      %v977 = vor.u32 %v976, %v972
      %v978 = vrot.slane %v977, 4
      %v980 = vshll.u32 %v263, 16
      %v982 = vrot.slane %v980, 5
      %v983 = vsel %vm599, %v978, %v982
      %s984 = scalar_lea.vmem %s1, 2
      %v985 = vld [vmem:[%s984] sm:$0x3]
      %v986 = vunpack.c.l.b16 %v613
      %v987 = vunpack.c.l.b16 %v623
      %v988 = vunpack.c.l.b16 %v637
      %v989 = vunpack.c.l.b16 %v647
      %v990 = vunpack.c.l.b16 %v661
      %v991 = vunpack.c.l.b16 %v671
      %v992 = vunpack.c.l.b16 %v685
      %v993 = vunpack.c.l.b16 %v695
      %v994 = vunpack.c.l.b16 %v709
      %v995 = vunpack.c.l.b16 %v719
      %v996 = vunpack.c.l.b16 %v733
      %v997 = vunpack.c.l.b16 %v743
      %v998 = vunpack.c.l.b16 %v757
      %v999 = vunpack.c.l.b16 %v767
      %v1000 = vunpack.c.l.b16 %v781
      %v1001 = vunpack.c.l.b16 %v791
      %v1002 = vunpack.c.l.b16 %v805
      %v1003 = vunpack.c.l.b16 %v815
      %v1004 = vunpack.c.l.b16 %v829
      %v1005 = vunpack.c.l.b16 %v839
      %v1006 = vunpack.c.l.b16 %v853
      %v1007 = vunpack.c.l.b16 %v863
      %v1008 = vunpack.c.l.b16 %v877
      %v1009 = vunpack.c.l.b16 %v887
      %v1010 = vunpack.c.l.b16 %v901
      %v1011 = vunpack.c.l.b16 %v911
      %v1012 = vunpack.c.l.b16 %v925
      %v1013 = vunpack.c.l.b16 %v935
      %v1014 = vunpack.c.l.b16 %v949
      %v1015 = vunpack.c.l.b16 %v959
      %v1016 = vunpack.c.l.b16 %v973
      %v1017 = vunpack.c.l.b16 %v983
      %v1018 = vpack.c.b16 %v987, %v986
      %v1019 = vpack.c.b16 %v989, %v988
      %v1020 = vpack.c.b16 %v991, %v990
      %v1021 = vpack.c.b16 %v993, %v992
      %v1022 = vpack.c.b16 %v995, %v994
      %v1023 = vpack.c.b16 %v997, %v996
      %v1024 = vpack.c.b16 %v999, %v998
      %v1025 = vpack.c.b16 %v1001, %v1000
      %v1026 = vpack.c.b16 %v1003, %v1002
      %v1027 = vpack.c.b16 %v1005, %v1004
      %v1028 = vpack.c.b16 %v1007, %v1006
      %v1029 = vpack.c.b16 %v1009, %v1008
      %v1030 = vpack.c.b16 %v1011, %v1010
      %v1031 = vpack.c.b16 %v1013, %v1012
      %v1032 = vpack.c.b16 %v1015, %v1014
      %v1033 = vpack.c.b16 %v1017, %v1016
      %v1035 = vsel %vm351, %v1018, 0
      %v1038 = vsel %vm351, %v1019, 0
      %v1041 = vsel %vm351, %v1020, 0
      %v1044 = vsel %vm351, %v1021, 0
      %v1047 = vsel %vm351, %v1022, 0
      %v1050 = vsel %vm351, %v1023, 0
      %v1053 = vsel %vm351, %v1024, 0
      %v1056 = vsel %vm351, %v1025, 0
      %v1059 = vsel %vm351, %v1026, 0
      %v1062 = vsel %vm351, %v1027, 0
      %v1065 = vsel %vm351, %v1028, 0
      %v1068 = vsel %vm351, %v1029, 0
      %v1071 = vsel %vm351, %v1030, 0
      %v1074 = vsel %vm351, %v1031, 0
      %v1077 = vsel %vm351, %v1032, 0
      %v1080 = vsel %vm351, %v1033, 0
      %v1083 = vsel %vm400, %v985, 0
      %1085 = vmatprep.subr.bf16.mxu0 0
      %1086 = vmatpush1.bf16.msra.mxu0 %v1083
      %1087 = vmatprep.subr.bf16.mxu0 0
      %1088 = vmatpush1.bf16.msra.mxu0 0
      %1089 = vmatprep.subr.bf16.mxu0 0
      %1090 = vmatpush1.bf16.msra.mxu0 0
      %1091 = vmatprep.subr.bf16.mxu0 0
      %1092 = vmatpush1.bf16.msra.mxu0 0
      %1093 = vmatprep.subr.bf16.mxu0 0
      %1094 = vmatpush1.bf16.msra.mxu0 0
      %1095 = vmatprep.subr.bf16.mxu0 0
      %1096 = vmatpush1.bf16.msra.mxu0 0
      %1097 = vmatprep.subr.bf16.mxu0 0
      %1098 = vmatpush1.bf16.msra.mxu0 0
      %1099 = vmatprep.subr.bf16.mxu0 0
      %1100 = vmatpush1.bf16.msra.mxu0 0
      %1101 = vmatprep.subr.bf16.mxu0 0
      %1102 = vmatpush1.bf16.msra.mxu0 0
      %1103 = vmatprep.subr.bf16.mxu0 0
      %1104 = vmatpush1.bf16.msra.mxu0 0
      %1105 = vmatprep.subr.bf16.mxu0 0
      %1106 = vmatpush1.bf16.msra.mxu0 0
      %1107 = vmatprep.subr.bf16.mxu0 0
      %1108 = vmatpush1.bf16.msra.mxu0 0
      %1109 = vmatprep.subr.bf16.mxu0 0
      %1110 = vmatpush1.bf16.msra.mxu0 0
      %1111 = vmatprep.subr.bf16.mxu0 0
      %1112 = vmatpush1.bf16.msra.mxu0 0
      %1113 = vmatprep.subr.bf16.mxu0 0
      %1114 = vmatpush1.bf16.msra.mxu0 0
      %1115 = vmatprep.subr.bf16.mxu0 0
      %1116 = vmatpush1.bf16.msra.mxu0 0
      %1117 = vmatprep.mubr.bf16.mxu0 0
      %1118 = vmatmul.mubr.bf16.gmra.mrb[0].mxu0 %v1035
      %v1119 = vpop.f32.mrb[0].mxu0
      %v1120 = vadd.f32 0.0, %v1119
      %v1121 = vpop.f32.mrb[0].mxu0
      %v1122 = vpop.f32.mrb[0].mxu0
      %v1123 = vadd.f32 0.0, %v1122
      %v1124 = vpop.f32.mrb[0].mxu0
      %1125 = vmatprep.mubr.bf16.mxu0 0
      %1126 = vmatmul.mubr.bf16.gmra.mrb[0].mxu0 %v1038
      %v1127 = vpop.f32.mrb[0].mxu0
      %v1128 = vadd.f32 0.0, %v1127
      %v1129 = vpop.f32.mrb[0].mxu0
      %v1130 = vpop.f32.mrb[0].mxu0
      %v1131 = vadd.f32 0.0, %v1130
      %v1132 = vpop.f32.mrb[0].mxu0
      %1133 = vmatprep.mubr.bf16.mxu0 0
      %1134 = vmatmul.mubr.bf16.gmra.mrb[0].mxu0 %v1041
      %v1135 = vpop.f32.mrb[0].mxu0
      %v1136 = vadd.f32 0.0, %v1135
      %v1137 = vpop.f32.mrb[0].mxu0
      %v1138 = vpop.f32.mrb[0].mxu0
      %v1139 = vadd.f32 0.0, %v1138
      %v1140 = vpop.f32.mrb[0].mxu0
      %1141 = vmatprep.mubr.bf16.mxu0 0
      %1142 = vmatmul.mubr.bf16.gmra.mrb[0].mxu0 %v1044
      %v1143 = vpop.f32.mrb[0].mxu0
      %v1144 = vadd.f32 0.0, %v1143
      %v1145 = vpop.f32.mrb[0].mxu0
      %v1146 = vpop.f32.mrb[0].mxu0
      %v1147 = vadd.f32 0.0, %v1146
      %v1148 = vpop.f32.mrb[0].mxu0
      %1149 = vmatprep.mubr.bf16.mxu0 0
      %1150 = vmatmul.mubr.bf16.gmra.mrb[0].mxu0 %v1047
      %v1151 = vpop.f32.mrb[0].mxu0
      %v1152 = vadd.f32 0.0, %v1151
      %v1153 = vpop.f32.mrb[0].mxu0
      %v1154 = vpop.f32.mrb[0].mxu0
      %v1155 = vadd.f32 0.0, %v1154
      %v1156 = vpop.f32.mrb[0].mxu0
      %1157 = vmatprep.mubr.bf16.mxu0 0
      %1158 = vmatmul.mubr.bf16.gmra.mrb[0].mxu0 %v1050
      %v1159 = vpop.f32.mrb[0].mxu0
      %v1160 = vadd.f32 0.0, %v1159
      %v1161 = vpop.f32.mrb[0].mxu0
      %v1162 = vpop.f32.mrb[0].mxu0
      %v1163 = vadd.f32 0.0, %v1162
      %v1164 = vpop.f32.mrb[0].mxu0
      %1165 = vmatprep.mubr.bf16.mxu0 0
      %1166 = vmatmul.mubr.bf16.gmra.mrb[0].mxu0 %v1053
      %v1167 = vpop.f32.mrb[0].mxu0
      %v1168 = vadd.f32 0.0, %v1167
      %v1169 = vpop.f32.mrb[0].mxu0
      %v1170 = vpop.f32.mrb[0].mxu0
      %v1171 = vadd.f32 0.0, %v1170
      %v1172 = vpop.f32.mrb[0].mxu0
      %1173 = vmatprep.mubr.bf16.mxu0 0
      %1174 = vmatmul.mubr.bf16.gmra.mrb[0].mxu0 %v1056
      %v1175 = vpop.f32.mrb[0].mxu0
      %v1176 = vadd.f32 0.0, %v1175
      %v1177 = vpop.f32.mrb[0].mxu0
      %v1178 = vpop.f32.mrb[0].mxu0
      %v1179 = vadd.f32 0.0, %v1178
      %v1180 = vpop.f32.mrb[0].mxu0
      %1181 = vmatprep.mubr.bf16.mxu0 0
      %1182 = vmatmul.mubr.bf16.gmra.mrb[0].mxu0 %v1059
      %v1183 = vpop.f32.mrb[0].mxu0
      %v1184 = vadd.f32 0.0, %v1183
      %v1185 = vpop.f32.mrb[0].mxu0
      %v1186 = vpop.f32.mrb[0].mxu0
      %v1187 = vadd.f32 0.0, %v1186
      %v1188 = vpop.f32.mrb[0].mxu0
      %1189 = vmatprep.mubr.bf16.mxu0 0
      %1190 = vmatmul.mubr.bf16.gmra.mrb[0].mxu0 %v1062
      %v1191 = vpop.f32.mrb[0].mxu0
      %v1192 = vadd.f32 0.0, %v1191
      %v1193 = vpop.f32.mrb[0].mxu0
      %v1194 = vpop.f32.mrb[0].mxu0
      %v1195 = vadd.f32 0.0, %v1194
      %v1196 = vpop.f32.mrb[0].mxu0
      %1197 = vmatprep.mubr.bf16.mxu0 0
      %1198 = vmatmul.mubr.bf16.gmra.mrb[0].mxu0 %v1065
      %v1199 = vpop.f32.mrb[0].mxu0
      %v1200 = vadd.f32 0.0, %v1199
      %v1201 = vpop.f32.mrb[0].mxu0
      %v1202 = vpop.f32.mrb[0].mxu0
      %v1203 = vadd.f32 0.0, %v1202
      %v1204 = vpop.f32.mrb[0].mxu0
      %1205 = vmatprep.mubr.bf16.mxu0 0
      %1206 = vmatmul.mubr.bf16.gmra.mrb[0].mxu0 %v1068
      %v1207 = vpop.f32.mrb[0].mxu0
      %v1208 = vadd.f32 0.0, %v1207
      %v1209 = vpop.f32.mrb[0].mxu0
      %v1210 = vpop.f32.mrb[0].mxu0
      %v1211 = vadd.f32 0.0, %v1210
      %v1212 = vpop.f32.mrb[0].mxu0
      %1213 = vmatprep.mubr.bf16.mxu0 0
      %1214 = vmatmul.mubr.bf16.gmra.mrb[0].mxu0 %v1071
      %v1215 = vpop.f32.mrb[0].mxu0
      %v1216 = vadd.f32 0.0, %v1215
      %v1217 = vpop.f32.mrb[0].mxu0
      %v1218 = vpop.f32.mrb[0].mxu0
      %v1219 = vadd.f32 0.0, %v1218
      %v1220 = vpop.f32.mrb[0].mxu0
      %1221 = vmatprep.mubr.bf16.mxu0 0
      %1222 = vmatmul.mubr.bf16.gmra.mrb[0].mxu0 %v1074
      %v1223 = vpop.f32.mrb[0].mxu0
      %v1224 = vadd.f32 0.0, %v1223
      %v1225 = vpop.f32.mrb[0].mxu0
      %v1226 = vpop.f32.mrb[0].mxu0
      %v1227 = vadd.f32 0.0, %v1226
      %v1228 = vpop.f32.mrb[0].mxu0
      %1229 = vmatprep.mubr.bf16.mxu0 0
      %1230 = vmatmul.mubr.bf16.gmra.mrb[0].mxu0 %v1077
      %v1231 = vpop.f32.mrb[0].mxu0
      %v1232 = vadd.f32 0.0, %v1231
      %v1233 = vpop.f32.mrb[0].mxu0
      %v1234 = vpop.f32.mrb[0].mxu0
      %v1235 = vadd.f32 0.0, %v1234
      %v1236 = vpop.f32.mrb[0].mxu0
      %1237 = vmatprep.mubr.bf16.mxu0 0
      %1238 = vmatmul.mubr.bf16.gmra.mrb[0].mxu0 %v1080
      %v1239 = vpop.f32.mrb[0].mxu0
      %v1240 = vadd.f32 0.0, %v1239
      %v1241 = vpop.f32.mrb[0].mxu0
      %v1242 = vpop.f32.mrb[0].mxu0
      %v1243 = vadd.f32 0.0, %v1242
      %v1244 = vpop.f32.mrb[0].mxu0
      %1245 = vdwg.mxu0
      %v1246 = vld [vmem:[#allocation2] sm:$0xff]
      %v1247 = vld [vmem:[#allocation2 + $0x8] sm:$0xff]
      %v1248 = vld [vmem:[#allocation2 + $0x10] sm:$0xff]
      %v1249 = vld [vmem:[#allocation2 + $0x18] sm:$0xff]
      %v1250 = vld [vmem:[#allocation2 + $0x20] sm:$0xff]
      %v1251 = vld [vmem:[#allocation2 + $0x28] sm:$0xff]
      %v1252 = vld [vmem:[#allocation2 + $0x30] sm:$0xff]
      %v1253 = vld [vmem:[#allocation2 + $0x38] sm:$0xff]
      %v1254 = vld [vmem:[#allocation2 + $0x40] sm:$0xff]
      %v1255 = vld [vmem:[#allocation2 + $0x48] sm:$0xff]
      %v1256 = vld [vmem:[#allocation2 + $0x50] sm:$0xff]
      %v1257 = vld [vmem:[#allocation2 + $0x58] sm:$0xff]
      %v1258 = vld [vmem:[#allocation2 + $0x60] sm:$0xff]
      %v1259 = vld [vmem:[#allocation2 + $0x68] sm:$0xff]
      %v1260 = vld [vmem:[#allocation2 + $0x70] sm:$0xff]
      %v1261 = vld [vmem:[#allocation2 + $0x78] sm:$0xff]
      %v1262 = vld [vmem:[#allocation2 + $0x80] sm:$0xff]
      %v1263 = vld [vmem:[#allocation2 + $0x88] sm:$0xff]
      %v1264 = vld [vmem:[#allocation2 + $0x90] sm:$0xff]
      %v1265 = vld [vmem:[#allocation2 + $0x98] sm:$0xff]
      %v1266 = vld [vmem:[#allocation2 + $0xa0] sm:$0xff]
      %v1267 = vld [vmem:[#allocation2 + $0xa8] sm:$0xff]
      %v1268 = vld [vmem:[#allocation2 + $0xb0] sm:$0xff]
      %v1269 = vld [vmem:[#allocation2 + $0xb8] sm:$0xff]
      %v1270 = vld [vmem:[#allocation2 + $0xc0] sm:$0xff]
      %v1271 = vld [vmem:[#allocation2 + $0xc8] sm:$0xff]
      %v1272 = vld [vmem:[#allocation2 + $0xd0] sm:$0xff]
      %v1273 = vld [vmem:[#allocation2 + $0xd8] sm:$0xff]
      %v1274 = vld [vmem:[#allocation2 + $0xe0] sm:$0xff]
      %v1275 = vld [vmem:[#allocation2 + $0xe8] sm:$0xff]
      %v1276 = vld [vmem:[#allocation2 + $0xf0] sm:$0xff]
      %v1277 = vld [vmem:[#allocation2 + $0xf8] sm:$0xff]
      %v1278 = vadd.f32 %v1246, %v1120
      %v1279 = vadd.f32 %v1247, %v1123
      %v1280 = vadd.f32 %v1248, %v1128
      %v1281 = vadd.f32 %v1249, %v1131
      %v1282 = vadd.f32 %v1250, %v1136
      %v1283 = vadd.f32 %v1251, %v1139
      %v1284 = vadd.f32 %v1252, %v1144
      %v1285 = vadd.f32 %v1253, %v1147
      %v1286 = vadd.f32 %v1254, %v1152
      %v1287 = vadd.f32 %v1255, %v1155
      %v1288 = vadd.f32 %v1256, %v1160
      %v1289 = vadd.f32 %v1257, %v1163
      %v1290 = vadd.f32 %v1258, %v1168
      %v1291 = vadd.f32 %v1259, %v1171
      %v1292 = vadd.f32 %v1260, %v1176
      %v1293 = vadd.f32 %v1261, %v1179
      %v1294 = vadd.f32 %v1262, %v1184
      %v1295 = vadd.f32 %v1263, %v1187
      %v1296 = vadd.f32 %v1264, %v1192
      %v1297 = vadd.f32 %v1265, %v1195
      %v1298 = vadd.f32 %v1266, %v1200
      %v1299 = vadd.f32 %v1267, %v1203
      %v1300 = vadd.f32 %v1268, %v1208
      %v1301 = vadd.f32 %v1269, %v1211
      %v1302 = vadd.f32 %v1270, %v1216
      %v1303 = vadd.f32 %v1271, %v1219
      %v1304 = vadd.f32 %v1272, %v1224
      %v1305 = vadd.f32 %v1273, %v1227
      %v1306 = vadd.f32 %v1274, %v1232
      %v1307 = vadd.f32 %v1275, %v1235
      %v1308 = vadd.f32 %v1276, %v1240
      %v1309 = vadd.f32 %v1277, %v1243
      %1310 = vst [vmem:[#allocation2] sm:$0xff] %v1278
      %1311 = vst [vmem:[#allocation2 + $0x8] sm:$0xff] %v1279
      %1312 = vst [vmem:[#allocation2 + $0x10] sm:$0xff] %v1280
      %1313 = vst [vmem:[#allocation2 + $0x18] sm:$0xff] %v1281
      %1314 = vst [vmem:[#allocation2 + $0x20] sm:$0xff] %v1282
      %1315 = vst [vmem:[#allocation2 + $0x28] sm:$0xff] %v1283
      %1316 = vst [vmem:[#allocation2 + $0x30] sm:$0xff] %v1284
      %1317 = vst [vmem:[#allocation2 + $0x38] sm:$0xff] %v1285
      %1318 = vst [vmem:[#allocation2 + $0x40] sm:$0xff] %v1286
      %1319 = vst [vmem:[#allocation2 + $0x48] sm:$0xff] %v1287
      %1320 = vst [vmem:[#allocation2 + $0x50] sm:$0xff] %v1288
      %1321 = vst [vmem:[#allocation2 + $0x58] sm:$0xff] %v1289
      %1322 = vst [vmem:[#allocation2 + $0x60] sm:$0xff] %v1290
      %1323 = vst [vmem:[#allocation2 + $0x68] sm:$0xff] %v1291
      %1324 = vst [vmem:[#allocation2 + $0x70] sm:$0xff] %v1292
      %1325 = vst [vmem:[#allocation2 + $0x78] sm:$0xff] %v1293
      %1326 = vst [vmem:[#allocation2 + $0x80] sm:$0xff] %v1294
      %1327 = vst [vmem:[#allocation2 + $0x88] sm:$0xff] %v1295
      %1328 = vst [vmem:[#allocation2 + $0x90] sm:$0xff] %v1296
      %1329 = vst [vmem:[#allocation2 + $0x98] sm:$0xff] %v1297
      %1330 = vst [vmem:[#allocation2 + $0xa0] sm:$0xff] %v1298
      %1331 = vst [vmem:[#allocation2 + $0xa8] sm:$0xff] %v1299
      %1332 = vst [vmem:[#allocation2 + $0xb0] sm:$0xff] %v1300
      %1333 = vst [vmem:[#allocation2 + $0xb8] sm:$0xff] %v1301
      %1334 = vst [vmem:[#allocation2 + $0xc0] sm:$0xff] %v1302
      %1335 = vst [vmem:[#allocation2 + $0xc8] sm:$0xff] %v1303
      %1336 = vst [vmem:[#allocation2 + $0xd0] sm:$0xff] %v1304
      %1337 = vst [vmem:[#allocation2 + $0xd8] sm:$0xff] %v1305
      %1338 = vst [vmem:[#allocation2 + $0xe0] sm:$0xff] %v1306
      %1339 = vst [vmem:[#allocation2 + $0xe8] sm:$0xff] %v1307
      %1340 = vst [vmem:[#allocation2 + $0xf0] sm:$0xff] %v1308
      %1341 = vst [vmem:[#allocation2 + $0xf8] sm:$0xff] %v1309
      %vm1358 = vcmask 1042432
      %vm1359 = vcmask 1046532
      %vm1360 = vmor %vm1358, %vm1359
      %v1361 = vrot.slane %v216, 5
      %v1362 = vrot.slane %v1361, 4
      %v1363 = vrot.slane %v217, 5
      %v1364 = vsel %vm1360, %v1362, %v1363
      %v1365 = vrot.slane %v1363, 4
      %v1366 = vrot.slane %v218, 5
      %v1367 = vsel %vm1360, %v1365, %v1366
      %v1368 = vrot.slane %v219, 5
      %v1369 = vrot.slane %v1368, 4
      %v1370 = vrot.slane %v220, 5
      %v1371 = vsel %vm1360, %v1369, %v1370
      %v1372 = vrot.slane %v1370, 4
      %v1373 = vrot.slane %v221, 5
      %v1374 = vsel %vm1360, %v1372, %v1373
      %v1375 = vrot.slane %v222, 5
      %v1376 = vrot.slane %v1375, 4
      %v1377 = vrot.slane %v223, 5
      %v1378 = vsel %vm1360, %v1376, %v1377
      %v1379 = vrot.slane %v1377, 4
      %v1380 = vrot.slane %v224, 5
      %v1381 = vsel %vm1360, %v1379, %v1380
      %v1382 = vrot.slane %v225, 5
      %v1383 = vrot.slane %v1382, 4
      %v1384 = vrot.slane %v226, 5
      %v1385 = vsel %vm1360, %v1383, %v1384
      %v1386 = vrot.slane %v1384, 4
      %v1387 = vrot.slane %v227, 5
      %v1388 = vsel %vm1360, %v1386, %v1387
      %v1389 = vrot.slane %v228, 5
      %v1390 = vrot.slane %v1389, 4
      %v1391 = vrot.slane %v229, 5
      %v1392 = vsel %vm1360, %v1390, %v1391
      %v1393 = vrot.slane %v1391, 4
      %v1394 = vrot.slane %v230, 5
      %v1395 = vsel %vm1360, %v1393, %v1394
      %v1396 = vrot.slane %v231, 5
      %v1397 = vrot.slane %v1396, 4
      %v1398 = vrot.slane %v232, 5
      %v1399 = vsel %vm1360, %v1397, %v1398
      %v1400 = vrot.slane %v1398, 4
      %v1401 = vrot.slane %v233, 5
      %v1402 = vsel %vm1360, %v1400, %v1401
      %v1403 = vrot.slane %v234, 5
      %v1404 = vrot.slane %v1403, 4
      %v1405 = vrot.slane %v235, 5
      %v1406 = vsel %vm1360, %v1404, %v1405
      %v1407 = vrot.slane %v1405, 4
      %v1408 = vrot.slane %v236, 5
      %v1409 = vsel %vm1360, %v1407, %v1408
      %v1410 = vrot.slane %v237, 5
      %v1411 = vrot.slane %v1410, 4
      %v1412 = vrot.slane %v238, 5
      %v1413 = vsel %vm1360, %v1411, %v1412
      %v1414 = vrot.slane %v1412, 4
      %v1415 = vrot.slane %v239, 5
      %v1416 = vsel %vm1360, %v1414, %v1415
      %v1417 = vrot.slane %v240, 5
      %v1418 = vrot.slane %v1417, 4
      %v1419 = vrot.slane %v241, 5
      %v1420 = vsel %vm1360, %v1418, %v1419
      %v1421 = vrot.slane %v1419, 4
      %v1422 = vrot.slane %v242, 5
      %v1423 = vsel %vm1360, %v1421, %v1422
      %v1424 = vrot.slane %v243, 5
      %v1425 = vrot.slane %v1424, 4
      %v1426 = vrot.slane %v244, 5
      %v1427 = vsel %vm1360, %v1425, %v1426
      %v1428 = vrot.slane %v1426, 4
      %v1429 = vrot.slane %v245, 5
      %v1430 = vsel %vm1360, %v1428, %v1429
      %v1431 = vrot.slane %v246, 5
      %v1432 = vrot.slane %v1431, 4
      %v1433 = vrot.slane %v247, 5
      %v1434 = vsel %vm1360, %v1432, %v1433
      %v1435 = vrot.slane %v1433, 4
      %v1436 = vrot.slane %v248, 5
      %v1437 = vsel %vm1360, %v1435, %v1436
      %v1438 = vrot.slane %v249, 5
      %v1439 = vrot.slane %v1438, 4
      %v1440 = vrot.slane %v250, 5
      %v1441 = vsel %vm1360, %v1439, %v1440
      %v1442 = vrot.slane %v1440, 4
      %v1443 = vrot.slane %v251, 5
      %v1444 = vsel %vm1360, %v1442, %v1443
      %v1445 = vrot.slane %v252, 5
      %v1446 = vrot.slane %v1445, 4
      %v1447 = vrot.slane %v253, 5
      %v1448 = vsel %vm1360, %v1446, %v1447
      %v1449 = vrot.slane %v1447, 4
      %v1450 = vrot.slane %v254, 5
      %v1451 = vsel %vm1360, %v1449, %v1450
      %v1452 = vrot.slane %v255, 5
      %v1453 = vrot.slane %v1452, 4
      %v1454 = vrot.slane %v256, 5
      %v1455 = vsel %vm1360, %v1453, %v1454
      %v1456 = vrot.slane %v1454, 4
      %v1457 = vrot.slane %v257, 5
      %v1458 = vsel %vm1360, %v1456, %v1457
      %v1459 = vrot.slane %v258, 5
      %v1460 = vrot.slane %v1459, 4
      %v1461 = vrot.slane %v259, 5
      %v1462 = vsel %vm1360, %v1460, %v1461
      %v1463 = vrot.slane %v1461, 4
      %v1464 = vrot.slane %v260, 5
      %v1465 = vsel %vm1360, %v1463, %v1464
      %v1466 = vrot.slane %v261, 5
      %v1467 = vrot.slane %v1466, 4
      %v1468 = vrot.slane %v262, 5
      %v1469 = vsel %vm1360, %v1467, %v1468
      %v1470 = vrot.slane %v1468, 4
      %v1471 = vrot.slane %v263, 5
      %v1472 = vsel %vm1360, %v1470, %v1471
      %s1473 = scalar_lea.vmem %s1, 4
      %v1474 = vld [vmem:[%s1473] sm:$0x3]
      %v1475 = vunpack.c.l.b16 %v1364
      %v1476 = vunpack.c.l.b16 %v1367
      %v1477 = vunpack.c.l.b16 %v1371
      %v1478 = vunpack.c.l.b16 %v1374
      %v1479 = vunpack.c.l.b16 %v1378
      %v1480 = vunpack.c.l.b16 %v1381
      %v1481 = vunpack.c.l.b16 %v1385
      %v1482 = vunpack.c.l.b16 %v1388
      %v1483 = vunpack.c.l.b16 %v1392
      %v1484 = vunpack.c.l.b16 %v1395
      %v1485 = vunpack.c.l.b16 %v1399
      %v1486 = vunpack.c.l.b16 %v1402
      %v1487 = vunpack.c.l.b16 %v1406
      %v1488 = vunpack.c.l.b16 %v1409
      %v1489 = vunpack.c.l.b16 %v1413
      %v1490 = vunpack.c.l.b16 %v1416
      %v1491 = vunpack.c.l.b16 %v1420
      %v1492 = vunpack.c.l.b16 %v1423
      %v1493 = vunpack.c.l.b16 %v1427
      %v1494 = vunpack.c.l.b16 %v1430
      %v1495 = vunpack.c.l.b16 %v1434
      %v1496 = vunpack.c.l.b16 %v1437
      %v1497 = vunpack.c.l.b16 %v1441
      %v1498 = vunpack.c.l.b16 %v1444
      %v1499 = vunpack.c.l.b16 %v1448
      %v1500 = vunpack.c.l.b16 %v1451
      %v1501 = vunpack.c.l.b16 %v1455
      %v1502 = vunpack.c.l.b16 %v1458
      %v1503 = vunpack.c.l.b16 %v1462
      %v1504 = vunpack.c.l.b16 %v1465
      %v1505 = vunpack.c.l.b16 %v1469
      %v1506 = vunpack.c.l.b16 %v1472
      %v1507 = vpack.c.b16 %v1476, %v1475
      %v1508 = vpack.c.b16 %v1478, %v1477
      %v1509 = vpack.c.b16 %v1480, %v1479
      %v1510 = vpack.c.b16 %v1482, %v1481
      %v1511 = vpack.c.b16 %v1484, %v1483
      %v1512 = vpack.c.b16 %v1486, %v1485
      %v1513 = vpack.c.b16 %v1488, %v1487
      %v1514 = vpack.c.b16 %v1490, %v1489
      %v1515 = vpack.c.b16 %v1492, %v1491
      %v1516 = vpack.c.b16 %v1494, %v1493
      %v1517 = vpack.c.b16 %v1496, %v1495
      %v1518 = vpack.c.b16 %v1498, %v1497
      %v1519 = vpack.c.b16 %v1500, %v1499
      %v1520 = vpack.c.b16 %v1502, %v1501
      %v1521 = vpack.c.b16 %v1504, %v1503
      %v1522 = vpack.c.b16 %v1506, %v1505
      %v1524 = vsel %vm351, %v1507, 0
      %v1527 = vsel %vm351, %v1508, 0
      %v1530 = vsel %vm351, %v1509, 0
      %v1533 = vsel %vm351, %v1510, 0
      %v1536 = vsel %vm351, %v1511, 0
      %v1539 = vsel %vm351, %v1512, 0
      %v1542 = vsel %vm351, %v1513, 0
      %v1545 = vsel %vm351, %v1514, 0
      %v1548 = vsel %vm351, %v1515, 0
      %v1551 = vsel %vm351, %v1516, 0
      %v1554 = vsel %vm351, %v1517, 0
      %v1557 = vsel %vm351, %v1518, 0
      %v1560 = vsel %vm351, %v1519, 0
      %v1563 = vsel %vm351, %v1520, 0
      %v1566 = vsel %vm351, %v1521, 0
      %v1569 = vsel %vm351, %v1522, 0
      %v1572 = vsel %vm400, %v1474, 0
      %1574 = vmatprep.subr.bf16.mxu0 0
      %1575 = vmatpush1.bf16.msra.mxu0 %v1572
      %1576 = vmatprep.subr.bf16.mxu0 0
      %1577 = vmatpush1.bf16.msra.mxu0 0
      %1578 = vmatprep.subr.bf16.mxu0 0
      %1579 = vmatpush1.bf16.msra.mxu0 0
      %1580 = vmatprep.subr.bf16.mxu0 0
      %1581 = vmatpush1.bf16.msra.mxu0 0
      %1582 = vmatprep.subr.bf16.mxu0 0
      %1583 = vmatpush1.bf16.msra.mxu0 0
      %1584 = vmatprep.subr.bf16.mxu0 0
      %1585 = vmatpush1.bf16.msra.mxu0 0
      %1586 = vmatprep.subr.bf16.mxu0 0
      %1587 = vmatpush1.bf16.msra.mxu0 0
      %1588 = vmatprep.subr.bf16.mxu0 0
      %1589 = vmatpush1.bf16.msra.mxu0 0
      %1590 = vmatprep.subr.bf16.mxu0 0
      %1591 = vmatpush1.bf16.msra.mxu0 0
      %1592 = vmatprep.subr.bf16.mxu0 0
      %1593 = vmatpush1.bf16.msra.mxu0 0
      %1594 = vmatprep.subr.bf16.mxu0 0
      %1595 = vmatpush1.bf16.msra.mxu0 0
      %1596 = vmatprep.subr.bf16.mxu0 0
      %1597 = vmatpush1.bf16.msra.mxu0 0
      %1598 = vmatprep.subr.bf16.mxu0 0
      %1599 = vmatpush1.bf16.msra.mxu0 0
      %1600 = vmatprep.subr.bf16.mxu0 0
      %1601 = vmatpush1.bf16.msra.mxu0 0
      %1602 = vmatprep.subr.bf16.mxu0 0
      %1603 = vmatpush1.bf16.msra.mxu0 0
      %1604 = vmatprep.subr.bf16.mxu0 0
      %1605 = vmatpush1.bf16.msra.mxu0 0
      %1606 = vmatprep.mubr.bf16.mxu0 0
      %1607 = vmatmul.mubr.bf16.gmra.mrb[0].mxu0 %v1524
      %v1608 = vpop.f32.mrb[0].mxu0
      %v1609 = vadd.f32 0.0, %v1608
      %v1610 = vpop.f32.mrb[0].mxu0
      %v1611 = vpop.f32.mrb[0].mxu0
      %v1612 = vadd.f32 0.0, %v1611
      %v1613 = vpop.f32.mrb[0].mxu0
      %1614 = vmatprep.mubr.bf16.mxu0 0
      %1615 = vmatmul.mubr.bf16.gmra.mrb[0].mxu0 %v1527
      %v1616 = vpop.f32.mrb[0].mxu0
      %v1617 = vadd.f32 0.0, %v1616
      %v1618 = vpop.f32.mrb[0].mxu0
      %v1619 = vpop.f32.mrb[0].mxu0
      %v1620 = vadd.f32 0.0, %v1619
      %v1621 = vpop.f32.mrb[0].mxu0
      %1622 = vmatprep.mubr.bf16.mxu0 0
      %1623 = vmatmul.mubr.bf16.gmra.mrb[0].mxu0 %v1530
      %v1624 = vpop.f32.mrb[0].mxu0
      %v1625 = vadd.f32 0.0, %v1624
      %v1626 = vpop.f32.mrb[0].mxu0
      %v1627 = vpop.f32.mrb[0].mxu0
      %v1628 = vadd.f32 0.0, %v1627
      %v1629 = vpop.f32.mrb[0].mxu0
      %1630 = vmatprep.mubr.bf16.mxu0 0
      %1631 = vmatmul.mubr.bf16.gmra.mrb[0].mxu0 %v1533
      %v1632 = vpop.f32.mrb[0].mxu0
      %v1633 = vadd.f32 0.0, %v1632
      %v1634 = vpop.f32.mrb[0].mxu0
      %v1635 = vpop.f32.mrb[0].mxu0
      %v1636 = vadd.f32 0.0, %v1635
      %v1637 = vpop.f32.mrb[0].mxu0
      %1638 = vmatprep.mubr.bf16.mxu0 0
      %1639 = vmatmul.mubr.bf16.gmra.mrb[0].mxu0 %v1536
      %v1640 = vpop.f32.mrb[0].mxu0
      %v1641 = vadd.f32 0.0, %v1640
      %v1642 = vpop.f32.mrb[0].mxu0
      %v1643 = vpop.f32.mrb[0].mxu0
      %v1644 = vadd.f32 0.0, %v1643
      %v1645 = vpop.f32.mrb[0].mxu0
      %1646 = vmatprep.mubr.bf16.mxu0 0
      %1647 = vmatmul.mubr.bf16.gmra.mrb[0].mxu0 %v1539
      %v1648 = vpop.f32.mrb[0].mxu0
      %v1649 = vadd.f32 0.0, %v1648
      %v1650 = vpop.f32.mrb[0].mxu0
      %v1651 = vpop.f32.mrb[0].mxu0
      %v1652 = vadd.f32 0.0, %v1651
      %v1653 = vpop.f32.mrb[0].mxu0
      %1654 = vmatprep.mubr.bf16.mxu0 0
      %1655 = vmatmul.mubr.bf16.gmra.mrb[0].mxu0 %v1542
      %v1656 = vpop.f32.mrb[0].mxu0
      %v1657 = vadd.f32 0.0, %v1656
      %v1658 = vpop.f32.mrb[0].mxu0
      %v1659 = vpop.f32.mrb[0].mxu0
      %v1660 = vadd.f32 0.0, %v1659
      %v1661 = vpop.f32.mrb[0].mxu0
      %1662 = vmatprep.mubr.bf16.mxu0 0
      %1663 = vmatmul.mubr.bf16.gmra.mrb[0].mxu0 %v1545
      %v1664 = vpop.f32.mrb[0].mxu0
      %v1665 = vadd.f32 0.0, %v1664
      %v1666 = vpop.f32.mrb[0].mxu0
      %v1667 = vpop.f32.mrb[0].mxu0
      %v1668 = vadd.f32 0.0, %v1667
      %v1669 = vpop.f32.mrb[0].mxu0
      %1670 = vmatprep.mubr.bf16.mxu0 0
      %1671 = vmatmul.mubr.bf16.gmra.mrb[0].mxu0 %v1548
      %v1672 = vpop.f32.mrb[0].mxu0
      %v1673 = vadd.f32 0.0, %v1672
      %v1674 = vpop.f32.mrb[0].mxu0
      %v1675 = vpop.f32.mrb[0].mxu0
      %v1676 = vadd.f32 0.0, %v1675
      %v1677 = vpop.f32.mrb[0].mxu0
      %1678 = vmatprep.mubr.bf16.mxu0 0
      %1679 = vmatmul.mubr.bf16.gmra.mrb[0].mxu0 %v1551
      %v1680 = vpop.f32.mrb[0].mxu0
      %v1681 = vadd.f32 0.0, %v1680
      %v1682 = vpop.f32.mrb[0].mxu0
      %v1683 = vpop.f32.mrb[0].mxu0
      %v1684 = vadd.f32 0.0, %v1683
      %v1685 = vpop.f32.mrb[0].mxu0
      %1686 = vmatprep.mubr.bf16.mxu0 0
      %1687 = vmatmul.mubr.bf16.gmra.mrb[0].mxu0 %v1554
      %v1688 = vpop.f32.mrb[0].mxu0
      %v1689 = vadd.f32 0.0, %v1688
      %v1690 = vpop.f32.mrb[0].mxu0
      %v1691 = vpop.f32.mrb[0].mxu0
      %v1692 = vadd.f32 0.0, %v1691
      %v1693 = vpop.f32.mrb[0].mxu0
      %1694 = vmatprep.mubr.bf16.mxu0 0
      %1695 = vmatmul.mubr.bf16.gmra.mrb[0].mxu0 %v1557
      %v1696 = vpop.f32.mrb[0].mxu0
      %v1697 = vadd.f32 0.0, %v1696
      %v1698 = vpop.f32.mrb[0].mxu0
      %v1699 = vpop.f32.mrb[0].mxu0
      %v1700 = vadd.f32 0.0, %v1699
      %v1701 = vpop.f32.mrb[0].mxu0
      %1702 = vmatprep.mubr.bf16.mxu0 0
      %1703 = vmatmul.mubr.bf16.gmra.mrb[0].mxu0 %v1560
      %v1704 = vpop.f32.mrb[0].mxu0
      %v1705 = vadd.f32 0.0, %v1704
      %v1706 = vpop.f32.mrb[0].mxu0
      %v1707 = vpop.f32.mrb[0].mxu0
      %v1708 = vadd.f32 0.0, %v1707
      %v1709 = vpop.f32.mrb[0].mxu0
      %1710 = vmatprep.mubr.bf16.mxu0 0
      %1711 = vmatmul.mubr.bf16.gmra.mrb[0].mxu0 %v1563
      %v1712 = vpop.f32.mrb[0].mxu0
      %v1713 = vadd.f32 0.0, %v1712
      %v1714 = vpop.f32.mrb[0].mxu0
      %v1715 = vpop.f32.mrb[0].mxu0
      %v1716 = vadd.f32 0.0, %v1715
      %v1717 = vpop.f32.mrb[0].mxu0
      %1718 = vmatprep.mubr.bf16.mxu0 0
      %1719 = vmatmul.mubr.bf16.gmra.mrb[0].mxu0 %v1566
      %v1720 = vpop.f32.mrb[0].mxu0
      %v1721 = vadd.f32 0.0, %v1720
      %v1722 = vpop.f32.mrb[0].mxu0
      %v1723 = vpop.f32.mrb[0].mxu0
      %v1724 = vadd.f32 0.0, %v1723
      %v1725 = vpop.f32.mrb[0].mxu0
      %1726 = vmatprep.mubr.bf16.mxu0 0
      %1727 = vmatmul.mubr.bf16.gmra.mrb[0].mxu0 %v1569
      %v1728 = vpop.f32.mrb[0].mxu0
      %v1729 = vadd.f32 0.0, %v1728
      %v1730 = vpop.f32.mrb[0].mxu0
      %v1731 = vpop.f32.mrb[0].mxu0
      %v1732 = vadd.f32 0.0, %v1731
      %v1733 = vpop.f32.mrb[0].mxu0
      %1734 = vdwg.mxu0
      %v1735 = vld [vmem:[#allocation2] sm:$0xff]
      %v1736 = vld [vmem:[#allocation2 + $0x8] sm:$0xff]
      %v1737 = vld [vmem:[#allocation2 + $0x10] sm:$0xff]
      %v1738 = vld [vmem:[#allocation2 + $0x18] sm:$0xff]
      %v1739 = vld [vmem:[#allocation2 + $0x20] sm:$0xff]
      %v1740 = vld [vmem:[#allocation2 + $0x28] sm:$0xff]
      %v1741 = vld [vmem:[#allocation2 + $0x30] sm:$0xff]
      %v1742 = vld [vmem:[#allocation2 + $0x38] sm:$0xff]
      %v1743 = vld [vmem:[#allocation2 + $0x40] sm:$0xff]
      %v1744 = vld [vmem:[#allocation2 + $0x48] sm:$0xff]
      %v1745 = vld [vmem:[#allocation2 + $0x50] sm:$0xff]
      %v1746 = vld [vmem:[#allocation2 + $0x58] sm:$0xff]
      %v1747 = vld [vmem:[#allocation2 + $0x60] sm:$0xff]
      %v1748 = vld [vmem:[#allocation2 + $0x68] sm:$0xff]
      %v1749 = vld [vmem:[#allocation2 + $0x70] sm:$0xff]
      %v1750 = vld [vmem:[#allocation2 + $0x78] sm:$0xff]
      %v1751 = vld [vmem:[#allocation2 + $0x80] sm:$0xff]
      %v1752 = vld [vmem:[#allocation2 + $0x88] sm:$0xff]
      %v1753 = vld [vmem:[#allocation2 + $0x90] sm:$0xff]
      %v1754 = vld [vmem:[#allocation2 + $0x98] sm:$0xff]
      %v1755 = vld [vmem:[#allocation2 + $0xa0] sm:$0xff]
      %v1756 = vld [vmem:[#allocation2 + $0xa8] sm:$0xff]
      %v1757 = vld [vmem:[#allocation2 + $0xb0] sm:$0xff]
      %v1758 = vld [vmem:[#allocation2 + $0xb8] sm:$0xff]
      %v1759 = vld [vmem:[#allocation2 + $0xc0] sm:$0xff]
      %v1760 = vld [vmem:[#allocation2 + $0xc8] sm:$0xff]
      %v1761 = vld [vmem:[#allocation2 + $0xd0] sm:$0xff]
      %v1762 = vld [vmem:[#allocation2 + $0xd8] sm:$0xff]
      %v1763 = vld [vmem:[#allocation2 + $0xe0] sm:$0xff]
      %v1764 = vld [vmem:[#allocation2 + $0xe8] sm:$0xff]
      %v1765 = vld [vmem:[#allocation2 + $0xf0] sm:$0xff]
      %v1766 = vld [vmem:[#allocation2 + $0xf8] sm:$0xff]
      %v1767 = vadd.f32 %v1735, %v1609
      %v1768 = vadd.f32 %v1736, %v1612
      %v1769 = vadd.f32 %v1737, %v1617
      %v1770 = vadd.f32 %v1738, %v1620
      %v1771 = vadd.f32 %v1739, %v1625
      %v1772 = vadd.f32 %v1740, %v1628
      %v1773 = vadd.f32 %v1741, %v1633
      %v1774 = vadd.f32 %v1742, %v1636
      %v1775 = vadd.f32 %v1743, %v1641
      %v1776 = vadd.f32 %v1744, %v1644
      %v1777 = vadd.f32 %v1745, %v1649
      %v1778 = vadd.f32 %v1746, %v1652
      %v1779 = vadd.f32 %v1747, %v1657
      %v1780 = vadd.f32 %v1748, %v1660
      %v1781 = vadd.f32 %v1749, %v1665
      %v1782 = vadd.f32 %v1750, %v1668
      %v1783 = vadd.f32 %v1751, %v1673
      %v1784 = vadd.f32 %v1752, %v1676
      %v1785 = vadd.f32 %v1753, %v1681
      %v1786 = vadd.f32 %v1754, %v1684
      %v1787 = vadd.f32 %v1755, %v1689
      %v1788 = vadd.f32 %v1756, %v1692
      %v1789 = vadd.f32 %v1757, %v1697
      %v1790 = vadd.f32 %v1758, %v1700
      %v1791 = vadd.f32 %v1759, %v1705
      %v1792 = vadd.f32 %v1760, %v1708
      %v1793 = vadd.f32 %v1761, %v1713
      %v1794 = vadd.f32 %v1762, %v1716
      %v1795 = vadd.f32 %v1763, %v1721
      %v1796 = vadd.f32 %v1764, %v1724
      %v1797 = vadd.f32 %v1765, %v1729
      %v1798 = vadd.f32 %v1766, %v1732
      %1799 = vst [vmem:[#allocation2] sm:$0xff] %v1767
      %1800 = vst [vmem:[#allocation2 + $0x8] sm:$0xff] %v1768
      %1801 = vst [vmem:[#allocation2 + $0x10] sm:$0xff] %v1769
      %1802 = vst [vmem:[#allocation2 + $0x18] sm:$0xff] %v1770
      %1803 = vst [vmem:[#allocation2 + $0x20] sm:$0xff] %v1771
      %1804 = vst [vmem:[#allocation2 + $0x28] sm:$0xff] %v1772
      %1805 = vst [vmem:[#allocation2 + $0x30] sm:$0xff] %v1773
      %1806 = vst [vmem:[#allocation2 + $0x38] sm:$0xff] %v1774
      %1807 = vst [vmem:[#allocation2 + $0x40] sm:$0xff] %v1775
      %1808 = vst [vmem:[#allocation2 + $0x48] sm:$0xff] %v1776
      %1809 = vst [vmem:[#allocation2 + $0x50] sm:$0xff] %v1777
      %1810 = vst [vmem:[#allocation2 + $0x58] sm:$0xff] %v1778
      %1811 = vst [vmem:[#allocation2 + $0x60] sm:$0xff] %v1779
      %1812 = vst [vmem:[#allocation2 + $0x68] sm:$0xff] %v1780
      %1813 = vst [vmem:[#allocation2 + $0x70] sm:$0xff] %v1781
      %1814 = vst [vmem:[#allocation2 + $0x78] sm:$0xff] %v1782
      %1815 = vst [vmem:[#allocation2 + $0x80] sm:$0xff] %v1783
      %1816 = vst [vmem:[#allocation2 + $0x88] sm:$0xff] %v1784
      %1817 = vst [vmem:[#allocation2 + $0x90] sm:$0xff] %v1785
      %1818 = vst [vmem:[#allocation2 + $0x98] sm:$0xff] %v1786
      %1819 = vst [vmem:[#allocation2 + $0xa0] sm:$0xff] %v1787
      %1820 = vst [vmem:[#allocation2 + $0xa8] sm:$0xff] %v1788
      %1821 = vst [vmem:[#allocation2 + $0xb0] sm:$0xff] %v1789
      %1822 = vst [vmem:[#allocation2 + $0xb8] sm:$0xff] %v1790
      %1823 = vst [vmem:[#allocation2 + $0xc0] sm:$0xff] %v1791
      %1824 = vst [vmem:[#allocation2 + $0xc8] sm:$0xff] %v1792
      %1825 = vst [vmem:[#allocation2 + $0xd0] sm:$0xff] %v1793
      %1826 = vst [vmem:[#allocation2 + $0xd8] sm:$0xff] %v1794
      %1827 = vst [vmem:[#allocation2 + $0xe0] sm:$0xff] %v1795
      %1828 = vst [vmem:[#allocation2 + $0xe8] sm:$0xff] %v1796
      %1829 = vst [vmem:[#allocation2 + $0xf0] sm:$0xff] %v1797
      %1830 = vst [vmem:[#allocation2 + $0xf8] sm:$0xff] %v1798
      %s1831 = scalar_lea.vmem %s1, 6
      %v1832 = vld [vmem:[%s1831] sm:$0x3]
      %v1835 = vunpack.c.l.b16 %v264
      %v1836 = vunpack.c.l.b16 %v265
      %v1837 = vpack.c.b16 %v1836, %v1835
      %v1839 = vsel %vm351, %v1837, 0
      %v1842 = vsel %vm400, %v1832, 0
      %1844 = vmatprep.subr.bf16.mxu0 0
      %1845 = vmatpush1.bf16.msra.mxu0 %v1842
      %1846 = vmatprep.subr.bf16.mxu0 0
      %1847 = vmatpush1.bf16.msra.mxu0 0
      %1848 = vmatprep.subr.bf16.mxu0 0
      %1849 = vmatpush1.bf16.msra.mxu0 0
      %1850 = vmatprep.subr.bf16.mxu0 0
      %1851 = vmatpush1.bf16.msra.mxu0 0
      %1852 = vmatprep.subr.bf16.mxu0 0
      %1853 = vmatpush1.bf16.msra.mxu0 0
      %1854 = vmatprep.subr.bf16.mxu0 0
      %1855 = vmatpush1.bf16.msra.mxu0 0
      %1856 = vmatprep.subr.bf16.mxu0 0
      %1857 = vmatpush1.bf16.msra.mxu0 0
      %1858 = vmatprep.subr.bf16.mxu0 0
      %1859 = vmatpush1.bf16.msra.mxu0 0
      %1860 = vmatprep.subr.bf16.mxu0 0
      %1861 = vmatpush1.bf16.msra.mxu0 0
      %1862 = vmatprep.subr.bf16.mxu0 0
      %1863 = vmatpush1.bf16.msra.mxu0 0
      %1864 = vmatprep.subr.bf16.mxu0 0
      %1865 = vmatpush1.bf16.msra.mxu0 0
      %1866 = vmatprep.subr.bf16.mxu0 0
      %1867 = vmatpush1.bf16.msra.mxu0 0
      %1868 = vmatprep.subr.bf16.mxu0 0
      %1869 = vmatpush1.bf16.msra.mxu0 0
      %1870 = vmatprep.subr.bf16.mxu0 0
      %1871 = vmatpush1.bf16.msra.mxu0 0
      %1872 = vmatprep.subr.bf16.mxu0 0
      %1873 = vmatpush1.bf16.msra.mxu0 0
      %1874 = vmatprep.subr.bf16.mxu0 0
      %1875 = vmatpush1.bf16.msra.mxu0 0
      %1876 = vmatprep.mubr.bf16.mxu0 0
      %1877 = vmatmul.mubr.bf16.gmra.mrb[0].mxu0 %v356
      %v1878 = vpop.f32.mrb[0].mxu0
      %v1879 = vadd.f32 0.0, %v1878
      %v1880 = vpop.f32.mrb[0].mxu0
      %v1881 = vpop.f32.mrb[0].mxu0
      %v1882 = vadd.f32 0.0, %v1881
      %v1883 = vpop.f32.mrb[0].mxu0
      %1884 = vmatprep.mubr.bf16.mxu0 0
      %1885 = vmatmul.mubr.bf16.gmra.mrb[0].mxu0 %v359
      %v1886 = vpop.f32.mrb[0].mxu0
      %v1887 = vadd.f32 0.0, %v1886
      %v1888 = vpop.f32.mrb[0].mxu0
      %v1889 = vpop.f32.mrb[0].mxu0
      %v1890 = vadd.f32 0.0, %v1889
      %v1891 = vpop.f32.mrb[0].mxu0
      %1892 = vmatprep.mubr.bf16.mxu0 0
      %1893 = vmatmul.mubr.bf16.gmra.mrb[0].mxu0 %v362
      %v1894 = vpop.f32.mrb[0].mxu0
      %v1895 = vadd.f32 0.0, %v1894
      %v1896 = vpop.f32.mrb[0].mxu0
      %v1897 = vpop.f32.mrb[0].mxu0
      %v1898 = vadd.f32 0.0, %v1897
      %v1899 = vpop.f32.mrb[0].mxu0
      %1900 = vmatprep.mubr.bf16.mxu0 0
      %1901 = vmatmul.mubr.bf16.gmra.mrb[0].mxu0 %v365
      %v1902 = vpop.f32.mrb[0].mxu0
      %v1903 = vadd.f32 0.0, %v1902
      %v1904 = vpop.f32.mrb[0].mxu0
      %v1905 = vpop.f32.mrb[0].mxu0
      %v1906 = vadd.f32 0.0, %v1905
      %v1907 = vpop.f32.mrb[0].mxu0
      %1908 = vmatprep.mubr.bf16.mxu0 0
      %1909 = vmatmul.mubr.bf16.gmra.mrb[0].mxu0 %v368
      %v1910 = vpop.f32.mrb[0].mxu0
      %v1911 = vadd.f32 0.0, %v1910
      %v1912 = vpop.f32.mrb[0].mxu0
      %v1913 = vpop.f32.mrb[0].mxu0
      %v1914 = vadd.f32 0.0, %v1913
      %v1915 = vpop.f32.mrb[0].mxu0
      %1916 = vmatprep.mubr.bf16.mxu0 0
      %1917 = vmatmul.mubr.bf16.gmra.mrb[0].mxu0 %v371
      %v1918 = vpop.f32.mrb[0].mxu0
      %v1919 = vadd.f32 0.0, %v1918
      %v1920 = vpop.f32.mrb[0].mxu0
      %v1921 = vpop.f32.mrb[0].mxu0
      %v1922 = vadd.f32 0.0, %v1921
      %v1923 = vpop.f32.mrb[0].mxu0
      %1924 = vmatprep.mubr.bf16.mxu0 0
      %1925 = vmatmul.mubr.bf16.gmra.mrb[0].mxu0 %v374
      %v1926 = vpop.f32.mrb[0].mxu0
      %v1927 = vadd.f32 0.0, %v1926
      %v1928 = vpop.f32.mrb[0].mxu0
      %v1929 = vpop.f32.mrb[0].mxu0
      %v1930 = vadd.f32 0.0, %v1929
      %v1931 = vpop.f32.mrb[0].mxu0
      %1932 = vmatprep.mubr.bf16.mxu0 0
      %1933 = vmatmul.mubr.bf16.gmra.mrb[0].mxu0 %v377
      %v1934 = vpop.f32.mrb[0].mxu0
      %v1935 = vadd.f32 0.0, %v1934
      %v1936 = vpop.f32.mrb[0].mxu0
      %v1937 = vpop.f32.mrb[0].mxu0
      %v1938 = vadd.f32 0.0, %v1937
      %v1939 = vpop.f32.mrb[0].mxu0
      %1940 = vmatprep.mubr.bf16.mxu0 0
      %1941 = vmatmul.mubr.bf16.gmra.mrb[0].mxu0 %v380
      %v1942 = vpop.f32.mrb[0].mxu0
      %v1943 = vadd.f32 0.0, %v1942
      %v1944 = vpop.f32.mrb[0].mxu0
      %v1945 = vpop.f32.mrb[0].mxu0
      %v1946 = vadd.f32 0.0, %v1945
      %v1947 = vpop.f32.mrb[0].mxu0
      %1948 = vmatprep.mubr.bf16.mxu0 0
      %1949 = vmatmul.mubr.bf16.gmra.mrb[0].mxu0 %v383
      %v1950 = vpop.f32.mrb[0].mxu0
      %v1951 = vadd.f32 0.0, %v1950
      %v1952 = vpop.f32.mrb[0].mxu0
      %v1953 = vpop.f32.mrb[0].mxu0
      %v1954 = vadd.f32 0.0, %v1953
      %v1955 = vpop.f32.mrb[0].mxu0
      %1956 = vmatprep.mubr.bf16.mxu0 0
      %1957 = vmatmul.mubr.bf16.gmra.mrb[0].mxu0 %v386
      %v1958 = vpop.f32.mrb[0].mxu0
      %v1959 = vadd.f32 0.0, %v1958
      %v1960 = vpop.f32.mrb[0].mxu0
      %v1961 = vpop.f32.mrb[0].mxu0
      %v1962 = vadd.f32 0.0, %v1961
      %v1963 = vpop.f32.mrb[0].mxu0
      %1964 = vmatprep.mubr.bf16.mxu0 0
      %1965 = vmatmul.mubr.bf16.gmra.mrb[0].mxu0 %v389
      %v1966 = vpop.f32.mrb[0].mxu0
      %v1967 = vadd.f32 0.0, %v1966
      %v1968 = vpop.f32.mrb[0].mxu0
      %v1969 = vpop.f32.mrb[0].mxu0
      %v1970 = vadd.f32 0.0, %v1969
      %v1971 = vpop.f32.mrb[0].mxu0
      %1972 = vmatprep.mubr.bf16.mxu0 0
      %1973 = vmatmul.mubr.bf16.gmra.mrb[0].mxu0 %v392
      %v1974 = vpop.f32.mrb[0].mxu0
      %v1975 = vadd.f32 0.0, %v1974
      %v1976 = vpop.f32.mrb[0].mxu0
      %v1977 = vpop.f32.mrb[0].mxu0
      %v1978 = vadd.f32 0.0, %v1977
      %v1979 = vpop.f32.mrb[0].mxu0
      %1980 = vmatprep.mubr.bf16.mxu0 0
      %1981 = vmatmul.mubr.bf16.gmra.mrb[0].mxu0 %v395
      %v1982 = vpop.f32.mrb[0].mxu0
      %v1983 = vadd.f32 0.0, %v1982
      %v1984 = vpop.f32.mrb[0].mxu0
      %v1985 = vpop.f32.mrb[0].mxu0
      %v1986 = vadd.f32 0.0, %v1985
      %v1987 = vpop.f32.mrb[0].mxu0
      %1988 = vmatprep.mubr.bf16.mxu0 0
      %1989 = vmatmul.mubr.bf16.gmra.mrb[0].mxu0 %v398
      %v1990 = vpop.f32.mrb[0].mxu0
      %v1991 = vadd.f32 0.0, %v1990
      %v1992 = vpop.f32.mrb[0].mxu0
      %v1993 = vpop.f32.mrb[0].mxu0
      %v1994 = vadd.f32 0.0, %v1993
      %v1995 = vpop.f32.mrb[0].mxu0
      %1996 = vmatprep.mubr.bf16.mxu0 0
      %1997 = vmatmul.mubr.bf16.gmra.mrb[0].mxu0 %v1839
      %v1998 = vpop.f32.mrb[0].mxu0
      %v1999 = vadd.f32 0.0, %v1998
      %v2000 = vpop.f32.mrb[0].mxu0
      %v2001 = vpop.f32.mrb[0].mxu0
      %v2002 = vadd.f32 0.0, %v2001
      %v2003 = vpop.f32.mrb[0].mxu0
      %2004 = vdwg.mxu0
      %v2005 = vld [vmem:[#allocation2] sm:$0xff]
      %v2006 = vld [vmem:[#allocation2 + $0x8] sm:$0xff]
      %v2007 = vld [vmem:[#allocation2 + $0x10] sm:$0xff]
      %v2008 = vld [vmem:[#allocation2 + $0x18] sm:$0xff]
      %v2009 = vld [vmem:[#allocation2 + $0x20] sm:$0xff]
      %v2010 = vld [vmem:[#allocation2 + $0x28] sm:$0xff]
      %v2011 = vld [vmem:[#allocation2 + $0x30] sm:$0xff]
      %v2012 = vld [vmem:[#allocation2 + $0x38] sm:$0xff]
      %v2013 = vld [vmem:[#allocation2 + $0x40] sm:$0xff]
      %v2014 = vld [vmem:[#allocation2 + $0x48] sm:$0xff]
      %v2015 = vld [vmem:[#allocation2 + $0x50] sm:$0xff]
      %v2016 = vld [vmem:[#allocation2 + $0x58] sm:$0xff]
      %v2017 = vld [vmem:[#allocation2 + $0x60] sm:$0xff]
      %v2018 = vld [vmem:[#allocation2 + $0x68] sm:$0xff]
      %v2019 = vld [vmem:[#allocation2 + $0x70] sm:$0xff]
      %v2020 = vld [vmem:[#allocation2 + $0x78] sm:$0xff]
      %v2021 = vld [vmem:[#allocation2 + $0x80] sm:$0xff]
      %v2022 = vld [vmem:[#allocation2 + $0x88] sm:$0xff]
      %v2023 = vld [vmem:[#allocation2 + $0x90] sm:$0xff]
      %v2024 = vld [vmem:[#allocation2 + $0x98] sm:$0xff]
      %v2025 = vld [vmem:[#allocation2 + $0xa0] sm:$0xff]
      %v2026 = vld [vmem:[#allocation2 + $0xa8] sm:$0xff]
      %v2027 = vld [vmem:[#allocation2 + $0xb0] sm:$0xff]
      %v2028 = vld [vmem:[#allocation2 + $0xb8] sm:$0xff]
      %v2029 = vld [vmem:[#allocation2 + $0xc0] sm:$0xff]
      %v2030 = vld [vmem:[#allocation2 + $0xc8] sm:$0xff]
      %v2031 = vld [vmem:[#allocation2 + $0xd0] sm:$0xff]
      %v2032 = vld [vmem:[#allocation2 + $0xd8] sm:$0xff]
      %v2033 = vld [vmem:[#allocation2 + $0xe0] sm:$0xff]
      %v2034 = vld [vmem:[#allocation2 + $0xe8] sm:$0xff]
      %v2035 = vld [vmem:[#allocation2 + $0xf0] sm:$0xff]
      %v2036 = vld [vmem:[#allocation2 + $0xf8] sm:$0xff]
      %v2037 = vadd.f32 %v2005, %v1879
      %v2038 = vadd.f32 %v2006, %v1882
      %v2039 = vadd.f32 %v2007, %v1887
      %v2040 = vadd.f32 %v2008, %v1890
      %v2041 = vadd.f32 %v2009, %v1895
      %v2042 = vadd.f32 %v2010, %v1898
      %v2043 = vadd.f32 %v2011, %v1903
      %v2044 = vadd.f32 %v2012, %v1906
      %v2045 = vadd.f32 %v2013, %v1911
      %v2046 = vadd.f32 %v2014, %v1914
      %v2047 = vadd.f32 %v2015, %v1919
      %v2048 = vadd.f32 %v2016, %v1922
      %v2049 = vadd.f32 %v2017, %v1927
      %v2050 = vadd.f32 %v2018, %v1930
      %v2051 = vadd.f32 %v2019, %v1935
      %v2052 = vadd.f32 %v2020, %v1938
      %v2053 = vadd.f32 %v2021, %v1943
      %v2054 = vadd.f32 %v2022, %v1946
      %v2055 = vadd.f32 %v2023, %v1951
      %v2056 = vadd.f32 %v2024, %v1954
      %v2057 = vadd.f32 %v2025, %v1959
      %v2058 = vadd.f32 %v2026, %v1962
      %v2059 = vadd.f32 %v2027, %v1967
      %v2060 = vadd.f32 %v2028, %v1970
      %v2061 = vadd.f32 %v2029, %v1975
      %v2062 = vadd.f32 %v2030, %v1978
      %v2063 = vadd.f32 %v2031, %v1983
      %v2064 = vadd.f32 %v2032, %v1986
      %v2065 = vadd.f32 %v2033, %v1991
      %v2066 = vadd.f32 %v2034, %v1994
      %v2067 = vadd.f32 %v2035, %v1999
      %v2068 = vadd.f32 %v2036, %v2002
      %2069 = vst [vmem:[#allocation2] sm:$0xff] %v2037
      %2070 = vst [vmem:[#allocation2 + $0x8] sm:$0xff] %v2038
      %2071 = vst [vmem:[#allocation2 + $0x10] sm:$0xff] %v2039
      %2072 = vst [vmem:[#allocation2 + $0x18] sm:$0xff] %v2040
      %2073 = vst [vmem:[#allocation2 + $0x20] sm:$0xff] %v2041
      %2074 = vst [vmem:[#allocation2 + $0x28] sm:$0xff] %v2042
      %2075 = vst [vmem:[#allocation2 + $0x30] sm:$0xff] %v2043
      %2076 = vst [vmem:[#allocation2 + $0x38] sm:$0xff] %v2044
      %2077 = vst [vmem:[#allocation2 + $0x40] sm:$0xff] %v2045
      %2078 = vst [vmem:[#allocation2 + $0x48] sm:$0xff] %v2046
      %2079 = vst [vmem:[#allocation2 + $0x50] sm:$0xff] %v2047
      %2080 = vst [vmem:[#allocation2 + $0x58] sm:$0xff] %v2048
      %2081 = vst [vmem:[#allocation2 + $0x60] sm:$0xff] %v2049
      %2082 = vst [vmem:[#allocation2 + $0x68] sm:$0xff] %v2050
      %2083 = vst [vmem:[#allocation2 + $0x70] sm:$0xff] %v2051
      %2084 = vst [vmem:[#allocation2 + $0x78] sm:$0xff] %v2052
      %2085 = vst [vmem:[#allocation2 + $0x80] sm:$0xff] %v2053
      %2086 = vst [vmem:[#allocation2 + $0x88] sm:$0xff] %v2054
      %2087 = vst [vmem:[#allocation2 + $0x90] sm:$0xff] %v2055
      %2088 = vst [vmem:[#allocation2 + $0x98] sm:$0xff] %v2056
      %2089 = vst [vmem:[#allocation2 + $0xa0] sm:$0xff] %v2057
      %2090 = vst [vmem:[#allocation2 + $0xa8] sm:$0xff] %v2058
      %2091 = vst [vmem:[#allocation2 + $0xb0] sm:$0xff] %v2059
      %2092 = vst [vmem:[#allocation2 + $0xb8] sm:$0xff] %v2060
      %2093 = vst [vmem:[#allocation2 + $0xc0] sm:$0xff] %v2061
      %2094 = vst [vmem:[#allocation2 + $0xc8] sm:$0xff] %v2062
      %2095 = vst [vmem:[#allocation2 + $0xd0] sm:$0xff] %v2063
      %2096 = vst [vmem:[#allocation2 + $0xd8] sm:$0xff] %v2064
      %2097 = vst [vmem:[#allocation2 + $0xe0] sm:$0xff] %v2065
      %2098 = vst [vmem:[#allocation2 + $0xe8] sm:$0xff] %v2066
      %2099 = vst [vmem:[#allocation2 + $0xf0] sm:$0xff] %v2067
      %2100 = vst [vmem:[#allocation2 + $0xf8] sm:$0xff] %v2068
      %v2102 = vshrl.u32 %v264, 16
      %v2104 = vrot.slane %v2102, 4
      %v2105 = vshll.u32 %v264, 16
      %v2107 = vrot.slane %v2105, 5
      %v2108 = vor.u32 %v2104, %v2107
      %v2109 = vrot.slane %v2108, 4
      %v2111 = vshll.u32 %v265, 16
      %v2113 = vrot.slane %v2111, 5
      %v2114 = vsel %vm599, %v2109, %v2113
      %v2115 = vshrl.u32 %v265, 16
      %v2117 = vrot.slane %v2115, 4
      %v2118 = vor.u32 %v2117, %v2113
      %v2119 = vrot.slane %v2118, 4
      %v2121 = vshll.u32 %v266, 16
      %v2123 = vrot.slane %v2121, 5
      %v2124 = vsel %vm599, %v2119, %v2123
      %s2125 = scalar_lea.vmem %s1, 8
      %v2126 = vld [vmem:[%s2125] sm:$0x3]
      %v2127 = vunpack.c.l.b16 %v2114
      %v2128 = vunpack.c.l.b16 %v2124
      %v2129 = vpack.c.b16 %v2128, %v2127
      %v2131 = vsel %vm351, %v2129, 0
      %v2134 = vsel %vm400, %v2126, 0
      %2136 = vmatprep.subr.bf16.mxu0 0
      %2137 = vmatpush1.bf16.msra.mxu0 %v2134
      %2138 = vmatprep.subr.bf16.mxu0 0
      %2139 = vmatpush1.bf16.msra.mxu0 0
      %2140 = vmatprep.subr.bf16.mxu0 0
      %2141 = vmatpush1.bf16.msra.mxu0 0
      %2142 = vmatprep.subr.bf16.mxu0 0
      %2143 = vmatpush1.bf16.msra.mxu0 0
      %2144 = vmatprep.subr.bf16.mxu0 0
      %2145 = vmatpush1.bf16.msra.mxu0 0
      %2146 = vmatprep.subr.bf16.mxu0 0
      %2147 = vmatpush1.bf16.msra.mxu0 0
      %2148 = vmatprep.subr.bf16.mxu0 0
      %2149 = vmatpush1.bf16.msra.mxu0 0
      %2150 = vmatprep.subr.bf16.mxu0 0
      %2151 = vmatpush1.bf16.msra.mxu0 0
      %2152 = vmatprep.subr.bf16.mxu0 0
      %2153 = vmatpush1.bf16.msra.mxu0 0
      %2154 = vmatprep.subr.bf16.mxu0 0
      %2155 = vmatpush1.bf16.msra.mxu0 0
      %2156 = vmatprep.subr.bf16.mxu0 0
      %2157 = vmatpush1.bf16.msra.mxu0 0
      %2158 = vmatprep.subr.bf16.mxu0 0
      %2159 = vmatpush1.bf16.msra.mxu0 0
      %2160 = vmatprep.subr.bf16.mxu0 0
      %2161 = vmatpush1.bf16.msra.mxu0 0
      %2162 = vmatprep.subr.bf16.mxu0 0
      %2163 = vmatpush1.bf16.msra.mxu0 0
      %2164 = vmatprep.subr.bf16.mxu0 0
      %2165 = vmatpush1.bf16.msra.mxu0 0
      %2166 = vmatprep.subr.bf16.mxu0 0
      %2167 = vmatpush1.bf16.msra.mxu0 0
      %2168 = vmatprep.mubr.bf16.mxu0 0
      %2169 = vmatmul.mubr.bf16.gmra.mrb[0].mxu0 %v1038
      %v2170 = vpop.f32.mrb[0].mxu0
      %v2171 = vadd.f32 0.0, %v2170
      %v2172 = vpop.f32.mrb[0].mxu0
      %v2173 = vpop.f32.mrb[0].mxu0
      %v2174 = vadd.f32 0.0, %v2173
      %v2175 = vpop.f32.mrb[0].mxu0
      %2176 = vmatprep.mubr.bf16.mxu0 0
      %2177 = vmatmul.mubr.bf16.gmra.mrb[0].mxu0 %v1041
      %v2178 = vpop.f32.mrb[0].mxu0
      %v2179 = vadd.f32 0.0, %v2178
      %v2180 = vpop.f32.mrb[0].mxu0
      %v2181 = vpop.f32.mrb[0].mxu0
      %v2182 = vadd.f32 0.0, %v2181
      %v2183 = vpop.f32.mrb[0].mxu0
      %2184 = vmatprep.mubr.bf16.mxu0 0
      %2185 = vmatmul.mubr.bf16.gmra.mrb[0].mxu0 %v1044
      %v2186 = vpop.f32.mrb[0].mxu0
      %v2187 = vadd.f32 0.0, %v2186
      %v2188 = vpop.f32.mrb[0].mxu0
      %v2189 = vpop.f32.mrb[0].mxu0
      %v2190 = vadd.f32 0.0, %v2189
      %v2191 = vpop.f32.mrb[0].mxu0
      %2192 = vmatprep.mubr.bf16.mxu0 0
      %2193 = vmatmul.mubr.bf16.gmra.mrb[0].mxu0 %v1047
      %v2194 = vpop.f32.mrb[0].mxu0
      %v2195 = vadd.f32 0.0, %v2194
      %v2196 = vpop.f32.mrb[0].mxu0
      %v2197 = vpop.f32.mrb[0].mxu0
      %v2198 = vadd.f32 0.0, %v2197
      %v2199 = vpop.f32.mrb[0].mxu0
      %2200 = vmatprep.mubr.bf16.mxu0 0
      %2201 = vmatmul.mubr.bf16.gmra.mrb[0].mxu0 %v1050
      %v2202 = vpop.f32.mrb[0].mxu0
      %v2203 = vadd.f32 0.0, %v2202
      %v2204 = vpop.f32.mrb[0].mxu0
      %v2205 = vpop.f32.mrb[0].mxu0
      %v2206 = vadd.f32 0.0, %v2205
      %v2207 = vpop.f32.mrb[0].mxu0
      %2208 = vmatprep.mubr.bf16.mxu0 0
      %2209 = vmatmul.mubr.bf16.gmra.mrb[0].mxu0 %v1053
      %v2210 = vpop.f32.mrb[0].mxu0
      %v2211 = vadd.f32 0.0, %v2210
      %v2212 = vpop.f32.mrb[0].mxu0
      %v2213 = vpop.f32.mrb[0].mxu0
      %v2214 = vadd.f32 0.0, %v2213
      %v2215 = vpop.f32.mrb[0].mxu0
      %2216 = vmatprep.mubr.bf16.mxu0 0
      %2217 = vmatmul.mubr.bf16.gmra.mrb[0].mxu0 %v1056
      %v2218 = vpop.f32.mrb[0].mxu0
      %v2219 = vadd.f32 0.0, %v2218
      %v2220 = vpop.f32.mrb[0].mxu0
      %v2221 = vpop.f32.mrb[0].mxu0
      %v2222 = vadd.f32 0.0, %v2221
      %v2223 = vpop.f32.mrb[0].mxu0
      %2224 = vmatprep.mubr.bf16.mxu0 0
      %2225 = vmatmul.mubr.bf16.gmra.mrb[0].mxu0 %v1059
      %v2226 = vpop.f32.mrb[0].mxu0
      %v2227 = vadd.f32 0.0, %v2226
      %v2228 = vpop.f32.mrb[0].mxu0
      %v2229 = vpop.f32.mrb[0].mxu0
      %v2230 = vadd.f32 0.0, %v2229
      %v2231 = vpop.f32.mrb[0].mxu0
      %2232 = vmatprep.mubr.bf16.mxu0 0
      %2233 = vmatmul.mubr.bf16.gmra.mrb[0].mxu0 %v1062
      %v2234 = vpop.f32.mrb[0].mxu0
      %v2235 = vadd.f32 0.0, %v2234
      %v2236 = vpop.f32.mrb[0].mxu0
      %v2237 = vpop.f32.mrb[0].mxu0
      %v2238 = vadd.f32 0.0, %v2237
      %v2239 = vpop.f32.mrb[0].mxu0
      %2240 = vmatprep.mubr.bf16.mxu0 0
      %2241 = vmatmul.mubr.bf16.gmra.mrb[0].mxu0 %v1065
      %v2242 = vpop.f32.mrb[0].mxu0
      %v2243 = vadd.f32 0.0, %v2242
      %v2244 = vpop.f32.mrb[0].mxu0
      %v2245 = vpop.f32.mrb[0].mxu0
      %v2246 = vadd.f32 0.0, %v2245
      %v2247 = vpop.f32.mrb[0].mxu0
      %2248 = vmatprep.mubr.bf16.mxu0 0
      %2249 = vmatmul.mubr.bf16.gmra.mrb[0].mxu0 %v1068
      %v2250 = vpop.f32.mrb[0].mxu0
      %v2251 = vadd.f32 0.0, %v2250
      %v2252 = vpop.f32.mrb[0].mxu0
      %v2253 = vpop.f32.mrb[0].mxu0
      %v2254 = vadd.f32 0.0, %v2253
      %v2255 = vpop.f32.mrb[0].mxu0
      %2256 = vmatprep.mubr.bf16.mxu0 0
      %2257 = vmatmul.mubr.bf16.gmra.mrb[0].mxu0 %v1071
      %v2258 = vpop.f32.mrb[0].mxu0
      %v2259 = vadd.f32 0.0, %v2258
      %v2260 = vpop.f32.mrb[0].mxu0
      %v2261 = vpop.f32.mrb[0].mxu0
      %v2262 = vadd.f32 0.0, %v2261
      %v2263 = vpop.f32.mrb[0].mxu0
      %2264 = vmatprep.mubr.bf16.mxu0 0
      %2265 = vmatmul.mubr.bf16.gmra.mrb[0].mxu0 %v1074
      %v2266 = vpop.f32.mrb[0].mxu0
      %v2267 = vadd.f32 0.0, %v2266
      %v2268 = vpop.f32.mrb[0].mxu0
      %v2269 = vpop.f32.mrb[0].mxu0
      %v2270 = vadd.f32 0.0, %v2269
      %v2271 = vpop.f32.mrb[0].mxu0
      %2272 = vmatprep.mubr.bf16.mxu0 0
      %2273 = vmatmul.mubr.bf16.gmra.mrb[0].mxu0 %v1077
      %v2274 = vpop.f32.mrb[0].mxu0
      %v2275 = vadd.f32 0.0, %v2274
      %v2276 = vpop.f32.mrb[0].mxu0
      %v2277 = vpop.f32.mrb[0].mxu0
      %v2278 = vadd.f32 0.0, %v2277
      %v2279 = vpop.f32.mrb[0].mxu0
      %2280 = vmatprep.mubr.bf16.mxu0 0
      %2281 = vmatmul.mubr.bf16.gmra.mrb[0].mxu0 %v1080
      %v2282 = vpop.f32.mrb[0].mxu0
      %v2283 = vadd.f32 0.0, %v2282
      %v2284 = vpop.f32.mrb[0].mxu0
      %v2285 = vpop.f32.mrb[0].mxu0
      %v2286 = vadd.f32 0.0, %v2285
      %v2287 = vpop.f32.mrb[0].mxu0
      %2288 = vmatprep.mubr.bf16.mxu0 0
      %2289 = vmatmul.mubr.bf16.gmra.mrb[0].mxu0 %v2131
      %v2290 = vpop.f32.mrb[0].mxu0
      %v2291 = vadd.f32 0.0, %v2290
      %v2292 = vpop.f32.mrb[0].mxu0
      %v2293 = vpop.f32.mrb[0].mxu0
      %v2294 = vadd.f32 0.0, %v2293
      %v2295 = vpop.f32.mrb[0].mxu0
      %2296 = vdwg.mxu0
      %v2297 = vld [vmem:[#allocation2] sm:$0xff]
      %v2298 = vld [vmem:[#allocation2 + $0x8] sm:$0xff]
      %v2299 = vld [vmem:[#allocation2 + $0x10] sm:$0xff]
      %v2300 = vld [vmem:[#allocation2 + $0x18] sm:$0xff]
      %v2301 = vld [vmem:[#allocation2 + $0x20] sm:$0xff]
      %v2302 = vld [vmem:[#allocation2 + $0x28] sm:$0xff]
      %v2303 = vld [vmem:[#allocation2 + $0x30] sm:$0xff]
      %v2304 = vld [vmem:[#allocation2 + $0x38] sm:$0xff]
      %v2305 = vld [vmem:[#allocation2 + $0x40] sm:$0xff]
      %v2306 = vld [vmem:[#allocation2 + $0x48] sm:$0xff]
      %v2307 = vld [vmem:[#allocation2 + $0x50] sm:$0xff]
      %v2308 = vld [vmem:[#allocation2 + $0x58] sm:$0xff]
      %v2309 = vld [vmem:[#allocation2 + $0x60] sm:$0xff]
      %v2310 = vld [vmem:[#allocation2 + $0x68] sm:$0xff]
      %v2311 = vld [vmem:[#allocation2 + $0x70] sm:$0xff]
      %v2312 = vld [vmem:[#allocation2 + $0x78] sm:$0xff]
      %v2313 = vld [vmem:[#allocation2 + $0x80] sm:$0xff]
      %v2314 = vld [vmem:[#allocation2 + $0x88] sm:$0xff]
      %v2315 = vld [vmem:[#allocation2 + $0x90] sm:$0xff]
      %v2316 = vld [vmem:[#allocation2 + $0x98] sm:$0xff]
      %v2317 = vld [vmem:[#allocation2 + $0xa0] sm:$0xff]
      %v2318 = vld [vmem:[#allocation2 + $0xa8] sm:$0xff]
      %v2319 = vld [vmem:[#allocation2 + $0xb0] sm:$0xff]
      %v2320 = vld [vmem:[#allocation2 + $0xb8] sm:$0xff]
      %v2321 = vld [vmem:[#allocation2 + $0xc0] sm:$0xff]
      %v2322 = vld [vmem:[#allocation2 + $0xc8] sm:$0xff]
      %v2323 = vld [vmem:[#allocation2 + $0xd0] sm:$0xff]
      %v2324 = vld [vmem:[#allocation2 + $0xd8] sm:$0xff]
      %v2325 = vld [vmem:[#allocation2 + $0xe0] sm:$0xff]
      %v2326 = vld [vmem:[#allocation2 + $0xe8] sm:$0xff]
      %v2327 = vld [vmem:[#allocation2 + $0xf0] sm:$0xff]
      %v2328 = vld [vmem:[#allocation2 + $0xf8] sm:$0xff]
      %v2329 = vadd.f32 %v2297, %v2171
      %v2330 = vadd.f32 %v2298, %v2174
      %v2331 = vadd.f32 %v2299, %v2179
      %v2332 = vadd.f32 %v2300, %v2182
      %v2333 = vadd.f32 %v2301, %v2187
      %v2334 = vadd.f32 %v2302, %v2190
      %v2335 = vadd.f32 %v2303, %v2195
      %v2336 = vadd.f32 %v2304, %v2198
      %v2337 = vadd.f32 %v2305, %v2203
      %v2338 = vadd.f32 %v2306, %v2206
      %v2339 = vadd.f32 %v2307, %v2211
      %v2340 = vadd.f32 %v2308, %v2214
      %v2341 = vadd.f32 %v2309, %v2219
      %v2342 = vadd.f32 %v2310, %v2222
      %v2343 = vadd.f32 %v2311, %v2227
      %v2344 = vadd.f32 %v2312, %v2230
      %v2345 = vadd.f32 %v2313, %v2235
      %v2346 = vadd.f32 %v2314, %v2238
      %v2347 = vadd.f32 %v2315, %v2243
      %v2348 = vadd.f32 %v2316, %v2246
      %v2349 = vadd.f32 %v2317, %v2251
      %v2350 = vadd.f32 %v2318, %v2254
      %v2351 = vadd.f32 %v2319, %v2259
      %v2352 = vadd.f32 %v2320, %v2262
      %v2353 = vadd.f32 %v2321, %v2267
      %v2354 = vadd.f32 %v2322, %v2270
      %v2355 = vadd.f32 %v2323, %v2275
      %v2356 = vadd.f32 %v2324, %v2278
      %v2357 = vadd.f32 %v2325, %v2283
      %v2358 = vadd.f32 %v2326, %v2286
      %v2359 = vadd.f32 %v2327, %v2291
      %v2360 = vadd.f32 %v2328, %v2294
      %2361 = vst [vmem:[#allocation2] sm:$0xff] %v2329
      %2362 = vst [vmem:[#allocation2 + $0x8] sm:$0xff] %v2330
      %2363 = vst [vmem:[#allocation2 + $0x10] sm:$0xff] %v2331
      %2364 = vst [vmem:[#allocation2 + $0x18] sm:$0xff] %v2332
      %2365 = vst [vmem:[#allocation2 + $0x20] sm:$0xff] %v2333
      %2366 = vst [vmem:[#allocation2 + $0x28] sm:$0xff] %v2334
      %2367 = vst [vmem:[#allocation2 + $0x30] sm:$0xff] %v2335
      %2368 = vst [vmem:[#allocation2 + $0x38] sm:$0xff] %v2336
      %2369 = vst [vmem:[#allocation2 + $0x40] sm:$0xff] %v2337
      %2370 = vst [vmem:[#allocation2 + $0x48] sm:$0xff] %v2338
      %2371 = vst [vmem:[#allocation2 + $0x50] sm:$0xff] %v2339
      %2372 = vst [vmem:[#allocation2 + $0x58] sm:$0xff] %v2340
      %2373 = vst [vmem:[#allocation2 + $0x60] sm:$0xff] %v2341
      %2374 = vst [vmem:[#allocation2 + $0x68] sm:$0xff] %v2342
      %2375 = vst [vmem:[#allocation2 + $0x70] sm:$0xff] %v2343
      %2376 = vst [vmem:[#allocation2 + $0x78] sm:$0xff] %v2344
      %2377 = vst [vmem:[#allocation2 + $0x80] sm:$0xff] %v2345
      %2378 = vst [vmem:[#allocation2 + $0x88] sm:$0xff] %v2346
      %2379 = vst [vmem:[#allocation2 + $0x90] sm:$0xff] %v2347
      %2380 = vst [vmem:[#allocation2 + $0x98] sm:$0xff] %v2348
      %2381 = vst [vmem:[#allocation2 + $0xa0] sm:$0xff] %v2349
      %2382 = vst [vmem:[#allocation2 + $0xa8] sm:$0xff] %v2350
      %2383 = vst [vmem:[#allocation2 + $0xb0] sm:$0xff] %v2351
      %2384 = vst [vmem:[#allocation2 + $0xb8] sm:$0xff] %v2352
      %2385 = vst [vmem:[#allocation2 + $0xc0] sm:$0xff] %v2353
      %2386 = vst [vmem:[#allocation2 + $0xc8] sm:$0xff] %v2354
      %2387 = vst [vmem:[#allocation2 + $0xd0] sm:$0xff] %v2355
      %2388 = vst [vmem:[#allocation2 + $0xd8] sm:$0xff] %v2356
      %2389 = vst [vmem:[#allocation2 + $0xe0] sm:$0xff] %v2357
      %2390 = vst [vmem:[#allocation2 + $0xe8] sm:$0xff] %v2358
      %2391 = vst [vmem:[#allocation2 + $0xf0] sm:$0xff] %v2359
      %2392 = vst [vmem:[#allocation2 + $0xf8] sm:$0xff] %v2360
      %v2394 = vrot.slane %v264, 5
      %v2395 = vrot.slane %v2394, 4
      %v2396 = vrot.slane %v265, 5
      %v2397 = vsel %vm1360, %v2395, %v2396
      %v2398 = vrot.slane %v2396, 4
      %v2399 = vrot.slane %v266, 5
      %v2400 = vsel %vm1360, %v2398, %v2399
      %s2401 = scalar_lea.vmem %s1, 10
      %v2402 = vld [vmem:[%s2401] sm:$0x3]
      %v2403 = vunpack.c.l.b16 %v2397
      %v2404 = vunpack.c.l.b16 %v2400
      %v2405 = vpack.c.b16 %v2404, %v2403
      %v2407 = vsel %vm351, %v2405, 0
      %v2410 = vsel %vm400, %v2402, 0
      %2412 = vmatprep.subr.bf16.mxu0 0
      %2413 = vmatpush1.bf16.msra.mxu0 %v2410
      %2414 = vmatprep.subr.bf16.mxu0 0
      %2415 = vmatpush1.bf16.msra.mxu0 0
      %2416 = vmatprep.subr.bf16.mxu0 0
      %2417 = vmatpush1.bf16.msra.mxu0 0
      %2418 = vmatprep.subr.bf16.mxu0 0
      %2419 = vmatpush1.bf16.msra.mxu0 0
      %2420 = vmatprep.subr.bf16.mxu0 0
      %2421 = vmatpush1.bf16.msra.mxu0 0
      %2422 = vmatprep.subr.bf16.mxu0 0
      %2423 = vmatpush1.bf16.msra.mxu0 0
      %2424 = vmatprep.subr.bf16.mxu0 0
      %2425 = vmatpush1.bf16.msra.mxu0 0
      %2426 = vmatprep.subr.bf16.mxu0 0
      %2427 = vmatpush1.bf16.msra.mxu0 0
      %2428 = vmatprep.subr.bf16.mxu0 0
      %2429 = vmatpush1.bf16.msra.mxu0 0
      %2430 = vmatprep.subr.bf16.mxu0 0
      %2431 = vmatpush1.bf16.msra.mxu0 0
      %2432 = vmatprep.subr.bf16.mxu0 0
      %2433 = vmatpush1.bf16.msra.mxu0 0
      %2434 = vmatprep.subr.bf16.mxu0 0
      %2435 = vmatpush1.bf16.msra.mxu0 0
      %2436 = vmatprep.subr.bf16.mxu0 0
      %2437 = vmatpush1.bf16.msra.mxu0 0
      %2438 = vmatprep.subr.bf16.mxu0 0
      %2439 = vmatpush1.bf16.msra.mxu0 0
      %2440 = vmatprep.subr.bf16.mxu0 0
      %2441 = vmatpush1.bf16.msra.mxu0 0
      %2442 = vmatprep.subr.bf16.mxu0 0
      %2443 = vmatpush1.bf16.msra.mxu0 0
      %2444 = vmatprep.mubr.bf16.mxu0 0
      %2445 = vmatmul.mubr.bf16.gmra.mrb[0].mxu0 %v1527
      %v2446 = vpop.f32.mrb[0].mxu0
      %v2447 = vadd.f32 0.0, %v2446
      %v2448 = vpop.f32.mrb[0].mxu0
      %v2449 = vpop.f32.mrb[0].mxu0
      %v2450 = vadd.f32 0.0, %v2449
      %v2451 = vpop.f32.mrb[0].mxu0
      %2452 = vmatprep.mubr.bf16.mxu0 0
      %2453 = vmatmul.mubr.bf16.gmra.mrb[0].mxu0 %v1530
      %v2454 = vpop.f32.mrb[0].mxu0
      %v2455 = vadd.f32 0.0, %v2454
      %v2456 = vpop.f32.mrb[0].mxu0
      %v2457 = vpop.f32.mrb[0].mxu0
      %v2458 = vadd.f32 0.0, %v2457
      %v2459 = vpop.f32.mrb[0].mxu0
      %2460 = vmatprep.mubr.bf16.mxu0 0
      %2461 = vmatmul.mubr.bf16.gmra.mrb[0].mxu0 %v1533
      %v2462 = vpop.f32.mrb[0].mxu0
      %v2463 = vadd.f32 0.0, %v2462
      %v2464 = vpop.f32.mrb[0].mxu0
      %v2465 = vpop.f32.mrb[0].mxu0
      %v2466 = vadd.f32 0.0, %v2465
      %v2467 = vpop.f32.mrb[0].mxu0
      %2468 = vmatprep.mubr.bf16.mxu0 0
      %2469 = vmatmul.mubr.bf16.gmra.mrb[0].mxu0 %v1536
      %v2470 = vpop.f32.mrb[0].mxu0
      %v2471 = vadd.f32 0.0, %v2470
      %v2472 = vpop.f32.mrb[0].mxu0
      %v2473 = vpop.f32.mrb[0].mxu0
      %v2474 = vadd.f32 0.0, %v2473
      %v2475 = vpop.f32.mrb[0].mxu0
      %2476 = vmatprep.mubr.bf16.mxu0 0
      %2477 = vmatmul.mubr.bf16.gmra.mrb[0].mxu0 %v1539
      %v2478 = vpop.f32.mrb[0].mxu0
      %v2479 = vadd.f32 0.0, %v2478
      %v2480 = vpop.f32.mrb[0].mxu0
      %v2481 = vpop.f32.mrb[0].mxu0
      %v2482 = vadd.f32 0.0, %v2481
      %v2483 = vpop.f32.mrb[0].mxu0
      %2484 = vmatprep.mubr.bf16.mxu0 0
      %2485 = vmatmul.mubr.bf16.gmra.mrb[0].mxu0 %v1542
      %v2486 = vpop.f32.mrb[0].mxu0
      %v2487 = vadd.f32 0.0, %v2486
      %v2488 = vpop.f32.mrb[0].mxu0
      %v2489 = vpop.f32.mrb[0].mxu0
      %v2490 = vadd.f32 0.0, %v2489
      %v2491 = vpop.f32.mrb[0].mxu0
      %2492 = vmatprep.mubr.bf16.mxu0 0
      %2493 = vmatmul.mubr.bf16.gmra.mrb[0].mxu0 %v1545
      %v2494 = vpop.f32.mrb[0].mxu0
      %v2495 = vadd.f32 0.0, %v2494
      %v2496 = vpop.f32.mrb[0].mxu0
      %v2497 = vpop.f32.mrb[0].mxu0
      %v2498 = vadd.f32 0.0, %v2497
      %v2499 = vpop.f32.mrb[0].mxu0
      %2500 = vmatprep.mubr.bf16.mxu0 0
      %2501 = vmatmul.mubr.bf16.gmra.mrb[0].mxu0 %v1548
      %v2502 = vpop.f32.mrb[0].mxu0
      %v2503 = vadd.f32 0.0, %v2502
      %v2504 = vpop.f32.mrb[0].mxu0
      %v2505 = vpop.f32.mrb[0].mxu0
      %v2506 = vadd.f32 0.0, %v2505
      %v2507 = vpop.f32.mrb[0].mxu0
      %2508 = vmatprep.mubr.bf16.mxu0 0
      %2509 = vmatmul.mubr.bf16.gmra.mrb[0].mxu0 %v1551
      %v2510 = vpop.f32.mrb[0].mxu0
      %v2511 = vadd.f32 0.0, %v2510
      %v2512 = vpop.f32.mrb[0].mxu0
      %v2513 = vpop.f32.mrb[0].mxu0
      %v2514 = vadd.f32 0.0, %v2513
      %v2515 = vpop.f32.mrb[0].mxu0
      %2516 = vmatprep.mubr.bf16.mxu0 0
      %2517 = vmatmul.mubr.bf16.gmra.mrb[0].mxu0 %v1554
      %v2518 = vpop.f32.mrb[0].mxu0
      %v2519 = vadd.f32 0.0, %v2518
      %v2520 = vpop.f32.mrb[0].mxu0
      %v2521 = vpop.f32.mrb[0].mxu0
      %v2522 = vadd.f32 0.0, %v2521
      %v2523 = vpop.f32.mrb[0].mxu0
      %2524 = vmatprep.mubr.bf16.mxu0 0
      %2525 = vmatmul.mubr.bf16.gmra.mrb[0].mxu0 %v1557
      %v2526 = vpop.f32.mrb[0].mxu0
      %v2527 = vadd.f32 0.0, %v2526
      %v2528 = vpop.f32.mrb[0].mxu0
      %v2529 = vpop.f32.mrb[0].mxu0
      %v2530 = vadd.f32 0.0, %v2529
      %v2531 = vpop.f32.mrb[0].mxu0
      %2532 = vmatprep.mubr.bf16.mxu0 0
      %2533 = vmatmul.mubr.bf16.gmra.mrb[0].mxu0 %v1560
      %v2534 = vpop.f32.mrb[0].mxu0
      %v2535 = vadd.f32 0.0, %v2534
      %v2536 = vpop.f32.mrb[0].mxu0
      %v2537 = vpop.f32.mrb[0].mxu0
      %v2538 = vadd.f32 0.0, %v2537
      %v2539 = vpop.f32.mrb[0].mxu0
      %2540 = vmatprep.mubr.bf16.mxu0 0
      %2541 = vmatmul.mubr.bf16.gmra.mrb[0].mxu0 %v1563
      %v2542 = vpop.f32.mrb[0].mxu0
      %v2543 = vadd.f32 0.0, %v2542
      %v2544 = vpop.f32.mrb[0].mxu0
      %v2545 = vpop.f32.mrb[0].mxu0
      %v2546 = vadd.f32 0.0, %v2545
      %v2547 = vpop.f32.mrb[0].mxu0
      %2548 = vmatprep.mubr.bf16.mxu0 0
      %2549 = vmatmul.mubr.bf16.gmra.mrb[0].mxu0 %v1566
      %v2550 = vpop.f32.mrb[0].mxu0
      %v2551 = vadd.f32 0.0, %v2550
      %v2552 = vpop.f32.mrb[0].mxu0
      %v2553 = vpop.f32.mrb[0].mxu0
      %v2554 = vadd.f32 0.0, %v2553
      %v2555 = vpop.f32.mrb[0].mxu0
      %2556 = vmatprep.mubr.bf16.mxu0 0
      %2557 = vmatmul.mubr.bf16.gmra.mrb[0].mxu0 %v1569
      %v2558 = vpop.f32.mrb[0].mxu0
      %v2559 = vadd.f32 0.0, %v2558
      %v2560 = vpop.f32.mrb[0].mxu0
      %v2561 = vpop.f32.mrb[0].mxu0
      %v2562 = vadd.f32 0.0, %v2561
      %v2563 = vpop.f32.mrb[0].mxu0
      %2564 = vmatprep.mubr.bf16.mxu0 0
      %2565 = vmatmul.mubr.bf16.gmra.mrb[0].mxu0 %v2407
      %v2566 = vpop.f32.mrb[0].mxu0
      %v2567 = vadd.f32 0.0, %v2566
      %v2568 = vpop.f32.mrb[0].mxu0
      %v2569 = vpop.f32.mrb[0].mxu0
      %v2570 = vadd.f32 0.0, %v2569
      %v2571 = vpop.f32.mrb[0].mxu0
      %2572 = vdwg.mxu0
      %v2573 = vld [vmem:[#allocation2] sm:$0xff]
      %v2574 = vld [vmem:[#allocation2 + $0x8] sm:$0xff]
      %v2575 = vld [vmem:[#allocation2 + $0x10] sm:$0xff]
      %v2576 = vld [vmem:[#allocation2 + $0x18] sm:$0xff]
      %v2577 = vld [vmem:[#allocation2 + $0x20] sm:$0xff]
      %v2578 = vld [vmem:[#allocation2 + $0x28] sm:$0xff]
      %v2579 = vld [vmem:[#allocation2 + $0x30] sm:$0xff]
      %v2580 = vld [vmem:[#allocation2 + $0x38] sm:$0xff]
      %v2581 = vld [vmem:[#allocation2 + $0x40] sm:$0xff]
      %v2582 = vld [vmem:[#allocation2 + $0x48] sm:$0xff]
      %v2583 = vld [vmem:[#allocation2 + $0x50] sm:$0xff]
      %v2584 = vld [vmem:[#allocation2 + $0x58] sm:$0xff]
      %v2585 = vld [vmem:[#allocation2 + $0x60] sm:$0xff]
      %v2586 = vld [vmem:[#allocation2 + $0x68] sm:$0xff]
      %v2587 = vld [vmem:[#allocation2 + $0x70] sm:$0xff]
      %v2588 = vld [vmem:[#allocation2 + $0x78] sm:$0xff]
      %v2589 = vld [vmem:[#allocation2 + $0x80] sm:$0xff]
      %v2590 = vld [vmem:[#allocation2 + $0x88] sm:$0xff]
      %v2591 = vld [vmem:[#allocation2 + $0x90] sm:$0xff]
      %v2592 = vld [vmem:[#allocation2 + $0x98] sm:$0xff]
      %v2593 = vld [vmem:[#allocation2 + $0xa0] sm:$0xff]
      %v2594 = vld [vmem:[#allocation2 + $0xa8] sm:$0xff]
      %v2595 = vld [vmem:[#allocation2 + $0xb0] sm:$0xff]
      %v2596 = vld [vmem:[#allocation2 + $0xb8] sm:$0xff]
      %v2597 = vld [vmem:[#allocation2 + $0xc0] sm:$0xff]
      %v2598 = vld [vmem:[#allocation2 + $0xc8] sm:$0xff]
      %v2599 = vld [vmem:[#allocation2 + $0xd0] sm:$0xff]
      %v2600 = vld [vmem:[#allocation2 + $0xd8] sm:$0xff]
      %v2601 = vld [vmem:[#allocation2 + $0xe0] sm:$0xff]
      %v2602 = vld [vmem:[#allocation2 + $0xe8] sm:$0xff]
      %v2603 = vld [vmem:[#allocation2 + $0xf0] sm:$0xff]
      %v2604 = vld [vmem:[#allocation2 + $0xf8] sm:$0xff]
      %v2605 = vadd.f32 %v2573, %v2447
      %v2606 = vadd.f32 %v2574, %v2450
      %v2607 = vadd.f32 %v2575, %v2455
      %v2608 = vadd.f32 %v2576, %v2458
      %v2609 = vadd.f32 %v2577, %v2463
      %v2610 = vadd.f32 %v2578, %v2466
      %v2611 = vadd.f32 %v2579, %v2471
      %v2612 = vadd.f32 %v2580, %v2474
      %v2613 = vadd.f32 %v2581, %v2479
      %v2614 = vadd.f32 %v2582, %v2482
      %v2615 = vadd.f32 %v2583, %v2487
      %v2616 = vadd.f32 %v2584, %v2490
      %v2617 = vadd.f32 %v2585, %v2495
      %v2618 = vadd.f32 %v2586, %v2498
      %v2619 = vadd.f32 %v2587, %v2503
      %v2620 = vadd.f32 %v2588, %v2506
      %v2621 = vadd.f32 %v2589, %v2511
      %v2622 = vadd.f32 %v2590, %v2514
      %v2623 = vadd.f32 %v2591, %v2519
      %v2624 = vadd.f32 %v2592, %v2522
      %v2625 = vadd.f32 %v2593, %v2527
      %v2626 = vadd.f32 %v2594, %v2530
      %v2627 = vadd.f32 %v2595, %v2535
      %v2628 = vadd.f32 %v2596, %v2538
      %v2629 = vadd.f32 %v2597, %v2543
      %v2630 = vadd.f32 %v2598, %v2546
      %v2631 = vadd.f32 %v2599, %v2551
      %v2632 = vadd.f32 %v2600, %v2554
      %v2633 = vadd.f32 %v2601, %v2559
      %v2634 = vadd.f32 %v2602, %v2562
      %v2635 = vadd.f32 %v2603, %v2567
      %v2636 = vadd.f32 %v2604, %v2570
      %2637 = vst [vmem:[#allocation2] sm:$0xff] %v2605
      %2638 = vst [vmem:[#allocation2 + $0x8] sm:$0xff] %v2606
      %2639 = vst [vmem:[#allocation2 + $0x10] sm:$0xff] %v2607
      %2640 = vst [vmem:[#allocation2 + $0x18] sm:$0xff] %v2608
      %2641 = vst [vmem:[#allocation2 + $0x20] sm:$0xff] %v2609
      %2642 = vst [vmem:[#allocation2 + $0x28] sm:$0xff] %v2610
      %2643 = vst [vmem:[#allocation2 + $0x30] sm:$0xff] %v2611
      %2644 = vst [vmem:[#allocation2 + $0x38] sm:$0xff] %v2612
      %2645 = vst [vmem:[#allocation2 + $0x40] sm:$0xff] %v2613
      %2646 = vst [vmem:[#allocation2 + $0x48] sm:$0xff] %v2614
      %2647 = vst [vmem:[#allocation2 + $0x50] sm:$0xff] %v2615
      %2648 = vst [vmem:[#allocation2 + $0x58] sm:$0xff] %v2616
      %2649 = vst [vmem:[#allocation2 + $0x60] sm:$0xff] %v2617
      %2650 = vst [vmem:[#allocation2 + $0x68] sm:$0xff] %v2618
      %2651 = vst [vmem:[#allocation2 + $0x70] sm:$0xff] %v2619
      %2652 = vst [vmem:[#allocation2 + $0x78] sm:$0xff] %v2620
      %2653 = vst [vmem:[#allocation2 + $0x80] sm:$0xff] %v2621
      %2654 = vst [vmem:[#allocation2 + $0x88] sm:$0xff] %v2622
      %2655 = vst [vmem:[#allocation2 + $0x90] sm:$0xff] %v2623
      %2656 = vst [vmem:[#allocation2 + $0x98] sm:$0xff] %v2624
      %2657 = vst [vmem:[#allocation2 + $0xa0] sm:$0xff] %v2625
      %2658 = vst [vmem:[#allocation2 + $0xa8] sm:$0xff] %v2626
      %2659 = vst [vmem:[#allocation2 + $0xb0] sm:$0xff] %v2627
      %2660 = vst [vmem:[#allocation2 + $0xb8] sm:$0xff] %v2628
      %2661 = vst [vmem:[#allocation2 + $0xc0] sm:$0xff] %v2629
      %2662 = vst [vmem:[#allocation2 + $0xc8] sm:$0xff] %v2630
      %2663 = vst [vmem:[#allocation2 + $0xd0] sm:$0xff] %v2631
      %2664 = vst [vmem:[#allocation2 + $0xd8] sm:$0xff] %v2632
      %2665 = vst [vmem:[#allocation2 + $0xe0] sm:$0xff] %v2633
      %2666 = vst [vmem:[#allocation2 + $0xe8] sm:$0xff] %v2634
      %2667 = vst [vmem:[#allocation2 + $0xf0] sm:$0xff] %v2635
      %2668 = vst [vmem:[#allocation2 + $0xf8] sm:$0xff] %v2636
      %s2669 = scalar_lea.vmem %s1, 12
      %v2670 = vld [vmem:[%s2669] sm:$0x3]
      %v2673 = vunpack.c.l.b16 %v267
      %v2674 = vunpack.c.l.b16 %v268
      %v2675 = vpack.c.b16 %v2674, %v2673
      %v2677 = vsel %vm351, %v2675, 0
      %v2680 = vsel %vm400, %v2670, 0
      %2682 = vmatprep.subr.bf16.mxu0 0
      %2683 = vmatpush1.bf16.msra.mxu0 %v2680
      %2684 = vmatprep.subr.bf16.mxu0 0
      %2685 = vmatpush1.bf16.msra.mxu0 0
      %2686 = vmatprep.subr.bf16.mxu0 0
      %2687 = vmatpush1.bf16.msra.mxu0 0
      %2688 = vmatprep.subr.bf16.mxu0 0
      %2689 = vmatpush1.bf16.msra.mxu0 0
      %2690 = vmatprep.subr.bf16.mxu0 0
      %2691 = vmatpush1.bf16.msra.mxu0 0
      %2692 = vmatprep.subr.bf16.mxu0 0
      %2693 = vmatpush1.bf16.msra.mxu0 0
      %2694 = vmatprep.subr.bf16.mxu0 0
      %2695 = vmatpush1.bf16.msra.mxu0 0
      %2696 = vmatprep.subr.bf16.mxu0 0
      %2697 = vmatpush1.bf16.msra.mxu0 0
      %2698 = vmatprep.subr.bf16.mxu0 0
      %2699 = vmatpush1.bf16.msra.mxu0 0
      %2700 = vmatprep.subr.bf16.mxu0 0
      %2701 = vmatpush1.bf16.msra.mxu0 0
      %2702 = vmatprep.subr.bf16.mxu0 0
      %2703 = vmatpush1.bf16.msra.mxu0 0
      %2704 = vmatprep.subr.bf16.mxu0 0
      %2705 = vmatpush1.bf16.msra.mxu0 0
      %2706 = vmatprep.subr.bf16.mxu0 0
      %2707 = vmatpush1.bf16.msra.mxu0 0
      %2708 = vmatprep.subr.bf16.mxu0 0
      %2709 = vmatpush1.bf16.msra.mxu0 0
      %2710 = vmatprep.subr.bf16.mxu0 0
      %2711 = vmatpush1.bf16.msra.mxu0 0
      %2712 = vmatprep.subr.bf16.mxu0 0
      %2713 = vmatpush1.bf16.msra.mxu0 0
      %2714 = vmatprep.mubr.bf16.mxu0 0
      %2715 = vmatmul.mubr.bf16.gmra.mrb[0].mxu0 %v359
      %v2716 = vpop.f32.mrb[0].mxu0
      %v2717 = vadd.f32 0.0, %v2716
      %v2718 = vpop.f32.mrb[0].mxu0
      %v2719 = vpop.f32.mrb[0].mxu0
      %v2720 = vadd.f32 0.0, %v2719
      %v2721 = vpop.f32.mrb[0].mxu0
      %2722 = vmatprep.mubr.bf16.mxu0 0
      %2723 = vmatmul.mubr.bf16.gmra.mrb[0].mxu0 %v362
      %v2724 = vpop.f32.mrb[0].mxu0
      %v2725 = vadd.f32 0.0, %v2724
      %v2726 = vpop.f32.mrb[0].mxu0
      %v2727 = vpop.f32.mrb[0].mxu0
      %v2728 = vadd.f32 0.0, %v2727
      %v2729 = vpop.f32.mrb[0].mxu0
      %2730 = vmatprep.mubr.bf16.mxu0 0
      %2731 = vmatmul.mubr.bf16.gmra.mrb[0].mxu0 %v365
      %v2732 = vpop.f32.mrb[0].mxu0
      %v2733 = vadd.f32 0.0, %v2732
      %v2734 = vpop.f32.mrb[0].mxu0
      %v2735 = vpop.f32.mrb[0].mxu0
      %v2736 = vadd.f32 0.0, %v2735
      %v2737 = vpop.f32.mrb[0].mxu0
      %2738 = vmatprep.mubr.bf16.mxu0 0
      %2739 = vmatmul.mubr.bf16.gmra.mrb[0].mxu0 %v368
      %v2740 = vpop.f32.mrb[0].mxu0
      %v2741 = vadd.f32 0.0, %v2740
      %v2742 = vpop.f32.mrb[0].mxu0
      %v2743 = vpop.f32.mrb[0].mxu0
      %v2744 = vadd.f32 0.0, %v2743
      %v2745 = vpop.f32.mrb[0].mxu0
      %2746 = vmatprep.mubr.bf16.mxu0 0
      %2747 = vmatmul.mubr.bf16.gmra.mrb[0].mxu0 %v371
      %v2748 = vpop.f32.mrb[0].mxu0
      %v2749 = vadd.f32 0.0, %v2748
      %v2750 = vpop.f32.mrb[0].mxu0
      %v2751 = vpop.f32.mrb[0].mxu0
      %v2752 = vadd.f32 0.0, %v2751
      %v2753 = vpop.f32.mrb[0].mxu0
      %2754 = vmatprep.mubr.bf16.mxu0 0
      %2755 = vmatmul.mubr.bf16.gmra.mrb[0].mxu0 %v374
      %v2756 = vpop.f32.mrb[0].mxu0
      %v2757 = vadd.f32 0.0, %v2756
      %v2758 = vpop.f32.mrb[0].mxu0
      %v2759 = vpop.f32.mrb[0].mxu0
      %v2760 = vadd.f32 0.0, %v2759
      %v2761 = vpop.f32.mrb[0].mxu0
      %2762 = vmatprep.mubr.bf16.mxu0 0
      %2763 = vmatmul.mubr.bf16.gmra.mrb[0].mxu0 %v377
      %v2764 = vpop.f32.mrb[0].mxu0
      %v2765 = vadd.f32 0.0, %v2764
      %v2766 = vpop.f32.mrb[0].mxu0
      %v2767 = vpop.f32.mrb[0].mxu0
      %v2768 = vadd.f32 0.0, %v2767
      %v2769 = vpop.f32.mrb[0].mxu0
      %2770 = vmatprep.mubr.bf16.mxu0 0
      %2771 = vmatmul.mubr.bf16.gmra.mrb[0].mxu0 %v380
      %v2772 = vpop.f32.mrb[0].mxu0
      %v2773 = vadd.f32 0.0, %v2772
      %v2774 = vpop.f32.mrb[0].mxu0
      %v2775 = vpop.f32.mrb[0].mxu0
      %v2776 = vadd.f32 0.0, %v2775
      %v2777 = vpop.f32.mrb[0].mxu0
      %2778 = vmatprep.mubr.bf16.mxu0 0
      %2779 = vmatmul.mubr.bf16.gmra.mrb[0].mxu0 %v383
      %v2780 = vpop.f32.mrb[0].mxu0
      %v2781 = vadd.f32 0.0, %v2780
      %v2782 = vpop.f32.mrb[0].mxu0
      %v2783 = vpop.f32.mrb[0].mxu0
      %v2784 = vadd.f32 0.0, %v2783
      %v2785 = vpop.f32.mrb[0].mxu0
      %2786 = vmatprep.mubr.bf16.mxu0 0
      %2787 = vmatmul.mubr.bf16.gmra.mrb[0].mxu0 %v386
      %v2788 = vpop.f32.mrb[0].mxu0
      %v2789 = vadd.f32 0.0, %v2788
      %v2790 = vpop.f32.mrb[0].mxu0
      %v2791 = vpop.f32.mrb[0].mxu0
      %v2792 = vadd.f32 0.0, %v2791
      %v2793 = vpop.f32.mrb[0].mxu0
      %2794 = vmatprep.mubr.bf16.mxu0 0
      %2795 = vmatmul.mubr.bf16.gmra.mrb[0].mxu0 %v389
      %v2796 = vpop.f32.mrb[0].mxu0
      %v2797 = vadd.f32 0.0, %v2796
      %v2798 = vpop.f32.mrb[0].mxu0
      %v2799 = vpop.f32.mrb[0].mxu0
      %v2800 = vadd.f32 0.0, %v2799
      %v2801 = vpop.f32.mrb[0].mxu0
      %2802 = vmatprep.mubr.bf16.mxu0 0
      %2803 = vmatmul.mubr.bf16.gmra.mrb[0].mxu0 %v392
      %v2804 = vpop.f32.mrb[0].mxu0
      %v2805 = vadd.f32 0.0, %v2804
      %v2806 = vpop.f32.mrb[0].mxu0
      %v2807 = vpop.f32.mrb[0].mxu0
      %v2808 = vadd.f32 0.0, %v2807
      %v2809 = vpop.f32.mrb[0].mxu0
      %2810 = vmatprep.mubr.bf16.mxu0 0
      %2811 = vmatmul.mubr.bf16.gmra.mrb[0].mxu0 %v395
      %v2812 = vpop.f32.mrb[0].mxu0
      %v2813 = vadd.f32 0.0, %v2812
      %v2814 = vpop.f32.mrb[0].mxu0
      %v2815 = vpop.f32.mrb[0].mxu0
      %v2816 = vadd.f32 0.0, %v2815
      %v2817 = vpop.f32.mrb[0].mxu0
      %2818 = vmatprep.mubr.bf16.mxu0 0
      %2819 = vmatmul.mubr.bf16.gmra.mrb[0].mxu0 %v398
      %v2820 = vpop.f32.mrb[0].mxu0
      %v2821 = vadd.f32 0.0, %v2820
      %v2822 = vpop.f32.mrb[0].mxu0
      %v2823 = vpop.f32.mrb[0].mxu0
      %v2824 = vadd.f32 0.0, %v2823
      %v2825 = vpop.f32.mrb[0].mxu0
      %2826 = vmatprep.mubr.bf16.mxu0 0
      %2827 = vmatmul.mubr.bf16.gmra.mrb[0].mxu0 %v1839
      %v2828 = vpop.f32.mrb[0].mxu0
      %v2829 = vadd.f32 0.0, %v2828
      %v2830 = vpop.f32.mrb[0].mxu0
      %v2831 = vpop.f32.mrb[0].mxu0
      %v2832 = vadd.f32 0.0, %v2831
      %v2833 = vpop.f32.mrb[0].mxu0
      %2834 = vmatprep.mubr.bf16.mxu0 0
      %2835 = vmatmul.mubr.bf16.gmra.mrb[0].mxu0 %v2677
      %v2836 = vpop.f32.mrb[0].mxu0
      %v2837 = vadd.f32 0.0, %v2836
      %v2838 = vpop.f32.mrb[0].mxu0
      %v2839 = vpop.f32.mrb[0].mxu0
      %v2840 = vadd.f32 0.0, %v2839
      %v2841 = vpop.f32.mrb[0].mxu0
      %2842 = vdwg.mxu0
      %v2843 = vld [vmem:[#allocation2] sm:$0xff]
      %v2844 = vld [vmem:[#allocation2 + $0x8] sm:$0xff]
      %v2845 = vld [vmem:[#allocation2 + $0x10] sm:$0xff]
      %v2846 = vld [vmem:[#allocation2 + $0x18] sm:$0xff]
      %v2847 = vld [vmem:[#allocation2 + $0x20] sm:$0xff]
      %v2848 = vld [vmem:[#allocation2 + $0x28] sm:$0xff]
      %v2849 = vld [vmem:[#allocation2 + $0x30] sm:$0xff]
      %v2850 = vld [vmem:[#allocation2 + $0x38] sm:$0xff]
      %v2851 = vld [vmem:[#allocation2 + $0x40] sm:$0xff]
      %v2852 = vld [vmem:[#allocation2 + $0x48] sm:$0xff]
      %v2853 = vld [vmem:[#allocation2 + $0x50] sm:$0xff]
      %v2854 = vld [vmem:[#allocation2 + $0x58] sm:$0xff]
      %v2855 = vld [vmem:[#allocation2 + $0x60] sm:$0xff]
      %v2856 = vld [vmem:[#allocation2 + $0x68] sm:$0xff]
      %v2857 = vld [vmem:[#allocation2 + $0x70] sm:$0xff]
      %v2858 = vld [vmem:[#allocation2 + $0x78] sm:$0xff]
      %v2859 = vld [vmem:[#allocation2 + $0x80] sm:$0xff]
      %v2860 = vld [vmem:[#allocation2 + $0x88] sm:$0xff]
      %v2861 = vld [vmem:[#allocation2 + $0x90] sm:$0xff]
      %v2862 = vld [vmem:[#allocation2 + $0x98] sm:$0xff]
      %v2863 = vld [vmem:[#allocation2 + $0xa0] sm:$0xff]
      %v2864 = vld [vmem:[#allocation2 + $0xa8] sm:$0xff]
      %v2865 = vld [vmem:[#allocation2 + $0xb0] sm:$0xff]
      %v2866 = vld [vmem:[#allocation2 + $0xb8] sm:$0xff]
      %v2867 = vld [vmem:[#allocation2 + $0xc0] sm:$0xff]
      %v2868 = vld [vmem:[#allocation2 + $0xc8] sm:$0xff]
      %v2869 = vld [vmem:[#allocation2 + $0xd0] sm:$0xff]
      %v2870 = vld [vmem:[#allocation2 + $0xd8] sm:$0xff]
      %v2871 = vld [vmem:[#allocation2 + $0xe0] sm:$0xff]
      %v2872 = vld [vmem:[#allocation2 + $0xe8] sm:$0xff]
      %v2873 = vld [vmem:[#allocation2 + $0xf0] sm:$0xff]
      %v2874 = vld [vmem:[#allocation2 + $0xf8] sm:$0xff]
      %v2875 = vadd.f32 %v2843, %v2717
      %v2876 = vadd.f32 %v2844, %v2720
      %v2877 = vadd.f32 %v2845, %v2725
      %v2878 = vadd.f32 %v2846, %v2728
      %v2879 = vadd.f32 %v2847, %v2733
      %v2880 = vadd.f32 %v2848, %v2736
      %v2881 = vadd.f32 %v2849, %v2741
      %v2882 = vadd.f32 %v2850, %v2744
      %v2883 = vadd.f32 %v2851, %v2749
      %v2884 = vadd.f32 %v2852, %v2752
      %v2885 = vadd.f32 %v2853, %v2757
      %v2886 = vadd.f32 %v2854, %v2760
      %v2887 = vadd.f32 %v2855, %v2765
      %v2888 = vadd.f32 %v2856, %v2768
      %v2889 = vadd.f32 %v2857, %v2773
      %v2890 = vadd.f32 %v2858, %v2776
      %v2891 = vadd.f32 %v2859, %v2781
      %v2892 = vadd.f32 %v2860, %v2784
      %v2893 = vadd.f32 %v2861, %v2789
      %v2894 = vadd.f32 %v2862, %v2792
      %v2895 = vadd.f32 %v2863, %v2797
      %v2896 = vadd.f32 %v2864, %v2800
      %v2897 = vadd.f32 %v2865, %v2805
      %v2898 = vadd.f32 %v2866, %v2808
      %v2899 = vadd.f32 %v2867, %v2813
      %v2900 = vadd.f32 %v2868, %v2816
      %v2901 = vadd.f32 %v2869, %v2821
      %v2902 = vadd.f32 %v2870, %v2824
      %v2903 = vadd.f32 %v2871, %v2829
      %v2904 = vadd.f32 %v2872, %v2832
      %v2905 = vadd.f32 %v2873, %v2837
      %v2906 = vadd.f32 %v2874, %v2840
      %2907 = vst [vmem:[#allocation2] sm:$0xff] %v2875
      %2908 = vst [vmem:[#allocation2 + $0x8] sm:$0xff] %v2876
      %2909 = vst [vmem:[#allocation2 + $0x10] sm:$0xff] %v2877
      %2910 = vst [vmem:[#allocation2 + $0x18] sm:$0xff] %v2878
      %2911 = vst [vmem:[#allocation2 + $0x20] sm:$0xff] %v2879
      %2912 = vst [vmem:[#allocation2 + $0x28] sm:$0xff] %v2880
      %2913 = vst [vmem:[#allocation2 + $0x30] sm:$0xff] %v2881
      %2914 = vst [vmem:[#allocation2 + $0x38] sm:$0xff] %v2882
      %2915 = vst [vmem:[#allocation2 + $0x40] sm:$0xff] %v2883
      %2916 = vst [vmem:[#allocation2 + $0x48] sm:$0xff] %v2884
      %2917 = vst [vmem:[#allocation2 + $0x50] sm:$0xff] %v2885
      %2918 = vst [vmem:[#allocation2 + $0x58] sm:$0xff] %v2886
      %2919 = vst [vmem:[#allocation2 + $0x60] sm:$0xff] %v2887
      %2920 = vst [vmem:[#allocation2 + $0x68] sm:$0xff] %v2888
      %2921 = vst [vmem:[#allocation2 + $0x70] sm:$0xff] %v2889
      %2922 = vst [vmem:[#allocation2 + $0x78] sm:$0xff] %v2890
      %2923 = vst [vmem:[#allocation2 + $0x80] sm:$0xff] %v2891
      %2924 = vst [vmem:[#allocation2 + $0x88] sm:$0xff] %v2892
      %2925 = vst [vmem:[#allocation2 + $0x90] sm:$0xff] %v2893
      %2926 = vst [vmem:[#allocation2 + $0x98] sm:$0xff] %v2894
      %2927 = vst [vmem:[#allocation2 + $0xa0] sm:$0xff] %v2895
      %2928 = vst [vmem:[#allocation2 + $0xa8] sm:$0xff] %v2896
      %2929 = vst [vmem:[#allocation2 + $0xb0] sm:$0xff] %v2897
      %2930 = vst [vmem:[#allocation2 + $0xb8] sm:$0xff] %v2898
      %2931 = vst [vmem:[#allocation2 + $0xc0] sm:$0xff] %v2899
      %2932 = vst [vmem:[#allocation2 + $0xc8] sm:$0xff] %v2900
      %2933 = vst [vmem:[#allocation2 + $0xd0] sm:$0xff] %v2901
      %2934 = vst [vmem:[#allocation2 + $0xd8] sm:$0xff] %v2902
      %2935 = vst [vmem:[#allocation2 + $0xe0] sm:$0xff] %v2903
      %2936 = vst [vmem:[#allocation2 + $0xe8] sm:$0xff] %v2904
      %2937 = vst [vmem:[#allocation2 + $0xf0] sm:$0xff] %v2905
      %2938 = vst [vmem:[#allocation2 + $0xf8] sm:$0xff] %v2906
      %v2940 = vshrl.u32 %v267, 16
      %v2942 = vrot.slane %v2940, 4
      %v2943 = vshll.u32 %v267, 16
      %v2945 = vrot.slane %v2943, 5
      %v2946 = vor.u32 %v2942, %v2945
      %v2947 = vrot.slane %v2946, 4
      %v2949 = vshll.u32 %v268, 16
      %v2951 = vrot.slane %v2949, 5
      %v2952 = vsel %vm599, %v2947, %v2951
      %v2953 = vshrl.u32 %v268, 16
      %v2955 = vrot.slane %v2953, 4
      %v2956 = vor.u32 %v2955, %v2951
      %v2957 = vrot.slane %v2956, 4
      %v2959 = vshll.u32 %v269, 16
      %v2961 = vrot.slane %v2959, 5
      %v2962 = vsel %vm599, %v2957, %v2961
      %s2963 = scalar_lea.vmem %s1, 14
      %v2964 = vld [vmem:[%s2963] sm:$0x3]
      %v2965 = vunpack.c.l.b16 %v2952
      %v2966 = vunpack.c.l.b16 %v2962
      %v2967 = vpack.c.b16 %v2966, %v2965
      %v2969 = vsel %vm351, %v2967, 0
      %v2972 = vsel %vm400, %v2964, 0
      %2974 = vmatprep.subr.bf16.mxu0 0
      %2975 = vmatpush1.bf16.msra.mxu0 %v2972
      %2976 = vmatprep.subr.bf16.mxu0 0
      %2977 = vmatpush1.bf16.msra.mxu0 0
      %2978 = vmatprep.subr.bf16.mxu0 0
      %2979 = vmatpush1.bf16.msra.mxu0 0
      %2980 = vmatprep.subr.bf16.mxu0 0
      %2981 = vmatpush1.bf16.msra.mxu0 0
      %2982 = vmatprep.subr.bf16.mxu0 0
      %2983 = vmatpush1.bf16.msra.mxu0 0
      %2984 = vmatprep.subr.bf16.mxu0 0
      %2985 = vmatpush1.bf16.msra.mxu0 0
      %2986 = vmatprep.subr.bf16.mxu0 0
      %2987 = vmatpush1.bf16.msra.mxu0 0
      %2988 = vmatprep.subr.bf16.mxu0 0
      %2989 = vmatpush1.bf16.msra.mxu0 0
      %2990 = vmatprep.subr.bf16.mxu0 0
      %2991 = vmatpush1.bf16.msra.mxu0 0
      %2992 = vmatprep.subr.bf16.mxu0 0
      %2993 = vmatpush1.bf16.msra.mxu0 0
      %2994 = vmatprep.subr.bf16.mxu0 0
      %2995 = vmatpush1.bf16.msra.mxu0 0
      %2996 = vmatprep.subr.bf16.mxu0 0
      %2997 = vmatpush1.bf16.msra.mxu0 0
      %2998 = vmatprep.subr.bf16.mxu0 0
      %2999 = vmatpush1.bf16.msra.mxu0 0
      %3000 = vmatprep.subr.bf16.mxu0 0
      %3001 = vmatpush1.bf16.msra.mxu0 0
      %3002 = vmatprep.subr.bf16.mxu0 0
      %3003 = vmatpush1.bf16.msra.mxu0 0
      %3004 = vmatprep.subr.bf16.mxu0 0
      %3005 = vmatpush1.bf16.msra.mxu0 0
      %3006 = vmatprep.mubr.bf16.mxu0 0
      %3007 = vmatmul.mubr.bf16.gmra.mrb[0].mxu0 %v1041
      %v3008 = vpop.f32.mrb[0].mxu0
      %v3009 = vadd.f32 0.0, %v3008
      %v3010 = vpop.f32.mrb[0].mxu0
      %v3011 = vpop.f32.mrb[0].mxu0
      %v3012 = vadd.f32 0.0, %v3011
      %v3013 = vpop.f32.mrb[0].mxu0
      %3014 = vmatprep.mubr.bf16.mxu0 0
      %3015 = vmatmul.mubr.bf16.gmra.mrb[0].mxu0 %v1044
      %v3016 = vpop.f32.mrb[0].mxu0
      %v3017 = vadd.f32 0.0, %v3016
      %v3018 = vpop.f32.mrb[0].mxu0
      %v3019 = vpop.f32.mrb[0].mxu0
      %v3020 = vadd.f32 0.0, %v3019
      %v3021 = vpop.f32.mrb[0].mxu0
      %3022 = vmatprep.mubr.bf16.mxu0 0
      %3023 = vmatmul.mubr.bf16.gmra.mrb[0].mxu0 %v1047
      %v3024 = vpop.f32.mrb[0].mxu0
      %v3025 = vadd.f32 0.0, %v3024
      %v3026 = vpop.f32.mrb[0].mxu0
      %v3027 = vpop.f32.mrb[0].mxu0
      %v3028 = vadd.f32 0.0, %v3027
      %v3029 = vpop.f32.mrb[0].mxu0
      %3030 = vmatprep.mubr.bf16.mxu0 0
      %3031 = vmatmul.mubr.bf16.gmra.mrb[0].mxu0 %v1050
      %v3032 = vpop.f32.mrb[0].mxu0
      %v3033 = vadd.f32 0.0, %v3032
      %v3034 = vpop.f32.mrb[0].mxu0
      %v3035 = vpop.f32.mrb[0].mxu0
      %v3036 = vadd.f32 0.0, %v3035
      %v3037 = vpop.f32.mrb[0].mxu0
      %3038 = vmatprep.mubr.bf16.mxu0 0
      %3039 = vmatmul.mubr.bf16.gmra.mrb[0].mxu0 %v1053
      %v3040 = vpop.f32.mrb[0].mxu0
      %v3041 = vadd.f32 0.0, %v3040
      %v3042 = vpop.f32.mrb[0].mxu0
      %v3043 = vpop.f32.mrb[0].mxu0
      %v3044 = vadd.f32 0.0, %v3043
      %v3045 = vpop.f32.mrb[0].mxu0
      %3046 = vmatprep.mubr.bf16.mxu0 0
      %3047 = vmatmul.mubr.bf16.gmra.mrb[0].mxu0 %v1056
      %v3048 = vpop.f32.mrb[0].mxu0
      %v3049 = vadd.f32 0.0, %v3048
      %v3050 = vpop.f32.mrb[0].mxu0
      %v3051 = vpop.f32.mrb[0].mxu0
      %v3052 = vadd.f32 0.0, %v3051
      %v3053 = vpop.f32.mrb[0].mxu0
      %3054 = vmatprep.mubr.bf16.mxu0 0
      %3055 = vmatmul.mubr.bf16.gmra.mrb[0].mxu0 %v1059
      %v3056 = vpop.f32.mrb[0].mxu0
      %v3057 = vadd.f32 0.0, %v3056
      %v3058 = vpop.f32.mrb[0].mxu0
      %v3059 = vpop.f32.mrb[0].mxu0
      %v3060 = vadd.f32 0.0, %v3059
      %v3061 = vpop.f32.mrb[0].mxu0
      %3062 = vmatprep.mubr.bf16.mxu0 0
      %3063 = vmatmul.mubr.bf16.gmra.mrb[0].mxu0 %v1062
      %v3064 = vpop.f32.mrb[0].mxu0
      %v3065 = vadd.f32 0.0, %v3064
      %v3066 = vpop.f32.mrb[0].mxu0
      %v3067 = vpop.f32.mrb[0].mxu0
      %v3068 = vadd.f32 0.0, %v3067
      %v3069 = vpop.f32.mrb[0].mxu0
      %3070 = vmatprep.mubr.bf16.mxu0 0
      %3071 = vmatmul.mubr.bf16.gmra.mrb[0].mxu0 %v1065
      %v3072 = vpop.f32.mrb[0].mxu0
      %v3073 = vadd.f32 0.0, %v3072
      %v3074 = vpop.f32.mrb[0].mxu0
      %v3075 = vpop.f32.mrb[0].mxu0
      %v3076 = vadd.f32 0.0, %v3075
      %v3077 = vpop.f32.mrb[0].mxu0
      %3078 = vmatprep.mubr.bf16.mxu0 0
      %3079 = vmatmul.mubr.bf16.gmra.mrb[0].mxu0 %v1068
      %v3080 = vpop.f32.mrb[0].mxu0
      %v3081 = vadd.f32 0.0, %v3080
      %v3082 = vpop.f32.mrb[0].mxu0
      %v3083 = vpop.f32.mrb[0].mxu0
      %v3084 = vadd.f32 0.0, %v3083
      %v3085 = vpop.f32.mrb[0].mxu0
      %3086 = vmatprep.mubr.bf16.mxu0 0
      %3087 = vmatmul.mubr.bf16.gmra.mrb[0].mxu0 %v1071
      %v3088 = vpop.f32.mrb[0].mxu0
      %v3089 = vadd.f32 0.0, %v3088
      %v3090 = vpop.f32.mrb[0].mxu0
      %v3091 = vpop.f32.mrb[0].mxu0
      %v3092 = vadd.f32 0.0, %v3091
      %v3093 = vpop.f32.mrb[0].mxu0
      %3094 = vmatprep.mubr.bf16.mxu0 0
      %3095 = vmatmul.mubr.bf16.gmra.mrb[0].mxu0 %v1074
      %v3096 = vpop.f32.mrb[0].mxu0
      %v3097 = vadd.f32 0.0, %v3096
      %v3098 = vpop.f32.mrb[0].mxu0
      %v3099 = vpop.f32.mrb[0].mxu0
      %v3100 = vadd.f32 0.0, %v3099
      %v3101 = vpop.f32.mrb[0].mxu0
      %3102 = vmatprep.mubr.bf16.mxu0 0
      %3103 = vmatmul.mubr.bf16.gmra.mrb[0].mxu0 %v1077
      %v3104 = vpop.f32.mrb[0].mxu0
      %v3105 = vadd.f32 0.0, %v3104
      %v3106 = vpop.f32.mrb[0].mxu0
      %v3107 = vpop.f32.mrb[0].mxu0
      %v3108 = vadd.f32 0.0, %v3107
      %v3109 = vpop.f32.mrb[0].mxu0
      %3110 = vmatprep.mubr.bf16.mxu0 0
      %3111 = vmatmul.mubr.bf16.gmra.mrb[0].mxu0 %v1080
      %v3112 = vpop.f32.mrb[0].mxu0
      %v3113 = vadd.f32 0.0, %v3112
      %v3114 = vpop.f32.mrb[0].mxu0
      %v3115 = vpop.f32.mrb[0].mxu0
      %v3116 = vadd.f32 0.0, %v3115
      %v3117 = vpop.f32.mrb[0].mxu0
      %3118 = vmatprep.mubr.bf16.mxu0 0
      %3119 = vmatmul.mubr.bf16.gmra.mrb[0].mxu0 %v2131
      %v3120 = vpop.f32.mrb[0].mxu0
      %v3121 = vadd.f32 0.0, %v3120
      %v3122 = vpop.f32.mrb[0].mxu0
      %v3123 = vpop.f32.mrb[0].mxu0
      %v3124 = vadd.f32 0.0, %v3123
      %v3125 = vpop.f32.mrb[0].mxu0
      %3126 = vmatprep.mubr.bf16.mxu0 0
      %3127 = vmatmul.mubr.bf16.gmra.mrb[0].mxu0 %v2969
      %v3128 = vpop.f32.mrb[0].mxu0
      %v3129 = vadd.f32 0.0, %v3128
      %v3130 = vpop.f32.mrb[0].mxu0
      %v3131 = vpop.f32.mrb[0].mxu0
      %v3132 = vadd.f32 0.0, %v3131
      %v3133 = vpop.f32.mrb[0].mxu0
      %3134 = vdwg.mxu0
      %v3135 = vld [vmem:[#allocation2] sm:$0xff]
      %v3136 = vld [vmem:[#allocation2 + $0x8] sm:$0xff]
      %v3137 = vld [vmem:[#allocation2 + $0x10] sm:$0xff]
      %v3138 = vld [vmem:[#allocation2 + $0x18] sm:$0xff]
      %v3139 = vld [vmem:[#allocation2 + $0x20] sm:$0xff]
      %v3140 = vld [vmem:[#allocation2 + $0x28] sm:$0xff]
      %v3141 = vld [vmem:[#allocation2 + $0x30] sm:$0xff]
      %v3142 = vld [vmem:[#allocation2 + $0x38] sm:$0xff]
      %v3143 = vld [vmem:[#allocation2 + $0x40] sm:$0xff]
      %v3144 = vld [vmem:[#allocation2 + $0x48] sm:$0xff]
      %v3145 = vld [vmem:[#allocation2 + $0x50] sm:$0xff]
      %v3146 = vld [vmem:[#allocation2 + $0x58] sm:$0xff]
      %v3147 = vld [vmem:[#allocation2 + $0x60] sm:$0xff]
      %v3148 = vld [vmem:[#allocation2 + $0x68] sm:$0xff]
      %v3149 = vld [vmem:[#allocation2 + $0x70] sm:$0xff]
      %v3150 = vld [vmem:[#allocation2 + $0x78] sm:$0xff]
      %v3151 = vld [vmem:[#allocation2 + $0x80] sm:$0xff]
      %v3152 = vld [vmem:[#allocation2 + $0x88] sm:$0xff]
      %v3153 = vld [vmem:[#allocation2 + $0x90] sm:$0xff]
      %v3154 = vld [vmem:[#allocation2 + $0x98] sm:$0xff]
      %v3155 = vld [vmem:[#allocation2 + $0xa0] sm:$0xff]
      %v3156 = vld [vmem:[#allocation2 + $0xa8] sm:$0xff]
      %v3157 = vld [vmem:[#allocation2 + $0xb0] sm:$0xff]
      %v3158 = vld [vmem:[#allocation2 + $0xb8] sm:$0xff]
      %v3159 = vld [vmem:[#allocation2 + $0xc0] sm:$0xff]
      %v3160 = vld [vmem:[#allocation2 + $0xc8] sm:$0xff]
      %v3161 = vld [vmem:[#allocation2 + $0xd0] sm:$0xff]
      %v3162 = vld [vmem:[#allocation2 + $0xd8] sm:$0xff]
      %v3163 = vld [vmem:[#allocation2 + $0xe0] sm:$0xff]
      %v3164 = vld [vmem:[#allocation2 + $0xe8] sm:$0xff]
      %v3165 = vld [vmem:[#allocation2 + $0xf0] sm:$0xff]
      %v3166 = vld [vmem:[#allocation2 + $0xf8] sm:$0xff]
      %v3167 = vadd.f32 %v3135, %v3009
      %v3168 = vadd.f32 %v3136, %v3012
      %v3169 = vadd.f32 %v3137, %v3017
      %v3170 = vadd.f32 %v3138, %v3020
      %v3171 = vadd.f32 %v3139, %v3025
      %v3172 = vadd.f32 %v3140, %v3028
      %v3173 = vadd.f32 %v3141, %v3033
      %v3174 = vadd.f32 %v3142, %v3036
      %v3175 = vadd.f32 %v3143, %v3041
      %v3176 = vadd.f32 %v3144, %v3044
      %v3177 = vadd.f32 %v3145, %v3049
      %v3178 = vadd.f32 %v3146, %v3052
      %v3179 = vadd.f32 %v3147, %v3057
      %v3180 = vadd.f32 %v3148, %v3060
      %v3181 = vadd.f32 %v3149, %v3065
      %v3182 = vadd.f32 %v3150, %v3068
      %v3183 = vadd.f32 %v3151, %v3073
      %v3184 = vadd.f32 %v3152, %v3076
      %v3185 = vadd.f32 %v3153, %v3081
      %v3186 = vadd.f32 %v3154, %v3084
      %v3187 = vadd.f32 %v3155, %v3089
      %v3188 = vadd.f32 %v3156, %v3092
      %v3189 = vadd.f32 %v3157, %v3097
      %v3190 = vadd.f32 %v3158, %v3100
      %v3191 = vadd.f32 %v3159, %v3105
      %v3192 = vadd.f32 %v3160, %v3108
      %v3193 = vadd.f32 %v3161, %v3113
      %v3194 = vadd.f32 %v3162, %v3116
      %v3195 = vadd.f32 %v3163, %v3121
      %v3196 = vadd.f32 %v3164, %v3124
      %v3197 = vadd.f32 %v3165, %v3129
      %v3198 = vadd.f32 %v3166, %v3132
      %3199 = vst [vmem:[#allocation2] sm:$0xff] %v3167
      %3200 = vst [vmem:[#allocation2 + $0x8] sm:$0xff] %v3168
      %3201 = vst [vmem:[#allocation2 + $0x10] sm:$0xff] %v3169
      %3202 = vst [vmem:[#allocation2 + $0x18] sm:$0xff] %v3170
      %3203 = vst [vmem:[#allocation2 + $0x20] sm:$0xff] %v3171
      %3204 = vst [vmem:[#allocation2 + $0x28] sm:$0xff] %v3172
      %3205 = vst [vmem:[#allocation2 + $0x30] sm:$0xff] %v3173
      %3206 = vst [vmem:[#allocation2 + $0x38] sm:$0xff] %v3174
      %3207 = vst [vmem:[#allocation2 + $0x40] sm:$0xff] %v3175
      %3208 = vst [vmem:[#allocation2 + $0x48] sm:$0xff] %v3176
      %3209 = vst [vmem:[#allocation2 + $0x50] sm:$0xff] %v3177
      %3210 = vst [vmem:[#allocation2 + $0x58] sm:$0xff] %v3178
      %3211 = vst [vmem:[#allocation2 + $0x60] sm:$0xff] %v3179
      %3212 = vst [vmem:[#allocation2 + $0x68] sm:$0xff] %v3180
      %3213 = vst [vmem:[#allocation2 + $0x70] sm:$0xff] %v3181
      %3214 = vst [vmem:[#allocation2 + $0x78] sm:$0xff] %v3182
      %3215 = vst [vmem:[#allocation2 + $0x80] sm:$0xff] %v3183
      %3216 = vst [vmem:[#allocation2 + $0x88] sm:$0xff] %v3184
      %3217 = vst [vmem:[#allocation2 + $0x90] sm:$0xff] %v3185
      %3218 = vst [vmem:[#allocation2 + $0x98] sm:$0xff] %v3186
      %3219 = vst [vmem:[#allocation2 + $0xa0] sm:$0xff] %v3187
      %3220 = vst [vmem:[#allocation2 + $0xa8] sm:$0xff] %v3188
      %3221 = vst [vmem:[#allocation2 + $0xb0] sm:$0xff] %v3189
      %3222 = vst [vmem:[#allocation2 + $0xb8] sm:$0xff] %v3190
      %3223 = vst [vmem:[#allocation2 + $0xc0] sm:$0xff] %v3191
      %3224 = vst [vmem:[#allocation2 + $0xc8] sm:$0xff] %v3192
      %3225 = vst [vmem:[#allocation2 + $0xd0] sm:$0xff] %v3193
      %3226 = vst [vmem:[#allocation2 + $0xd8] sm:$0xff] %v3194
      %3227 = vst [vmem:[#allocation2 + $0xe0] sm:$0xff] %v3195
      %3228 = vst [vmem:[#allocation2 + $0xe8] sm:$0xff] %v3196
      %3229 = vst [vmem:[#allocation2 + $0xf0] sm:$0xff] %v3197
      %3230 = vst [vmem:[#allocation2 + $0xf8] sm:$0xff] %v3198
      %v3232 = vrot.slane %v267, 5
      %v3233 = vrot.slane %v3232, 4
      %v3234 = vrot.slane %v268, 5
      %v3235 = vsel %vm1360, %v3233, %v3234
      %v3236 = vrot.slane %v3234, 4
      %v3237 = vrot.slane %v269, 5
      %v3238 = vsel %vm1360, %v3236, %v3237
      %s3239 = scalar_lea.vmem %s1, 16
      %v3240 = vld [vmem:[%s3239] sm:$0x3]
      %v3241 = vunpack.c.l.b16 %v3235
      %v3242 = vunpack.c.l.b16 %v3238
      %v3243 = vpack.c.b16 %v3242, %v3241
      %v3245 = vsel %vm351, %v3243, 0
      %v3248 = vsel %vm400, %v3240, 0
      %3250 = vmatprep.subr.bf16.mxu0 0
      %3251 = vmatpush1.bf16.msra.mxu0 %v3248
      %3252 = vmatprep.subr.bf16.mxu0 0
      %3253 = vmatpush1.bf16.msra.mxu0 0
      %3254 = vmatprep.subr.bf16.mxu0 0
      %3255 = vmatpush1.bf16.msra.mxu0 0
      %3256 = vmatprep.subr.bf16.mxu0 0
      %3257 = vmatpush1.bf16.msra.mxu0 0
      %3258 = vmatprep.subr.bf16.mxu0 0
      %3259 = vmatpush1.bf16.msra.mxu0 0
      %3260 = vmatprep.subr.bf16.mxu0 0
      %3261 = vmatpush1.bf16.msra.mxu0 0
      %3262 = vmatprep.subr.bf16.mxu0 0
      %3263 = vmatpush1.bf16.msra.mxu0 0
      %3264 = vmatprep.subr.bf16.mxu0 0
      %3265 = vmatpush1.bf16.msra.mxu0 0
      %3266 = vmatprep.subr.bf16.mxu0 0
      %3267 = vmatpush1.bf16.msra.mxu0 0
      %3268 = vmatprep.subr.bf16.mxu0 0
      %3269 = vmatpush1.bf16.msra.mxu0 0
      %3270 = vmatprep.subr.bf16.mxu0 0
      %3271 = vmatpush1.bf16.msra.mxu0 0
      %3272 = vmatprep.subr.bf16.mxu0 0
      %3273 = vmatpush1.bf16.msra.mxu0 0
      %3274 = vmatprep.subr.bf16.mxu0 0
      %3275 = vmatpush1.bf16.msra.mxu0 0
      %3276 = vmatprep.subr.bf16.mxu0 0
      %3277 = vmatpush1.bf16.msra.mxu0 0
      %3278 = vmatprep.subr.bf16.mxu0 0
      %3279 = vmatpush1.bf16.msra.mxu0 0
      %3280 = vmatprep.subr.bf16.mxu0 0
      %3281 = vmatpush1.bf16.msra.mxu0 0
      %3282 = vmatprep.mubr.bf16.mxu0 0
      %3283 = vmatmul.mubr.bf16.gmra.mrb[0].mxu0 %v1530
      %v3284 = vpop.f32.mrb[0].mxu0
      %v3285 = vadd.f32 0.0, %v3284
      %v3286 = vpop.f32.mrb[0].mxu0
      %v3287 = vpop.f32.mrb[0].mxu0
      %v3288 = vadd.f32 0.0, %v3287
      %v3289 = vpop.f32.mrb[0].mxu0
      %3290 = vmatprep.mubr.bf16.mxu0 0
      %3291 = vmatmul.mubr.bf16.gmra.mrb[0].mxu0 %v1533
      %v3292 = vpop.f32.mrb[0].mxu0
      %v3293 = vadd.f32 0.0, %v3292
      %v3294 = vpop.f32.mrb[0].mxu0
      %v3295 = vpop.f32.mrb[0].mxu0
      %v3296 = vadd.f32 0.0, %v3295
      %v3297 = vpop.f32.mrb[0].mxu0
      %3298 = vmatprep.mubr.bf16.mxu0 0
      %3299 = vmatmul.mubr.bf16.gmra.mrb[0].mxu0 %v1536
      %v3300 = vpop.f32.mrb[0].mxu0
      %v3301 = vadd.f32 0.0, %v3300
      %v3302 = vpop.f32.mrb[0].mxu0
      %v3303 = vpop.f32.mrb[0].mxu0
      %v3304 = vadd.f32 0.0, %v3303
      %v3305 = vpop.f32.mrb[0].mxu0
      %3306 = vmatprep.mubr.bf16.mxu0 0
      %3307 = vmatmul.mubr.bf16.gmra.mrb[0].mxu0 %v1539
      %v3308 = vpop.f32.mrb[0].mxu0
      %v3309 = vadd.f32 0.0, %v3308
      %v3310 = vpop.f32.mrb[0].mxu0
      %v3311 = vpop.f32.mrb[0].mxu0
      %v3312 = vadd.f32 0.0, %v3311
      %v3313 = vpop.f32.mrb[0].mxu0
      %3314 = vmatprep.mubr.bf16.mxu0 0
      %3315 = vmatmul.mubr.bf16.gmra.mrb[0].mxu0 %v1542
      %v3316 = vpop.f32.mrb[0].mxu0
      %v3317 = vadd.f32 0.0, %v3316
      %v3318 = vpop.f32.mrb[0].mxu0
      %v3319 = vpop.f32.mrb[0].mxu0
      %v3320 = vadd.f32 0.0, %v3319
      %v3321 = vpop.f32.mrb[0].mxu0
      %3322 = vmatprep.mubr.bf16.mxu0 0
      %3323 = vmatmul.mubr.bf16.gmra.mrb[0].mxu0 %v1545
      %v3324 = vpop.f32.mrb[0].mxu0
      %v3325 = vadd.f32 0.0, %v3324
      %v3326 = vpop.f32.mrb[0].mxu0
      %v3327 = vpop.f32.mrb[0].mxu0
      %v3328 = vadd.f32 0.0, %v3327
      %v3329 = vpop.f32.mrb[0].mxu0
      %3330 = vmatprep.mubr.bf16.mxu0 0
      %3331 = vmatmul.mubr.bf16.gmra.mrb[0].mxu0 %v1548
      %v3332 = vpop.f32.mrb[0].mxu0
      %v3333 = vadd.f32 0.0, %v3332
      %v3334 = vpop.f32.mrb[0].mxu0
      %v3335 = vpop.f32.mrb[0].mxu0
      %v3336 = vadd.f32 0.0, %v3335
      %v3337 = vpop.f32.mrb[0].mxu0
      %3338 = vmatprep.mubr.bf16.mxu0 0
      %3339 = vmatmul.mubr.bf16.gmra.mrb[0].mxu0 %v1551
      %v3340 = vpop.f32.mrb[0].mxu0
      %v3341 = vadd.f32 0.0, %v3340
      %v3342 = vpop.f32.mrb[0].mxu0
      %v3343 = vpop.f32.mrb[0].mxu0
      %v3344 = vadd.f32 0.0, %v3343
      %v3345 = vpop.f32.mrb[0].mxu0
      %3346 = vmatprep.mubr.bf16.mxu0 0
      %3347 = vmatmul.mubr.bf16.gmra.mrb[0].mxu0 %v1554
      %v3348 = vpop.f32.mrb[0].mxu0
      %v3349 = vadd.f32 0.0, %v3348
      %v3350 = vpop.f32.mrb[0].mxu0
      %v3351 = vpop.f32.mrb[0].mxu0
      %v3352 = vadd.f32 0.0, %v3351
      %v3353 = vpop.f32.mrb[0].mxu0
      %3354 = vmatprep.mubr.bf16.mxu0 0
      %3355 = vmatmul.mubr.bf16.gmra.mrb[0].mxu0 %v1557
      %v3356 = vpop.f32.mrb[0].mxu0
      %v3357 = vadd.f32 0.0, %v3356
      %v3358 = vpop.f32.mrb[0].mxu0
      %v3359 = vpop.f32.mrb[0].mxu0
      %v3360 = vadd.f32 0.0, %v3359
      %v3361 = vpop.f32.mrb[0].mxu0
      %3362 = vmatprep.mubr.bf16.mxu0 0
      %3363 = vmatmul.mubr.bf16.gmra.mrb[0].mxu0 %v1560
      %v3364 = vpop.f32.mrb[0].mxu0
      %v3365 = vadd.f32 0.0, %v3364
      %v3366 = vpop.f32.mrb[0].mxu0
      %v3367 = vpop.f32.mrb[0].mxu0
      %v3368 = vadd.f32 0.0, %v3367
      %v3369 = vpop.f32.mrb[0].mxu0
      %3370 = vmatprep.mubr.bf16.mxu0 0
      %3371 = vmatmul.mubr.bf16.gmra.mrb[0].mxu0 %v1563
      %v3372 = vpop.f32.mrb[0].mxu0
      %v3373 = vadd.f32 0.0, %v3372
      %v3374 = vpop.f32.mrb[0].mxu0
      %v3375 = vpop.f32.mrb[0].mxu0
      %v3376 = vadd.f32 0.0, %v3375
      %v3377 = vpop.f32.mrb[0].mxu0
      %3378 = vmatprep.mubr.bf16.mxu0 0
      %3379 = vmatmul.mubr.bf16.gmra.mrb[0].mxu0 %v1566
      %v3380 = vpop.f32.mrb[0].mxu0
      %v3381 = vadd.f32 0.0, %v3380
      %v3382 = vpop.f32.mrb[0].mxu0
      %v3383 = vpop.f32.mrb[0].mxu0
      %v3384 = vadd.f32 0.0, %v3383
      %v3385 = vpop.f32.mrb[0].mxu0
      %3386 = vmatprep.mubr.bf16.mxu0 0
      %3387 = vmatmul.mubr.bf16.gmra.mrb[0].mxu0 %v1569
      %v3388 = vpop.f32.mrb[0].mxu0
      %v3389 = vadd.f32 0.0, %v3388
      %v3390 = vpop.f32.mrb[0].mxu0
      %v3391 = vpop.f32.mrb[0].mxu0
      %v3392 = vadd.f32 0.0, %v3391
      %v3393 = vpop.f32.mrb[0].mxu0
      %3394 = vmatprep.mubr.bf16.mxu0 0
      %3395 = vmatmul.mubr.bf16.gmra.mrb[0].mxu0 %v2407
      %v3396 = vpop.f32.mrb[0].mxu0
      %v3397 = vadd.f32 0.0, %v3396
      %v3398 = vpop.f32.mrb[0].mxu0
      %v3399 = vpop.f32.mrb[0].mxu0
      %v3400 = vadd.f32 0.0, %v3399
      %v3401 = vpop.f32.mrb[0].mxu0
      %3402 = vmatprep.mubr.bf16.mxu0 0
      %3403 = vmatmul.mubr.bf16.gmra.mrb[0].mxu0 %v3245
      %v3404 = vpop.f32.mrb[0].mxu0
      %v3405 = vadd.f32 0.0, %v3404
      %v3406 = vpop.f32.mrb[0].mxu0
      %v3407 = vpop.f32.mrb[0].mxu0
      %v3408 = vadd.f32 0.0, %v3407
      %v3409 = vpop.f32.mrb[0].mxu0
      %3410 = vdwg.mxu0
      %v3411 = vld [vmem:[#allocation2] sm:$0xff]
      %v3412 = vld [vmem:[#allocation2 + $0x8] sm:$0xff]
      %v3413 = vld [vmem:[#allocation2 + $0x10] sm:$0xff]
      %v3414 = vld [vmem:[#allocation2 + $0x18] sm:$0xff]
      %v3415 = vld [vmem:[#allocation2 + $0x20] sm:$0xff]
      %v3416 = vld [vmem:[#allocation2 + $0x28] sm:$0xff]
      %v3417 = vld [vmem:[#allocation2 + $0x30] sm:$0xff]
      %v3418 = vld [vmem:[#allocation2 + $0x38] sm:$0xff]
      %v3419 = vld [vmem:[#allocation2 + $0x40] sm:$0xff]
      %v3420 = vld [vmem:[#allocation2 + $0x48] sm:$0xff]
      %v3421 = vld [vmem:[#allocation2 + $0x50] sm:$0xff]
      %v3422 = vld [vmem:[#allocation2 + $0x58] sm:$0xff]
      %v3423 = vld [vmem:[#allocation2 + $0x60] sm:$0xff]
      %v3424 = vld [vmem:[#allocation2 + $0x68] sm:$0xff]
      %v3425 = vld [vmem:[#allocation2 + $0x70] sm:$0xff]
      %v3426 = vld [vmem:[#allocation2 + $0x78] sm:$0xff]
      %v3427 = vld [vmem:[#allocation2 + $0x80] sm:$0xff]
      %v3428 = vld [vmem:[#allocation2 + $0x88] sm:$0xff]
      %v3429 = vld [vmem:[#allocation2 + $0x90] sm:$0xff]
      %v3430 = vld [vmem:[#allocation2 + $0x98] sm:$0xff]
      %v3431 = vld [vmem:[#allocation2 + $0xa0] sm:$0xff]
      %v3432 = vld [vmem:[#allocation2 + $0xa8] sm:$0xff]
      %v3433 = vld [vmem:[#allocation2 + $0xb0] sm:$0xff]
      %v3434 = vld [vmem:[#allocation2 + $0xb8] sm:$0xff]
      %v3435 = vld [vmem:[#allocation2 + $0xc0] sm:$0xff]
      %v3436 = vld [vmem:[#allocation2 + $0xc8] sm:$0xff]
      %v3437 = vld [vmem:[#allocation2 + $0xd0] sm:$0xff]
      %v3438 = vld [vmem:[#allocation2 + $0xd8] sm:$0xff]
      %v3439 = vld [vmem:[#allocation2 + $0xe0] sm:$0xff]
      %v3440 = vld [vmem:[#allocation2 + $0xe8] sm:$0xff]
      %v3441 = vld [vmem:[#allocation2 + $0xf0] sm:$0xff]
      %v3442 = vld [vmem:[#allocation2 + $0xf8] sm:$0xff]
      %v3443 = vadd.f32 %v3411, %v3285
      %v3444 = vadd.f32 %v3412, %v3288
      %v3445 = vadd.f32 %v3413, %v3293
      %v3446 = vadd.f32 %v3414, %v3296
      %v3447 = vadd.f32 %v3415, %v3301
      %v3448 = vadd.f32 %v3416, %v3304
      %v3449 = vadd.f32 %v3417, %v3309
      %v3450 = vadd.f32 %v3418, %v3312
      %v3451 = vadd.f32 %v3419, %v3317
      %v3452 = vadd.f32 %v3420, %v3320
      %v3453 = vadd.f32 %v3421, %v3325
      %v3454 = vadd.f32 %v3422, %v3328
      %v3455 = vadd.f32 %v3423, %v3333
      %v3456 = vadd.f32 %v3424, %v3336
      %v3457 = vadd.f32 %v3425, %v3341
      %v3458 = vadd.f32 %v3426, %v3344
      %v3459 = vadd.f32 %v3427, %v3349
      %v3460 = vadd.f32 %v3428, %v3352
      %v3461 = vadd.f32 %v3429, %v3357
      %v3462 = vadd.f32 %v3430, %v3360
      %v3463 = vadd.f32 %v3431, %v3365
      %v3464 = vadd.f32 %v3432, %v3368
      %v3465 = vadd.f32 %v3433, %v3373
      %v3466 = vadd.f32 %v3434, %v3376
      %v3467 = vadd.f32 %v3435, %v3381
      %v3468 = vadd.f32 %v3436, %v3384
      %v3469 = vadd.f32 %v3437, %v3389
      %v3470 = vadd.f32 %v3438, %v3392
      %v3471 = vadd.f32 %v3439, %v3397
      %v3472 = vadd.f32 %v3440, %v3400
      %v3473 = vadd.f32 %v3441, %v3405
      %v3474 = vadd.f32 %v3442, %v3408
      %3475 = vst [vmem:[#allocation2] sm:$0xff] %v3443
      %3476 = vst [vmem:[#allocation2 + $0x8] sm:$0xff] %v3444
      %3477 = vst [vmem:[#allocation2 + $0x10] sm:$0xff] %v3445
      %3478 = vst [vmem:[#allocation2 + $0x18] sm:$0xff] %v3446
      %3479 = vst [vmem:[#allocation2 + $0x20] sm:$0xff] %v3447
      %3480 = vst [vmem:[#allocation2 + $0x28] sm:$0xff] %v3448
      %3481 = vst [vmem:[#allocation2 + $0x30] sm:$0xff] %v3449
      %3482 = vst [vmem:[#allocation2 + $0x38] sm:$0xff] %v3450
      %3483 = vst [vmem:[#allocation2 + $0x40] sm:$0xff] %v3451
      %3484 = vst [vmem:[#allocation2 + $0x48] sm:$0xff] %v3452
      %3485 = vst [vmem:[#allocation2 + $0x50] sm:$0xff] %v3453
      %3486 = vst [vmem:[#allocation2 + $0x58] sm:$0xff] %v3454
      %3487 = vst [vmem:[#allocation2 + $0x60] sm:$0xff] %v3455
      %3488 = vst [vmem:[#allocation2 + $0x68] sm:$0xff] %v3456
      %3489 = vst [vmem:[#allocation2 + $0x70] sm:$0xff] %v3457
      %3490 = vst [vmem:[#allocation2 + $0x78] sm:$0xff] %v3458
      %3491 = vst [vmem:[#allocation2 + $0x80] sm:$0xff] %v3459
      %3492 = vst [vmem:[#allocation2 + $0x88] sm:$0xff] %v3460
      %3493 = vst [vmem:[#allocation2 + $0x90] sm:$0xff] %v3461
      %3494 = vst [vmem:[#allocation2 + $0x98] sm:$0xff] %v3462
      %3495 = vst [vmem:[#allocation2 + $0xa0] sm:$0xff] %v3463
      %3496 = vst [vmem:[#allocation2 + $0xa8] sm:$0xff] %v3464
      %3497 = vst [vmem:[#allocation2 + $0xb0] sm:$0xff] %v3465
      %3498 = vst [vmem:[#allocation2 + $0xb8] sm:$0xff] %v3466
      %3499 = vst [vmem:[#allocation2 + $0xc0] sm:$0xff] %v3467
      %3500 = vst [vmem:[#allocation2 + $0xc8] sm:$0xff] %v3468
      %3501 = vst [vmem:[#allocation2 + $0xd0] sm:$0xff] %v3469
      %3502 = vst [vmem:[#allocation2 + $0xd8] sm:$0xff] %v3470
      %3503 = vst [vmem:[#allocation2 + $0xe0] sm:$0xff] %v3471
      %3504 = vst [vmem:[#allocation2 + $0xe8] sm:$0xff] %v3472
      %3505 = vst [vmem:[#allocation2 + $0xf0] sm:$0xff] %v3473
      %3506 = vst [vmem:[#allocation2 + $0xf8] sm:$0xff] %v3474
      %v3507 = vld [vmem:[#allocation2] sm:$0xff]
      %v3508 = vld [vmem:[#allocation2 + $0x8] sm:$0xff]
      %v3509 = vld [vmem:[#allocation2 + $0x10] sm:$0xff]
      %v3510 = vld [vmem:[#allocation2 + $0x18] sm:$0xff]
      %v3511 = vld [vmem:[#allocation2 + $0x20] sm:$0xff]
      %v3512 = vld [vmem:[#allocation2 + $0x28] sm:$0xff]
      %v3513 = vld [vmem:[#allocation2 + $0x30] sm:$0xff]
      %v3514 = vld [vmem:[#allocation2 + $0x38] sm:$0xff]
      %v3515 = vld [vmem:[#allocation2 + $0x40] sm:$0xff]
      %v3516 = vld [vmem:[#allocation2 + $0x48] sm:$0xff]
      %v3517 = vld [vmem:[#allocation2 + $0x50] sm:$0xff]
      %v3518 = vld [vmem:[#allocation2 + $0x58] sm:$0xff]
      %v3519 = vld [vmem:[#allocation2 + $0x60] sm:$0xff]
      %v3520 = vld [vmem:[#allocation2 + $0x68] sm:$0xff]
      %v3521 = vld [vmem:[#allocation2 + $0x70] sm:$0xff]
      %v3522 = vld [vmem:[#allocation2 + $0x78] sm:$0xff]
      %v3523 = vld [vmem:[#allocation2 + $0x80] sm:$0xff]
      %v3524 = vld [vmem:[#allocation2 + $0x88] sm:$0xff]
      %v3525 = vld [vmem:[#allocation2 + $0x90] sm:$0xff]
      %v3526 = vld [vmem:[#allocation2 + $0x98] sm:$0xff]
      %v3527 = vld [vmem:[#allocation2 + $0xa0] sm:$0xff]
      %v3528 = vld [vmem:[#allocation2 + $0xa8] sm:$0xff]
      %v3529 = vld [vmem:[#allocation2 + $0xb0] sm:$0xff]
      %v3530 = vld [vmem:[#allocation2 + $0xb8] sm:$0xff]
      %v3531 = vld [vmem:[#allocation2 + $0xc0] sm:$0xff]
      %v3532 = vld [vmem:[#allocation2 + $0xc8] sm:$0xff]
      %v3533 = vld [vmem:[#allocation2 + $0xd0] sm:$0xff]
      %v3534 = vld [vmem:[#allocation2 + $0xd8] sm:$0xff]
      %v3535 = vld [vmem:[#allocation2 + $0xe0] sm:$0xff]
      %v3536 = vld [vmem:[#allocation2 + $0xe8] sm:$0xff]
      %v3537 = vld [vmem:[#allocation2 + $0xf0] sm:$0xff]
      %v3538 = vld [vmem:[#allocation2 + $0xf8] sm:$0xff]
      %v3539 = vpack.c.bf16 %v3508, %v3507
      %v3540 = vpack.c.bf16 %v3510, %v3509
      %v3541 = vpack.c.bf16 %v3512, %v3511
      %v3542 = vpack.c.bf16 %v3514, %v3513
      %v3543 = vpack.c.bf16 %v3516, %v3515
      %v3544 = vpack.c.bf16 %v3518, %v3517
      %v3545 = vpack.c.bf16 %v3520, %v3519
      %v3546 = vpack.c.bf16 %v3522, %v3521
      %v3547 = vpack.c.bf16 %v3524, %v3523
      %v3548 = vpack.c.bf16 %v3526, %v3525
      %v3549 = vpack.c.bf16 %v3528, %v3527
      %v3550 = vpack.c.bf16 %v3530, %v3529
      %v3551 = vpack.c.bf16 %v3532, %v3531
      %v3552 = vpack.c.bf16 %v3534, %v3533
      %v3553 = vpack.c.bf16 %v3536, %v3535
      %v3554 = vpack.c.bf16 %v3538, %v3537
      %v3571 = vunpack.c.l.b16 %v3539
      %v3572 = vunpack.c.h.b16 %v3539
      %v3573 = vunpack.c.l.b16 %v3540
      %v3574 = vunpack.c.h.b16 %v3540
      %v3575 = vunpack.c.l.b16 %v3541
      %v3576 = vunpack.c.h.b16 %v3541
      %v3577 = vunpack.c.l.b16 %v3542
      %v3578 = vunpack.c.h.b16 %v3542
      %v3579 = vunpack.c.l.b16 %v3543
      %v3580 = vunpack.c.h.b16 %v3543
      %v3581 = vunpack.c.l.b16 %v3544
      %v3582 = vunpack.c.h.b16 %v3544
      %v3583 = vunpack.c.l.b16 %v3545
      %v3584 = vunpack.c.h.b16 %v3545
      %v3585 = vunpack.c.l.b16 %v3546
      %v3586 = vunpack.c.h.b16 %v3546
      %v3587 = vunpack.c.l.b16 %v3547
      %v3588 = vunpack.c.h.b16 %v3547
      %v3589 = vunpack.c.l.b16 %v3548
      %v3590 = vunpack.c.h.b16 %v3548
      %v3591 = vunpack.c.l.b16 %v3549
      %v3592 = vunpack.c.h.b16 %v3549
      %v3593 = vunpack.c.l.b16 %v3550
      %v3594 = vunpack.c.h.b16 %v3550
      %v3595 = vunpack.c.l.b16 %v3551
      %v3596 = vunpack.c.h.b16 %v3551
      %v3597 = vunpack.c.l.b16 %v3552
      %v3598 = vunpack.c.h.b16 %v3552
      %v3599 = vunpack.c.l.b16 %v3553
      %v3600 = vunpack.c.h.b16 %v3553
      %v3601 = vunpack.c.l.b16 %v3554
      %v3602 = vunpack.c.h.b16 %v3554
      %v3603 = vpack.c.b16 %v3571, %v3571
      %v3604 = vpack.c.b16 %v3572, %v3572
      %v3605 = vpack.c.b16 %v3573, %v3573
      %v3606 = vpack.c.b16 %v3574, %v3574
      %v3607 = vpack.c.b16 %v3575, %v3575
      %v3608 = vpack.c.b16 %v3576, %v3576
      %v3609 = vpack.c.b16 %v3577, %v3577
      %v3610 = vpack.c.b16 %v3578, %v3578
      %v3611 = vpack.c.b16 %v3579, %v3579
      %v3612 = vpack.c.b16 %v3580, %v3580
      %v3613 = vpack.c.b16 %v3581, %v3581
      %v3614 = vpack.c.b16 %v3582, %v3582
      %v3615 = vpack.c.b16 %v3583, %v3583
      %v3616 = vpack.c.b16 %v3584, %v3584
      %v3617 = vpack.c.b16 %v3585, %v3585
      %v3618 = vpack.c.b16 %v3586, %v3586
      %v3619 = vpack.c.b16 %v3587, %v3587
      %v3620 = vpack.c.b16 %v3588, %v3588
      %v3621 = vpack.c.b16 %v3589, %v3589
      %v3622 = vpack.c.b16 %v3590, %v3590
      %v3623 = vpack.c.b16 %v3591, %v3591
      %v3624 = vpack.c.b16 %v3592, %v3592
      %v3625 = vpack.c.b16 %v3593, %v3593
      %v3626 = vpack.c.b16 %v3594, %v3594
      %v3627 = vpack.c.b16 %v3595, %v3595
      %v3628 = vpack.c.b16 %v3596, %v3596
      %v3629 = vpack.c.b16 %v3597, %v3597
      %v3630 = vpack.c.b16 %v3598, %v3598
      %v3631 = vpack.c.b16 %v3599, %v3599
      %v3632 = vpack.c.b16 %v3600, %v3600
      %v3633 = vpack.c.b16 %v3601, %v3601
      %v3634 = vpack.c.b16 %v3602, %v3602
      %3667 = vst [vmem:[%s208] sm:$0xf] %v3603
      %3668 = vst [vmem:[%s208 + $0x4] sm:$0xf] %v3604
      %3669 = vst [vmem:[%s208 + $0x8] sm:$0xf] %v3605
      %3670 = vst [vmem:[%s208 + $0xc] sm:$0xf] %v3606
      %3671 = vst [vmem:[%s208 + $0x10] sm:$0xf] %v3607
      %3672 = vst [vmem:[%s208 + $0x14] sm:$0xf] %v3608
      %3673 = vst [vmem:[%s208 + $0x18] sm:$0xf] %v3609
      %3674 = vst [vmem:[%s208 + $0x1c] sm:$0xf] %v3610
      %3675 = vst [vmem:[%s208 + $0x20] sm:$0xf] %v3611
      %3676 = vst [vmem:[%s208 + $0x24] sm:$0xf] %v3612
      %3677 = vst [vmem:[%s208 + $0x28] sm:$0xf] %v3613
      %3678 = vst [vmem:[%s208 + $0x2c] sm:$0xf] %v3614
      %3679 = vst [vmem:[%s208 + $0x30] sm:$0xf] %v3615
      %3680 = vst [vmem:[%s208 + $0x34] sm:$0xf] %v3616
      %3681 = vst [vmem:[%s208 + $0x38] sm:$0xf] %v3617
      %3682 = vst [vmem:[%s208 + $0x3c] sm:$0xf] %v3618
      %3683 = vst [vmem:[%s208 + $0x40] sm:$0xf] %v3619
      %3684 = vst [vmem:[%s208 + $0x44] sm:$0xf] %v3620
      %3685 = vst [vmem:[%s208 + $0x48] sm:$0xf] %v3621
      %3686 = vst [vmem:[%s208 + $0x4c] sm:$0xf] %v3622
      %3687 = vst [vmem:[%s208 + $0x50] sm:$0xf] %v3623
      %3688 = vst [vmem:[%s208 + $0x54] sm:$0xf] %v3624
      %3689 = vst [vmem:[%s208 + $0x58] sm:$0xf] %v3625
      %3690 = vst [vmem:[%s208 + $0x5c] sm:$0xf] %v3626
      %3691 = vst [vmem:[%s208 + $0x60] sm:$0xf] %v3627
      %3692 = vst [vmem:[%s208 + $0x64] sm:$0xf] %v3628
      %3693 = vst [vmem:[%s208 + $0x68] sm:$0xf] %v3629
      %3694 = vst [vmem:[%s208 + $0x6c] sm:$0xf] %v3630
      %3695 = vst [vmem:[%s208 + $0x70] sm:$0xf] %v3631
      %3696 = vst [vmem:[%s208 + $0x74] sm:$0xf] %v3632
      %3697 = vst [vmem:[%s208 + $0x78] sm:$0xf] %v3633
      %3698 = vst [vmem:[%s208 + $0x7c] sm:$0xf] %v3634
      %v3699 = vadd.f32 %v3507, %v3508
      %v3700 = vadd.f32 %v3699, %v3509
      %v3701 = vadd.f32 %v3700, %v3510
      %v3702 = vadd.f32 %v3701, %v3511
      %v3703 = vadd.f32 %v3702, %v3512
      %v3704 = vadd.f32 %v3703, %v3513
      %v3705 = vadd.f32 %v3704, %v3514
      %v3706 = vadd.f32 %v3705, %v3515
      %v3707 = vadd.f32 %v3706, %v3516
      %v3708 = vadd.f32 %v3707, %v3517
      %v3709 = vadd.f32 %v3708, %v3518
      %v3710 = vadd.f32 %v3709, %v3519
      %v3711 = vadd.f32 %v3710, %v3520
      %v3712 = vadd.f32 %v3711, %v3521
      %v3713 = vadd.f32 %v3712, %v3522
      %v3714 = vadd.f32 %v3713, %v3523
      %v3715 = vadd.f32 %v3714, %v3524
      %v3716 = vadd.f32 %v3715, %v3525
      %v3717 = vadd.f32 %v3716, %v3526
      %v3718 = vadd.f32 %v3717, %v3527
      %v3719 = vadd.f32 %v3718, %v3528
      %v3720 = vadd.f32 %v3719, %v3529
      %v3721 = vadd.f32 %v3720, %v3530
      %v3722 = vadd.f32 %v3721, %v3531
      %v3723 = vadd.f32 %v3722, %v3532
      %v3724 = vadd.f32 %v3723, %v3533
      %v3725 = vadd.f32 %v3724, %v3534
      %v3726 = vadd.f32 %v3725, %v3535
      %v3727 = vadd.f32 %v3726, %v3536
      %v3728 = vadd.f32 %v3727, %v3537
      %v3729 = vadd.f32 %v3728, %v3538
      %v3730 = vrot.slane %v3729, 4
      %v3731 = vadd.f32 %v3729, %v3730
      %v3732 = vrot.slane %v3731, 2
      %v3733 = vadd.f32 %v3731, %v3732
      %v3734 = vrot.slane %v3733, 1
      %v3735 = vadd.f32 %v3733, %v3734
      %3736 = vst [vmem:[%s211] sm:$0x1] %v3735
      %v3737 = vmul.f32 %v3507, %v3507
      %v3738 = vmul.f32 %v3508, %v3508
      %v3739 = vmul.f32 %v3509, %v3509
      %v3740 = vmul.f32 %v3510, %v3510
      %v3741 = vmul.f32 %v3511, %v3511
      %v3742 = vmul.f32 %v3512, %v3512
      %v3743 = vmul.f32 %v3513, %v3513
      %v3744 = vmul.f32 %v3514, %v3514
      %v3745 = vmul.f32 %v3515, %v3515
      %v3746 = vmul.f32 %v3516, %v3516
      %v3747 = vmul.f32 %v3517, %v3517
      %v3748 = vmul.f32 %v3518, %v3518
      %v3749 = vmul.f32 %v3519, %v3519
      %v3750 = vmul.f32 %v3520, %v3520
      %v3751 = vmul.f32 %v3521, %v3521
      %v3752 = vmul.f32 %v3522, %v3522
      %v3753 = vmul.f32 %v3523, %v3523
      %v3754 = vmul.f32 %v3524, %v3524
      %v3755 = vmul.f32 %v3525, %v3525
      %v3756 = vmul.f32 %v3526, %v3526
      %v3757 = vmul.f32 %v3527, %v3527
      %v3758 = vmul.f32 %v3528, %v3528
      %v3759 = vmul.f32 %v3529, %v3529
      %v3760 = vmul.f32 %v3530, %v3530
      %v3761 = vmul.f32 %v3531, %v3531
      %v3762 = vmul.f32 %v3532, %v3532
      %v3763 = vmul.f32 %v3533, %v3533
      %v3764 = vmul.f32 %v3534, %v3534
      %v3765 = vmul.f32 %v3535, %v3535
      %v3766 = vmul.f32 %v3536, %v3536
      %v3767 = vmul.f32 %v3537, %v3537
      %v3768 = vmul.f32 %v3538, %v3538
      %v3769 = vadd.f32 %v3737, %v3738
      %v3770 = vadd.f32 %v3769, %v3739
      %v3771 = vadd.f32 %v3770, %v3740
      %v3772 = vadd.f32 %v3771, %v3741
      %v3773 = vadd.f32 %v3772, %v3742
      %v3774 = vadd.f32 %v3773, %v3743
      %v3775 = vadd.f32 %v3774, %v3744
      %v3776 = vadd.f32 %v3775, %v3745
      %v3777 = vadd.f32 %v3776, %v3746
      %v3778 = vadd.f32 %v3777, %v3747
      %v3779 = vadd.f32 %v3778, %v3748
      %v3780 = vadd.f32 %v3779, %v3749
      %v3781 = vadd.f32 %v3780, %v3750
      %v3782 = vadd.f32 %v3781, %v3751
      %v3783 = vadd.f32 %v3782, %v3752
      %v3784 = vadd.f32 %v3783, %v3753
      %v3785 = vadd.f32 %v3784, %v3754
      %v3786 = vadd.f32 %v3785, %v3755
      %v3787 = vadd.f32 %v3786, %v3756
      %v3788 = vadd.f32 %v3787, %v3757
      %v3789 = vadd.f32 %v3788, %v3758
      %v3790 = vadd.f32 %v3789, %v3759
      %v3791 = vadd.f32 %v3790, %v3760
      %v3792 = vadd.f32 %v3791, %v3761
      %v3793 = vadd.f32 %v3792, %v3762
      %v3794 = vadd.f32 %v3793, %v3763
      %v3795 = vadd.f32 %v3794, %v3764
      %v3796 = vadd.f32 %v3795, %v3765
      %v3797 = vadd.f32 %v3796, %v3766
      %v3798 = vadd.f32 %v3797, %v3767
      %v3799 = vadd.f32 %v3798, %v3768
      %v3800 = vrot.slane %v3799, 4
      %v3801 = vadd.f32 %v3799, %v3800
      %v3802 = vrot.slane %v3801, 2
      %v3803 = vadd.f32 %v3801, %v3802
      %v3804 = vrot.slane %v3803, 1
      %v3805 = vadd.f32 %v3803, %v3804
      %3806 = vst [vmem:[%s214] sm:$0x1] %v3805
      %p3807 = scmp.lt.s32.totalorder %s16, 1
      %s3808 = scalar_select %p3807, %s16, 1
      %s3809 = smul.addr %s3808, 32
      %s3810 = smul.addr %s3809, 4
      %s3811 = scalar_lea.vmem %s2, %s3810
      %p3812 = scmp.lt.s32.totalorder %s16, 1
      %s3813 = scalar_select %p3812, %s16, 1
      %s3814 = scalar_lea.vmem %s3, %s3813
      %p3815 = scmp.lt.s32.totalorder %s16, 1
      %s3816 = scalar_select %p3815, %s16, 1
      %s3817 = scalar_lea.vmem %s4, %s3816
      // Predicated region
      $region29: #{conv_leaky_block.2} parent=27 // pred_check
        %p3818 = pneg %p81
      $region30: #{conv_leaky_block.2} parent=27 // pred_check_branch
        %3820 = sbr.rel (%p3818) target = $region32
      $region31: #{conv_leaky_block.2} parent=27 // pred_region
        _
      $region32: #{conv_leaky_block.2} parent=27 // pred_fallthru
        _
      // Predicated region
      $region33: #{conv_leaky_block.2} parent=27 // pred_check
        %p3821 = pneg %p107
      $region34: #{conv_leaky_block.2} parent=27 // pred_check_branch
        %3823 = sbr.rel (%p3821) target = $region36
      $region35: #{conv_leaky_block.2} parent=27 // pred_region
        _
      $region36: #{conv_leaky_block.2} parent=27 // pred_fallthru
        _
      // Predicated region
      $region37: #{conv_leaky_block.2} parent=27 // pred_check
        %p3824 = pneg %p133
      $region38: #{conv_leaky_block.2} parent=27 // pred_check_branch
        %3826 = sbr.rel (%p3824) target = $region40
      $region39: #{conv_leaky_block.2} parent=27 // pred_region
        _
      $region40: #{conv_leaky_block.2} parent=27 // pred_fallthru
        _
    $region28: #{conv_leaky_block.2} parent=5 // pred_fallthru
      _
    %p3827 = scmp.le.s32.totalorder 2, %s11
    // Predicated region
    $region41: #{conv_leaky_block.2} parent=5 // pred_check
      %p3828 = pneg %p3827
    $region42: #{conv_leaky_block.2} parent=5 // pred_check_branch
      %3830 = sbr.rel (%p3828) target = $region44
    $region43: #{conv_leaky_block.2} parent=5 // pred_region
      %s3831 = ssub.s32 %s11, 2
      // Predicated region
      $region45: #{conv_leaky_block.2} parent=43 // pred_check
        %p3832 = pneg %p87
      $region46: #{conv_leaky_block.2} parent=43 // pred_check_branch
        %3834 = sbr.rel (%p3832) target = $region48
      $region47: #{conv_leaky_block.2} parent=43 // pred_region
        %p3835 = scmp.lt.s32.totalorder %s17, 1
        %s3836 = scalar_select %p3835, %s17, 1
        %s3837 = smul.addr %s3836, 32
        %s3838 = smul.addr %s3837, 4
        %s3839 = scalar_lea.vmem %s2, %s3838
      $region48: #{conv_leaky_block.2} parent=43 // pred_fallthru
        _
      // Predicated region
      $region49: #{conv_leaky_block.2} parent=43 // pred_check
        %p3840 = pneg %p113
      $region50: #{conv_leaky_block.2} parent=43 // pred_check_branch
        %3842 = sbr.rel (%p3840) target = $region52
      $region51: #{conv_leaky_block.2} parent=43 // pred_region
        %p3843 = scmp.lt.s32.totalorder %s17, 1
        %s3844 = scalar_select %p3843, %s17, 1
        %s3845 = scalar_lea.vmem %s3, %s3844
      $region52: #{conv_leaky_block.2} parent=43 // pred_fallthru
        _
      // Predicated region
      $region53: #{conv_leaky_block.2} parent=43 // pred_check
        %p3846 = pneg %p139
      $region54: #{conv_leaky_block.2} parent=43 // pred_check_branch
        %3848 = sbr.rel (%p3846) target = $region56
      $region55: #{conv_leaky_block.2} parent=43 // pred_region
        %p3849 = scmp.lt.s32.totalorder %s17, 1
        %s3850 = scalar_select %p3849, %s17, 1
        %s3851 = scalar_lea.vmem %s4, %s3850
      $region56: #{conv_leaky_block.2} parent=43 // pred_fallthru
        _
    $region44: #{conv_leaky_block.2} parent=5 // pred_fallthru
      _
  $region6: #{conv_leaky_block.2} parent=0 // loop_footer
    %s15 = sadd.s32 1, %s11
  $region7: #{conv_leaky_block.2} parent=0 // loop_footer_branch
    %10 = sbr.rel target = $region3
  $region8: #{conv_leaky_block.2} parent=0 // loop_exit
    _

</llo_original>
